<compile_context>
chip_gen: v5e
topology: v5e:2x2
jax: 0.10.0
libtpu: 0.0.40
codegen_flags: <defaults>
</compile_context>

<pallas_src>
import numpy as np
import jax
import jax.numpy as jnp
from jax.experimental import pallas as pl
from jax.experimental.pallas import tpu as pltpu


# ----------------------------------------------------------------------------
# Head-weight row permutation.
# In-kernel the Net2/Net3 segments of the 576-wide concat are laid out
# "j-major" (output-index major, channel minor: idx = j*64 + c), while PyTorch's
# flatten of (B, 64, 3) is "c-major" (idx = c*3 + j).  cat_kernel[i] ==
# cat_pytorch[_HEAD_PERM[i]], so permuting the rows of the (576,128) head
# weight makes the in-kernel head mathematically identical to the PyTorch one.
# ----------------------------------------------------------------------------
_seg = np.arange(192)
_jmaj_to_cmaj = (_seg % 64) * 3 + (_seg // 64)       # j*64+c  ->  c*3+j
_HEAD_PERM = np.concatenate(
    [np.arange(192), 192 + _jmaj_to_cmaj, 384 + _jmaj_to_cmaj]).astype(np.int32)


# ----------------------------------------------------------------------------
# Fused kernel: one grid step == one batch sample.
# ----------------------------------------------------------------------------
def all_net_kernel(x1_ref, x2_ref, x3_ref,
                   n1_cw_ref, n1_cb_ref, n1_wih_ref, n1_whh_ref, n1_bl_ref,
                   n1_fcw_ref, n1_fcb_ref,
                   n2_cw_ref, n2_cb_ref, n2_fw_ref, n2_fb_ref,
                   n3_cw_ref, n3_cb_ref, n3_w1_ref, n3_b1_ref, n3_w2_ref,
                   n3_b2_ref,
                   hw1_ref, hb1_ref, hw2_ref, hb2_ref,
                   o_ref, cat_ref, hbuf_ref):
    f32 = jnp.float32
    H = 128

    # ----------------------------- Net1 ------------------------------------
    x1 = x1_ref[...]                                          # (7, 320)
    acc1 = jnp.zeros((5, 128), f32)
    for k in range(3):                                        # K=320 MXU matmuls
        acc1 = acc1 + jnp.dot(x1[k:k + 5, :], n1_cw_ref[k],
                              preferred_element_type=f32)
    conv1 = jnp.maximum(acc1 + n1_cb_ref[...], 0.0)           # (5, 128)
    pooled1 = jnp.maximum(jnp.maximum(conv1[0:3, :], conv1[1:4, :]),
                          conv1[2:5, :])                      # (3, 128)

    # LSTM: input projection for all timesteps hoisted out of the recurrence.
    xproj = (jnp.dot(pooled1, n1_wih_ref[...], preferred_element_type=f32)
             + n1_bl_ref[...])                                # (3, 512)
    whh = n1_whh_ref[...]
    h = jnp.zeros((1, H), f32)
    c = jnp.zeros((1, H), f32)
    for t in range(3):
        g = xproj[t:t + 1, :] + jnp.dot(h, whh, preferred_element_type=f32)
        i_g = jax.nn.sigmoid(g[:, 0:H])
        f_g = jax.nn.sigmoid(g[:, H:2 * H])
        g_g = jnp.tanh(g[:, 2 * H:3 * H])
        o_g = jax.nn.sigmoid(g[:, 3 * H:4 * H])
        c = f_g * c + i_g * g_g
        h = o_g * jnp.tanh(c)
        hbuf_ref[t:t + 1, :] = h
    hcat = hbuf_ref[...]                                      # (3, 128)
    y1 = (jnp.dot(hcat, n1_fcw_ref[...], preferred_element_type=f32)
          + n1_fcb_ref[...])                                  # (3, 64)
    for t in range(3):                                        # PyTorch t-major order
        cat_ref[:, t * 64:(t + 1) * 64] = y1[t:t + 1, :]

    # ----------------------------- Net2 ------------------------------------
    # NLC orientation: rows = sequence, lanes = conv output channels.
    x2 = x2_ref[...]                                          # (72, 5)
    w2 = n2_cw_ref[...]                                       # (15, 64)
    acc2 = jnp.zeros((70, 64), f32)
    for k in range(3):                                        # K=5 conv as VPU FMAs
        for ci in range(5):
            acc2 = acc2 + x2[k:k + 70, ci:ci + 1] * w2[k * 5 + ci:k * 5 + ci + 1, :]
    conv2 = jnp.maximum(acc2 + n2_cb_ref[...], 0.0)           # (70, 64)
    pooled2 = jnp.maximum(jnp.maximum(conv2[0:68, :], conv2[1:69, :]),
                          conv2[2:70, :])                     # (68, 64)
    # Linear(68,3) over the sequence dim:  o2t[j, c] = sum_l Wfc[j,l]*pooled2[l,c]
    o2t = (jnp.dot(n2_fw_ref[...], pooled2, preferred_element_type=f32)
           + n2_fb_ref[...])                                  # (3, 64)  (j-major)
    for j in range(3):
        cat_ref[:, 192 + j * 64:192 + (j + 1) * 64] = o2t[j:j + 1, :]

    # ----------------------------- Net3 ------------------------------------
    x3 = x3_ref[...]                                          # (328, 2)
    w3 = n3_cw_ref[...]                                       # (6, 64)
    acc3 = jnp.zeros((326, 64), f32)
    for k in range(3):                                        # K=2 conv as VPU FMAs
        for ci in range(2):
            acc3 = acc3 + x3[k:k + 326, ci:ci + 1] * w3[k * 2 + ci:k * 2 + ci + 1, :]
    conv3 = jnp.maximum(acc3 + n3_cb_ref[...], 0.0)           # (326, 64)
    pooled3 = jnp.maximum(jnp.maximum(conv3[0:324, :], conv3[1:325, :]),
                          conv3[2:326, :])                    # (324, 64)
    # Linear(324,64):  h1t[m, c] = relu(sum_l W1[m,l]*pooled3[l,c] + b1[m])
    h1t = jnp.maximum(jnp.dot(n3_w1_ref[...], pooled3,
                              preferred_element_type=f32) + n3_b1_ref[...], 0.0)
    # Linear(64,3) + ReLU (per spec): h2t[j, c]
    h2t = jnp.maximum(jnp.dot(n3_w2_ref[...], h1t,
                              preferred_element_type=f32) + n3_b2_ref[...], 0.0)
    for j in range(3):
        cat_ref[:, 384 + j * 64:384 + (j + 1) * 64] = h2t[j:j + 1, :]

    # ----------------------------- head ------------------------------------
    cat = cat_ref[...]                                        # (1, 576) in VMEM
    hh = jnp.dot(cat, hw1_ref[...], preferred_element_type=f32) + hb1_ref[...]
    o_ref[...] = (jnp.dot(hh, hw2_ref[...], preferred_element_type=f32)
                  + hb2_ref[...])                             # (1, 10)


# ----------------------------------------------------------------------------
# Wrapper: single fused pallas_call, batch on a parallel grid axis.
# ----------------------------------------------------------------------------
@jax.jit
def all_net_forward(x1, x2, x3, p):
    B = x1.shape[0]
    # One-time, weight-side fixup of the Net2/Net3 flatten ordering (see above).
    h_w1p = p['h_w1'][_HEAD_PERM, :]

    weights = (
        p['n1_cw'], p['n1_cb'], p['n1_wih'], p['n1_whh'], p['n1_bl'],
        p['n1_fcw'], p['n1_fcb'],
        p['n2_cw'], p['n2_cb'], p['n2_fw'], p['n2_fb'],
        p['n3_cw'], p['n3_cb'], p['n3_w1'], p['n3_b1'], p['n3_w2'], p['n3_b2'],
        h_w1p, p['h_b1'], p['h_w2'], p['h_b2'],
    )

    def sample_spec(shape):
        # One batch sample per grid step; batch dim squeezed out of the ref.
        return pl.BlockSpec((None,) + shape,
                            lambda i, _nd=len(shape): (i,) + (0,) * _nd)

    def resident_spec(arr):
        # Full-array block with a constant index_map: DMA'd once, stays in VMEM.
        return pl.BlockSpec(arr.shape, lambda i, _nd=arr.ndim: (0,) * _nd)

    out = pl.pallas_call(
        all_net_kernel,
        out_shape=jax.ShapeDtypeStruct((B, 1, 10), jnp.float32),
        grid=(B,),
        in_specs=[sample_spec((7, 320)), sample_spec((72, 5)),
                  sample_spec((328, 2))] + [resident_spec(w) for w in weights],
        out_specs=pl.BlockSpec((None, 1, 10), lambda i: (i, 0, 0)),
        scratch_shapes=[pltpu.VMEM((1, 576), jnp.float32),   # lane-dense concat
                        pltpu.VMEM((3, 128), jnp.float32)],  # LSTM hidden states
        compiler_params=pltpu.CompilerParams(
            dimension_semantics=("parallel",)),
    )(x1, x2, x3, *weights)
    return out.reshape(B, 10)


# ----------------------------------------------------------------------------
# Pure-JAX reference (PyTorch layout/ordering) for the correctness check.
# ----------------------------------------------------------------------------
def reference_forward(x1, x2, x3, p):
    B = x1.shape[0]
    relu = jax.nn.relu
    # --- Net1 ---
    acc = jnp.zeros((B, 5, 128), jnp.float32)
    for k in range(3):
        acc = acc + jnp.einsum('bld,dc->blc', x1[:, k:k + 5, :], p['n1_cw'][k])
    conv = relu(acc + p['n1_cb'])
    pooled = jnp.maximum(jnp.maximum(conv[:, 0:3], conv[:, 1:4]), conv[:, 2:5])
    h = jnp.zeros((B, 128), jnp.float32)
    c = jnp.zeros((B, 128), jnp.float32)
    ys = []
    for t in range(3):
        g = pooled[:, t] @ p['n1_wih'] + h @ p['n1_whh'] + p['n1_bl']
        i_g = jax.nn.sigmoid(g[:, 0:128])
        f_g = jax.nn.sigmoid(g[:, 128:256])
        g_g = jnp.tanh(g[:, 256:384])
        o_g = jax.nn.sigmoid(g[:, 384:512])
        c = f_g * c + i_g * g_g
        h = o_g * jnp.tanh(c)
        ys.append(h @ p['n1_fcw'] + p['n1_fcb'])
    out1 = jnp.stack(ys, axis=1).reshape(B, 192)
    # --- Net2 ---
    cw2 = p['n2_cw'].reshape(3, 5, 64)
    acc2 = jnp.zeros((B, 70, 64), jnp.float32)
    for k in range(3):
        acc2 = acc2 + jnp.einsum('bld,dc->blc', x2[:, k:k + 70, :], cw2[k])
    conv2 = relu(acc2 + p['n2_cb'])
    pool2 = jnp.maximum(jnp.maximum(conv2[:, 0:68], conv2[:, 1:69]),
                        conv2[:, 2:70])                         # (B,68,64) NLC
    out2 = (jnp.einsum('blc,jl->bcj', pool2, p['n2_fw'])
            + p['n2_fb'].reshape(1, 1, 3)).reshape(B, 192)       # PyTorch c-major
    # --- Net3 ---
    cw3 = p['n3_cw'].reshape(3, 2, 64)
    acc3 = jnp.zeros((B, 326, 64), jnp.float32)
    for k in range(3):
        acc3 = acc3 + jnp.einsum('bld,dc->blc', x3[:, k:k + 326, :], cw3[k])
    conv3 = relu(acc3 + p['n3_cb'])
    pool3 = jnp.maximum(jnp.maximum(conv3[:, 0:324], conv3[:, 1:325]),
                        conv3[:, 2:326])                        # (B,324,64) NLC
    h1 = relu(jnp.einsum('blc,ml->bcm', pool3, p['n3_w1'])
              + p['n3_b1'].reshape(1, 1, 64))
    h2 = relu(jnp.einsum('bcm,jm->bcj', h1, p['n3_w2'])
              + p['n3_b2'].reshape(1, 1, 3))
    out3 = h2.reshape(B, 192)
    # --- head ---
    cat = jnp.concatenate([out1, out2, out3], axis=1)
    return (cat @ p['h_w1'] + p['h_b1']) @ p['h_w2'] + p['h_b2']


# ----------------------------------------------------------------------------
# Deterministic synthetic parameters (PyTorch-equivalent layouts, see comments)
# ----------------------------------------------------------------------------
def make_params(key):
    ks = iter(jax.random.split(key, 32))

    def w(shape, fan_in):
        return jax.random.normal(next(ks), shape, dtype=jnp.float32) / float(np.sqrt(fan_in))

    def b(shape):
        return jax.random.normal(next(ks), shape, dtype=jnp.float32) * 0.01

    p = {}
    # Net1: conv weight stored as (k, Cin, Cout); LSTM/FC weights pre-transposed (x @ W).
    p['n1_cw'] = w((3, 320, 128), 960)
    p['n1_cb'] = b((1, 128))
    p['n1_wih'] = w((128, 512), 128)      # W_ih.T  (gate order i,f,g,o)
    p['n1_whh'] = w((128, 512), 128)      # W_hh.T
    p['n1_bl'] = b((1, 512))              # b_ih + b_hh
    p['n1_fcw'] = w((128, 64), 128)
    p['n1_fcb'] = b((1, 64))
    # Net2: conv weight flattened to (k*Cin, Cout) = (15, 64); fc stored as PyTorch (3, 68).
    p['n2_cw'] = w((15, 64), 15)
    p['n2_cb'] = b((1, 64))
    p['n2_fw'] = w((3, 68), 68)
    p['n2_fb'] = b((3, 1))
    # Net3: conv weight (k*Cin, Cout) = (6, 64); linears stored in PyTorch (out, in) layout.
    p['n3_cw'] = w((6, 64), 6)
    p['n3_cb'] = b((1, 64))
    p['n3_w1'] = w((64, 324), 324)
    p['n3_b1'] = b((64, 1))
    p['n3_w2'] = w((3, 64), 64)
    p['n3_b2'] = b((3, 1))
    # Head: pre-transposed (x @ W).
    p['h_w1'] = w((576, 128), 576)
    p['h_b1'] = b((1, 128))
    p['h_w2'] = w((128, 10), 128)
    p['h_b2'] = b((1, 10))
    return p


if __name__ == "__main__":
    key = jax.random.PRNGKey(0)
    kp, k1, k2, k3 = jax.random.split(key, 4)
    params = make_params(kp)

    B = 2
    x1 = jax.random.normal(k1, (B, 7, 320), dtype=jnp.float32)    # Net1 input
    x2 = jax.random.normal(k2, (B, 72, 5), dtype=jnp.float32)     # Net2 input
    x3 = jax.random.normal(k3, (B, 328, 2), dtype=jnp.float32)    # Net3 input

    out = jax.block_until_ready(all_net_forward(x1, x2, x3, params))
    ref = jax.block_until_ready(reference_forward(x1, x2, x3, params))

    assert out.shape == (B, 10), out.shape
    np.testing.assert_allclose(np.asarray(out), np.asarray(ref),
                               rtol=1e-3, atol=1e-3)
    print("KERNEL_OK")
</pallas_src>

<mosaic_0001>
module attributes {stable_mosaic.version = 11 : i64} {
  func.func @all_net_kernel(%arg0: i32, %arg1: memref<1x7x320xf32, #tpu.memory_space<vmem>>, %arg2: memref<1x72x5xf32, #tpu.memory_space<vmem>>, %arg3: memref<1x328x2xf32, #tpu.memory_space<vmem>>, %arg4: memref<3x320x128xf32, #tpu.memory_space<vmem>>, %arg5: memref<1x128xf32, #tpu.memory_space<vmem>>, %arg6: memref<128x512xf32, #tpu.memory_space<vmem>>, %arg7: memref<128x512xf32, #tpu.memory_space<vmem>>, %arg8: memref<1x512xf32, #tpu.memory_space<vmem>>, %arg9: memref<128x64xf32, #tpu.memory_space<vmem>>, %arg10: memref<1x64xf32, #tpu.memory_space<vmem>>, %arg11: memref<15x64xf32, #tpu.memory_space<vmem>>, %arg12: memref<1x64xf32, #tpu.memory_space<vmem>>, %arg13: memref<3x68xf32, #tpu.memory_space<vmem>>, %arg14: memref<3x1xf32, #tpu.memory_space<vmem>>, %arg15: memref<6x64xf32, #tpu.memory_space<vmem>>, %arg16: memref<1x64xf32, #tpu.memory_space<vmem>>, %arg17: memref<64x324xf32, #tpu.memory_space<vmem>>, %arg18: memref<64x1xf32, #tpu.memory_space<vmem>>, %arg19: memref<3x64xf32, #tpu.memory_space<vmem>>, %arg20: memref<3x1xf32, #tpu.memory_space<vmem>>, %arg21: memref<576x128xf32, #tpu.memory_space<vmem>>, %arg22: memref<1x128xf32, #tpu.memory_space<vmem>>, %arg23: memref<128x10xf32, #tpu.memory_space<vmem>>, %arg24: memref<1x10xf32, #tpu.memory_space<vmem>>, %arg25: memref<1x1x10xf32, #tpu.memory_space<vmem>>, %arg26: memref<1x576xf32, #tpu.memory_space<vmem>>, %arg27: memref<3x128xf32, #tpu.memory_space<vmem>>) attributes {dimension_semantics = [#tpu.dimension_semantics<parallel>], iteration_bounds = array<i64: 2>, scalar_prefetch = 0 : i64, scratch_operands = 2 : i64, tpu.core_type = #tpu.core_type<tc>, window_params = [{transform_indices = @transform_0, window_bounds = array<i64: 1, 7, 320>}, {transform_indices = @transform_1, window_bounds = array<i64: 1, 72, 5>}, {transform_indices = @transform_2, window_bounds = array<i64: 1, 328, 2>}, {pipeline_mode = #tpu.pipeline_mode<synchronous>, transform_indices = @transform_3, window_bounds = array<i64: 3, 320, 128>}, {pipeline_mode = #tpu.pipeline_mode<synchronous>, transform_indices = @transform_4, window_bounds = array<i64: 1, 128>}, {pipeline_mode = #tpu.pipeline_mode<synchronous>, transform_indices = @transform_5, window_bounds = array<i64: 128, 512>}, {pipeline_mode = #tpu.pipeline_mode<synchronous>, transform_indices = @transform_6, window_bounds = array<i64: 128, 512>}, {pipeline_mode = #tpu.pipeline_mode<synchronous>, transform_indices = @transform_7, window_bounds = array<i64: 1, 512>}, {pipeline_mode = #tpu.pipeline_mode<synchronous>, transform_indices = @transform_8, window_bounds = array<i64: 128, 64>}, {pipeline_mode = #tpu.pipeline_mode<synchronous>, transform_indices = @transform_9, window_bounds = array<i64: 1, 64>}, {pipeline_mode = #tpu.pipeline_mode<synchronous>, transform_indices = @transform_10, window_bounds = array<i64: 15, 64>}, {pipeline_mode = #tpu.pipeline_mode<synchronous>, transform_indices = @transform_11, window_bounds = array<i64: 1, 64>}, {pipeline_mode = #tpu.pipeline_mode<synchronous>, transform_indices = @transform_12, window_bounds = array<i64: 3, 68>}, {pipeline_mode = #tpu.pipeline_mode<synchronous>, transform_indices = @transform_13, window_bounds = array<i64: 3, 1>}, {pipeline_mode = #tpu.pipeline_mode<synchronous>, transform_indices = @transform_14, window_bounds = array<i64: 6, 64>}, {pipeline_mode = #tpu.pipeline_mode<synchronous>, transform_indices = @transform_15, window_bounds = array<i64: 1, 64>}, {pipeline_mode = #tpu.pipeline_mode<synchronous>, transform_indices = @transform_16, window_bounds = array<i64: 64, 324>}, {pipeline_mode = #tpu.pipeline_mode<synchronous>, transform_indices = @transform_17, window_bounds = array<i64: 64, 1>}, {pipeline_mode = #tpu.pipeline_mode<synchronous>, transform_indices = @transform_18, window_bounds = array<i64: 3, 64>}, {pipeline_mode = #tpu.pipeline_mode<synchronous>, transform_indices = @transform_19, window_bounds = array<i64: 3, 1>}, {pipeline_mode = #tpu.pipeline_mode<synchronous>, transform_indices = @transform_20, window_bounds = array<i64: 576, 128>}, {pipeline_mode = #tpu.pipeline_mode<synchronous>, transform_indices = @transform_21, window_bounds = array<i64: 1, 128>}, {pipeline_mode = #tpu.pipeline_mode<synchronous>, transform_indices = @transform_22, window_bounds = array<i64: 128, 10>}, {pipeline_mode = #tpu.pipeline_mode<synchronous>, transform_indices = @transform_23, window_bounds = array<i64: 1, 10>}, {transform_indices = @transform_24, window_bounds = array<i64: 1, 1, 10>}]} {
    %c0 = arith.constant 0 : index
    %c0_0 = arith.constant 0 : index
    %c0_1 = arith.constant 0 : index
    %0 = vector.load %arg1[%c0, %c0_0, %c0_1] : memref<1x7x320xf32, #tpu.memory_space<vmem>>, vector<1x7x320xf32>
    %1 = vector.shape_cast %0 : vector<1x7x320xf32> to vector<7x320xf32>
    %cst = arith.constant 0.000000e+00 : f32
    %2 = vector.broadcast %cst : f32 to vector<5x128xf32>
    %3 = vector.extract_strided_slice %1 {offsets = [0, 0], sizes = [5, 320], strides = [1, 1]} : vector<7x320xf32> to vector<5x320xf32>
    %c0_2 = arith.constant 0 : index
    %c0_3 = arith.constant 0 : index
    %c0_4 = arith.constant 0 : index
    %4 = vector.load %arg4[%c0_2, %c0_3, %c0_4] : memref<3x320x128xf32, #tpu.memory_space<vmem>>, vector<1x320x128xf32>
    %5 = vector.shape_cast %4 : vector<1x320x128xf32> to vector<320x128xf32>
    %cst_5 = arith.constant dense<0.000000e+00> : vector<5x128xf32>
    %6 = tpu.matmul %3, %5, %cst_5 {dimension_numbers = #tpu.dot_dimension_numbers<[1], [0], [0], [1], [0, 0, 1, 1], [], []>} : vector<5x320xf32>, vector<320x128xf32>, vector<5x128xf32> -> vector<5x128xf32>
    %7 = arith.addf %2, %6 : vector<5x128xf32>
    %8 = vector.extract_strided_slice %1 {offsets = [1, 0], sizes = [5, 320], strides = [1, 1]} : vector<7x320xf32> to vector<5x320xf32>
    %c1 = arith.constant 1 : index
    %c0_6 = arith.constant 0 : index
    %c0_7 = arith.constant 0 : index
    %9 = vector.load %arg4[%c1, %c0_6, %c0_7] : memref<3x320x128xf32, #tpu.memory_space<vmem>>, vector<1x320x128xf32>
    %10 = vector.shape_cast %9 : vector<1x320x128xf32> to vector<320x128xf32>
    %cst_8 = arith.constant dense<0.000000e+00> : vector<5x128xf32>
    %11 = tpu.matmul %8, %10, %cst_8 {dimension_numbers = #tpu.dot_dimension_numbers<[1], [0], [0], [1], [0, 0, 1, 1], [], []>} : vector<5x320xf32>, vector<320x128xf32>, vector<5x128xf32> -> vector<5x128xf32>
    %12 = arith.addf %7, %11 : vector<5x128xf32>
    %13 = vector.extract_strided_slice %1 {offsets = [2, 0], sizes = [5, 320], strides = [1, 1]} : vector<7x320xf32> to vector<5x320xf32>
    %c2 = arith.constant 2 : index
    %c0_9 = arith.constant 0 : index
    %c0_10 = arith.constant 0 : index
    %14 = vector.load %arg4[%c2, %c0_9, %c0_10] : memref<3x320x128xf32, #tpu.memory_space<vmem>>, vector<1x320x128xf32>
    %15 = vector.shape_cast %14 : vector<1x320x128xf32> to vector<320x128xf32>
    %cst_11 = arith.constant dense<0.000000e+00> : vector<5x128xf32>
    %16 = tpu.matmul %13, %15, %cst_11 {dimension_numbers = #tpu.dot_dimension_numbers<[1], [0], [0], [1], [0, 0, 1, 1], [], []>} : vector<5x320xf32>, vector<320x128xf32>, vector<5x128xf32> -> vector<5x128xf32>
    %17 = arith.addf %12, %16 : vector<5x128xf32>
    %c0_12 = arith.constant 0 : index
    %c0_13 = arith.constant 0 : index
    %18 = vector.load %arg5[%c0_12, %c0_13] : memref<1x128xf32, #tpu.memory_space<vmem>>, vector<1x128xf32>
    %19 = vector.broadcast %18 : vector<1x128xf32> to vector<5x128xf32>
    %20 = arith.addf %17, %19 : vector<5x128xf32>
    %cst_14 = arith.constant 0.000000e+00 : f32
    %21 = vector.broadcast %cst_14 : f32 to vector<5x128xf32>
    %22 = arith.maximumf %20, %21 : vector<5x128xf32>
    %23 = vector.extract_strided_slice %22 {offsets = [0, 0], sizes = [3, 128], strides = [1, 1]} : vector<5x128xf32> to vector<3x128xf32>
    %24 = vector.extract_strided_slice %22 {offsets = [1, 0], sizes = [3, 128], strides = [1, 1]} : vector<5x128xf32> to vector<3x128xf32>
    %25 = arith.maximumf %23, %24 : vector<3x128xf32>
    %26 = vector.extract_strided_slice %22 {offsets = [2, 0], sizes = [3, 128], strides = [1, 1]} : vector<5x128xf32> to vector<3x128xf32>
    %27 = arith.maximumf %25, %26 : vector<3x128xf32>
    %c0_15 = arith.constant 0 : index
    %c0_16 = arith.constant 0 : index
    %28 = vector.load %arg6[%c0_15, %c0_16] : memref<128x512xf32, #tpu.memory_space<vmem>>, vector<128x512xf32>
    %cst_17 = arith.constant dense<0.000000e+00> : vector<3x512xf32>
    %29 = tpu.matmul %27, %28, %cst_17 {dimension_numbers = #tpu.dot_dimension_numbers<[1], [0], [0], [1], [0, 0, 1, 1], [], []>} : vector<3x128xf32>, vector<128x512xf32>, vector<3x512xf32> -> vector<3x512xf32>
    %c0_18 = arith.constant 0 : index
    %c0_19 = arith.constant 0 : index
    %30 = vector.load %arg8[%c0_18, %c0_19] : memref<1x512xf32, #tpu.memory_space<vmem>>, vector<1x512xf32>
    %31 = vector.broadcast %30 : vector<1x512xf32> to vector<3x512xf32>
    %32 = arith.addf %29, %31 : vector<3x512xf32>
    %c0_20 = arith.constant 0 : index
    %c0_21 = arith.constant 0 : index
    %33 = vector.load %arg7[%c0_20, %c0_21] : memref<128x512xf32, #tpu.memory_space<vmem>>, vector<128x512xf32>
    %cst_22 = arith.constant 0.000000e+00 : f32
    %34 = vector.broadcast %cst_22 : f32 to vector<1x128xf32>
    %cst_23 = arith.constant 0.000000e+00 : f32
    %35 = vector.broadcast %cst_23 : f32 to vector<1x128xf32>
    %36 = vector.extract_strided_slice %32 {offsets = [0, 0], sizes = [1, 512], strides = [1, 1]} : vector<3x512xf32> to vector<1x512xf32>
    %cst_24 = arith.constant dense<0.000000e+00> : vector<1x512xf32>
    %37 = tpu.matmul %34, %33, %cst_24 {dimension_numbers = #tpu.dot_dimension_numbers<[1], [0], [0], [1], [0, 0, 1, 1], [], []>} : vector<1x128xf32>, vector<128x512xf32>, vector<1x512xf32> -> vector<1x512xf32>
    %38 = arith.addf %36, %37 : vector<1x512xf32>
    %39 = vector.extract_strided_slice %38 {offsets = [0, 0], sizes = [1, 128], strides = [1, 1]} : vector<1x512xf32> to vector<1x128xf32>
    %40 = arith.negf %39 : vector<1x128xf32>
    %41 = math.exp %40 : vector<1x128xf32>
    %cst_25 = arith.constant 1.000000e+00 : f32
    %42 = vector.broadcast %cst_25 : f32 to vector<1x128xf32>
    %43 = arith.addf %42, %41 : vector<1x128xf32>
    %44 = arith.divf %42, %43 : vector<1x128xf32>
    %45 = vector.extract_strided_slice %38 {offsets = [0, 128], sizes = [1, 128], strides = [1, 1]} : vector<1x512xf32> to vector<1x128xf32>
    %46 = arith.negf %45 : vector<1x128xf32>
    %47 = math.exp %46 : vector<1x128xf32>
    %cst_26 = arith.constant 1.000000e+00 : f32
    %48 = vector.broadcast %cst_26 : f32 to vector<1x128xf32>
    %49 = arith.addf %48, %47 : vector<1x128xf32>
    %50 = arith.divf %48, %49 : vector<1x128xf32>
    %51 = vector.extract_strided_slice %38 {offsets = [0, 256], sizes = [1, 128], strides = [1, 1]} : vector<1x512xf32> to vector<1x128xf32>
    %52 = math.tanh %51 : vector<1x128xf32>
    %53 = vector.extract_strided_slice %38 {offsets = [0, 384], sizes = [1, 128], strides = [1, 1]} : vector<1x512xf32> to vector<1x128xf32>
    %54 = arith.negf %53 : vector<1x128xf32>
    %55 = math.exp %54 : vector<1x128xf32>
    %cst_27 = arith.constant 1.000000e+00 : f32
    %56 = vector.broadcast %cst_27 : f32 to vector<1x128xf32>
    %57 = arith.addf %56, %55 : vector<1x128xf32>
    %58 = arith.divf %56, %57 : vector<1x128xf32>
    %59 = arith.mulf %50, %35 : vector<1x128xf32>
    %60 = arith.mulf %44, %52 : vector<1x128xf32>
    %61 = arith.addf %59, %60 : vector<1x128xf32>
    %62 = math.tanh %61 : vector<1x128xf32>
    %63 = arith.mulf %58, %62 : vector<1x128xf32>
    %c0_28 = arith.constant 0 : index
    %c0_29 = arith.constant 0 : index
    %64 = vector.load %arg27[%c0_28, %c0_29] : memref<3x128xf32, #tpu.memory_space<vmem>>, vector<1x128xf32>
    tpu.vector_store %arg27[%c0_28, %c0_29], %63 {strides = array<i32>} : memref<3x128xf32, #tpu.memory_space<vmem>>, vector<1x128xf32>,
    %65 = vector.extract_strided_slice %32 {offsets = [1, 0], sizes = [1, 512], strides = [1, 1]} : vector<3x512xf32> to vector<1x512xf32>
    %cst_30 = arith.constant dense<0.000000e+00> : vector<1x512xf32>
    %66 = tpu.matmul %63, %33, %cst_30 {dimension_numbers = #tpu.dot_dimension_numbers<[1], [0], [0], [1], [0, 0, 1, 1], [], []>} : vector<1x128xf32>, vector<128x512xf32>, vector<1x512xf32> -> vector<1x512xf32>
    %67 = arith.addf %65, %66 : vector<1x512xf32>
    %68 = vector.extract_strided_slice %67 {offsets = [0, 0], sizes = [1, 128], strides = [1, 1]} : vector<1x512xf32> to vector<1x128xf32>
    %69 = arith.negf %68 : vector<1x128xf32>
    %70 = math.exp %69 : vector<1x128xf32>
    %cst_31 = arith.constant 1.000000e+00 : f32
    %71 = vector.broadcast %cst_31 : f32 to vector<1x128xf32>
    %72 = arith.addf %71, %70 : vector<1x128xf32>
    %73 = arith.divf %71, %72 : vector<1x128xf32>
    %74 = vector.extract_strided_slice %67 {offsets = [0, 128], sizes = [1, 128], strides = [1, 1]} : vector<1x512xf32> to vector<1x128xf32>
    %75 = arith.negf %74 : vector<1x128xf32>
    %76 = math.exp %75 : vector<1x128xf32>
    %cst_32 = arith.constant 1.000000e+00 : f32
    %77 = vector.broadcast %cst_32 : f32 to vector<1x128xf32>
    %78 = arith.addf %77, %76 : vector<1x128xf32>
    %79 = arith.divf %77, %78 : vector<1x128xf32>
    %80 = vector.extract_strided_slice %67 {offsets = [0, 256], sizes = [1, 128], strides = [1, 1]} : vector<1x512xf32> to vector<1x128xf32>
    %81 = math.tanh %80 : vector<1x128xf32>
    %82 = vector.extract_strided_slice %67 {offsets = [0, 384], sizes = [1, 128], strides = [1, 1]} : vector<1x512xf32> to vector<1x128xf32>
    %83 = arith.negf %82 : vector<1x128xf32>
    %84 = math.exp %83 : vector<1x128xf32>
    %cst_33 = arith.constant 1.000000e+00 : f32
    %85 = vector.broadcast %cst_33 : f32 to vector<1x128xf32>
    %86 = arith.addf %85, %84 : vector<1x128xf32>
    %87 = arith.divf %85, %86 : vector<1x128xf32>
    %88 = arith.mulf %79, %61 : vector<1x128xf32>
    %89 = arith.mulf %73, %81 : vector<1x128xf32>
    %90 = arith.addf %88, %89 : vector<1x128xf32>
    %91 = math.tanh %90 : vector<1x128xf32>
    %92 = arith.mulf %87, %91 : vector<1x128xf32>
    %c1_34 = arith.constant 1 : index
    %c0_35 = arith.constant 0 : index
    %93 = vector.load %arg27[%c1_34, %c0_35] : memref<3x128xf32, #tpu.memory_space<vmem>>, vector<1x128xf32>
    tpu.vector_store %arg27[%c1_34, %c0_35], %92 {strides = array<i32>} : memref<3x128xf32, #tpu.memory_space<vmem>>, vector<1x128xf32>,
    %94 = vector.extract_strided_slice %32 {offsets = [2, 0], sizes = [1, 512], strides = [1, 1]} : vector<3x512xf32> to vector<1x512xf32>
    %cst_36 = arith.constant dense<0.000000e+00> : vector<1x512xf32>
    %95 = tpu.matmul %92, %33, %cst_36 {dimension_numbers = #tpu.dot_dimension_numbers<[1], [0], [0], [1], [0, 0, 1, 1], [], []>} : vector<1x128xf32>, vector<128x512xf32>, vector<1x512xf32> -> vector<1x512xf32>
    %96 = arith.addf %94, %95 : vector<1x512xf32>
    %97 = vector.extract_strided_slice %96 {offsets = [0, 0], sizes = [1, 128], strides = [1, 1]} : vector<1x512xf32> to vector<1x128xf32>
    %98 = arith.negf %97 : vector<1x128xf32>
    %99 = math.exp %98 : vector<1x128xf32>
    %cst_37 = arith.constant 1.000000e+00 : f32
    %100 = vector.broadcast %cst_37 : f32 to vector<1x128xf32>
    %101 = arith.addf %100, %99 : vector<1x128xf32>
    %102 = arith.divf %100, %101 : vector<1x128xf32>
    %103 = vector.extract_strided_slice %96 {offsets = [0, 128], sizes = [1, 128], strides = [1, 1]} : vector<1x512xf32> to vector<1x128xf32>
    %104 = arith.negf %103 : vector<1x128xf32>
    %105 = math.exp %104 : vector<1x128xf32>
    %cst_38 = arith.constant 1.000000e+00 : f32
    %106 = vector.broadcast %cst_38 : f32 to vector<1x128xf32>
    %107 = arith.addf %106, %105 : vector<1x128xf32>
    %108 = arith.divf %106, %107 : vector<1x128xf32>
    %109 = vector.extract_strided_slice %96 {offsets = [0, 256], sizes = [1, 128], strides = [1, 1]} : vector<1x512xf32> to vector<1x128xf32>
    %110 = math.tanh %109 : vector<1x128xf32>
    %111 = vector.extract_strided_slice %96 {offsets = [0, 384], sizes = [1, 128], strides = [1, 1]} : vector<1x512xf32> to vector<1x128xf32>
    %112 = arith.negf %111 : vector<1x128xf32>
    %113 = math.exp %112 : vector<1x128xf32>
    %cst_39 = arith.constant 1.000000e+00 : f32
    %114 = vector.broadcast %cst_39 : f32 to vector<1x128xf32>
    %115 = arith.addf %114, %113 : vector<1x128xf32>
    %116 = arith.divf %114, %115 : vector<1x128xf32>
    %117 = arith.mulf %108, %90 : vector<1x128xf32>
    %118 = arith.mulf %102, %110 : vector<1x128xf32>
    %119 = arith.addf %117, %118 : vector<1x128xf32>
    %120 = math.tanh %119 : vector<1x128xf32>
    %121 = arith.mulf %116, %120 : vector<1x128xf32>
    %c2_40 = arith.constant 2 : index
    %c0_41 = arith.constant 0 : index
    %122 = vector.load %arg27[%c2_40, %c0_41] : memref<3x128xf32, #tpu.memory_space<vmem>>, vector<1x128xf32>
    tpu.vector_store %arg27[%c2_40, %c0_41], %121 {strides = array<i32>} : memref<3x128xf32, #tpu.memory_space<vmem>>, vector<1x128xf32>,
    %c0_42 = arith.constant 0 : index
    %c0_43 = arith.constant 0 : index
    %123 = vector.load %arg27[%c0_42, %c0_43] : memref<3x128xf32, #tpu.memory_space<vmem>>, vector<3x128xf32>
    %c0_44 = arith.constant 0 : index
    %c0_45 = arith.constant 0 : index
    %124 = vector.load %arg9[%c0_44, %c0_45] : memref<128x64xf32, #tpu.memory_space<vmem>>, vector<128x64xf32>
    %cst_46 = arith.constant dense<0.000000e+00> : vector<3x64xf32>
    %125 = tpu.matmul %123, %124, %cst_46 {dimension_numbers = #tpu.dot_dimension_numbers<[1], [0], [0], [1], [0, 0, 1, 1], [], []>} : vector<3x128xf32>, vector<128x64xf32>, vector<3x64xf32> -> vector<3x64xf32>
    %c0_47 = arith.constant 0 : index
    %c0_48 = arith.constant 0 : index
    %126 = vector.load %arg10[%c0_47, %c0_48] : memref<1x64xf32, #tpu.memory_space<vmem>>, vector<1x64xf32>
    %127 = vector.broadcast %126 : vector<1x64xf32> to vector<3x64xf32>
    %128 = arith.addf %125, %127 : vector<3x64xf32>
    %129 = vector.extract_strided_slice %128 {offsets = [0, 0], sizes = [1, 64], strides = [1, 1]} : vector<3x64xf32> to vector<1x64xf32>
    %c0_49 = arith.constant 0 : index
    %c0_50 = arith.constant 0 : index
    %130 = vector.load %arg26[%c0_49, %c0_50] : memref<1x576xf32, #tpu.memory_space<vmem>>, vector<1x64xf32>
    tpu.vector_store %arg26[%c0_49, %c0_50], %129 {strides = array<i32>} : memref<1x576xf32, #tpu.memory_space<vmem>>, vector<1x64xf32>,
    %131 = vector.extract_strided_slice %128 {offsets = [1, 0], sizes = [1, 64], strides = [1, 1]} : vector<3x64xf32> to vector<1x64xf32>
    %c0_51 = arith.constant 0 : index
    %c64 = arith.constant 64 : index
    %132 = vector.load %arg26[%c0_51, %c64] : memref<1x576xf32, #tpu.memory_space<vmem>>, vector<1x64xf32>
    tpu.vector_store %arg26[%c0_51, %c64], %131 {strides = array<i32>} : memref<1x576xf32, #tpu.memory_space<vmem>>, vector<1x64xf32>,
    %133 = vector.extract_strided_slice %128 {offsets = [2, 0], sizes = [1, 64], strides = [1, 1]} : vector<3x64xf32> to vector<1x64xf32>
    %c0_52 = arith.constant 0 : index
    %c128 = arith.constant 128 : index
    %134 = vector.load %arg26[%c0_52, %c128] : memref<1x576xf32, #tpu.memory_space<vmem>>, vector<1x64xf32>
    tpu.vector_store %arg26[%c0_52, %c128], %133 {strides = array<i32>} : memref<1x576xf32, #tpu.memory_space<vmem>>, vector<1x64xf32>,
    %c0_53 = arith.constant 0 : index
    %c0_54 = arith.constant 0 : index
    %c0_55 = arith.constant 0 : index
    %135 = vector.load %arg2[%c0_53, %c0_54, %c0_55] : memref<1x72x5xf32, #tpu.memory_space<vmem>>, vector<1x72x5xf32>
    %136 = vector.shape_cast %135 : vector<1x72x5xf32> to vector<72x5xf32>
    %c0_56 = arith.constant 0 : index
    %c0_57 = arith.constant 0 : index
    %137 = vector.load %arg11[%c0_56, %c0_57] : memref<15x64xf32, #tpu.memory_space<vmem>>, vector<15x64xf32>
    %cst_58 = arith.constant 0.000000e+00 : f32
    %138 = vector.broadcast %cst_58 : f32 to vector<70x64xf32>
    %139 = vector.extract_strided_slice %136 {offsets = [0, 0], sizes = [70, 1], strides = [1, 1]} : vector<72x5xf32> to vector<70x1xf32>
    %140 = vector.extract_strided_slice %137 {offsets = [0, 0], sizes = [1, 64], strides = [1, 1]} : vector<15x64xf32> to vector<1x64xf32>
    %141 = vector.broadcast %139 : vector<70x1xf32> to vector<70x64xf32>
    %142 = vector.broadcast %140 : vector<1x64xf32> to vector<70x64xf32>
    %143 = arith.mulf %141, %142 : vector<70x64xf32>
    %144 = arith.addf %138, %143 : vector<70x64xf32>
    %145 = vector.extract_strided_slice %136 {offsets = [0, 1], sizes = [70, 1], strides = [1, 1]} : vector<72x5xf32> to vector<70x1xf32>
    %146 = vector.extract_strided_slice %137 {offsets = [1, 0], sizes = [1, 64], strides = [1, 1]} : vector<15x64xf32> to vector<1x64xf32>
    %147 = vector.broadcast %145 : vector<70x1xf32> to vector<70x64xf32>
    %148 = vector.broadcast %146 : vector<1x64xf32> to vector<70x64xf32>
    %149 = arith.mulf %147, %148 : vector<70x64xf32>
    %150 = arith.addf %144, %149 : vector<70x64xf32>
    %151 = vector.extract_strided_slice %136 {offsets = [0, 2], sizes = [70, 1], strides = [1, 1]} : vector<72x5xf32> to vector<70x1xf32>
    %152 = vector.extract_strided_slice %137 {offsets = [2, 0], sizes = [1, 64], strides = [1, 1]} : vector<15x64xf32> to vector<1x64xf32>
    %153 = vector.broadcast %151 : vector<70x1xf32> to vector<70x64xf32>
    %154 = vector.broadcast %152 : vector<1x64xf32> to vector<70x64xf32>
    %155 = arith.mulf %153, %154 : vector<70x64xf32>
    %156 = arith.addf %150, %155 : vector<70x64xf32>
    %157 = vector.extract_strided_slice %136 {offsets = [0, 3], sizes = [70, 1], strides = [1, 1]} : vector<72x5xf32> to vector<70x1xf32>
    %158 = vector.extract_strided_slice %137 {offsets = [3, 0], sizes = [1, 64], strides = [1, 1]} : vector<15x64xf32> to vector<1x64xf32>
    %159 = vector.broadcast %157 : vector<70x1xf32> to vector<70x64xf32>
    %160 = vector.broadcast %158 : vector<1x64xf32> to vector<70x64xf32>
    %161 = arith.mulf %159, %160 : vector<70x64xf32>
    %162 = arith.addf %156, %161 : vector<70x64xf32>
    %163 = vector.extract_strided_slice %136 {offsets = [0, 4], sizes = [70, 1], strides = [1, 1]} : vector<72x5xf32> to vector<70x1xf32>
    %164 = vector.extract_strided_slice %137 {offsets = [4, 0], sizes = [1, 64], strides = [1, 1]} : vector<15x64xf32> to vector<1x64xf32>
    %165 = vector.broadcast %163 : vector<70x1xf32> to vector<70x64xf32>
    %166 = vector.broadcast %164 : vector<1x64xf32> to vector<70x64xf32>
    %167 = arith.mulf %165, %166 : vector<70x64xf32>
    %168 = arith.addf %162, %167 : vector<70x64xf32>
    %169 = vector.extract_strided_slice %136 {offsets = [1, 0], sizes = [70, 1], strides = [1, 1]} : vector<72x5xf32> to vector<70x1xf32>
    %170 = vector.extract_strided_slice %137 {offsets = [5, 0], sizes = [1, 64], strides = [1, 1]} : vector<15x64xf32> to vector<1x64xf32>
    %171 = vector.broadcast %169 : vector<70x1xf32> to vector<70x64xf32>
    %172 = vector.broadcast %170 : vector<1x64xf32> to vector<70x64xf32>
    %173 = arith.mulf %171, %172 : vector<70x64xf32>
    %174 = arith.addf %168, %173 : vector<70x64xf32>
    %175 = vector.extract_strided_slice %136 {offsets = [1, 1], sizes = [70, 1], strides = [1, 1]} : vector<72x5xf32> to vector<70x1xf32>
    %176 = vector.extract_strided_slice %137 {offsets = [6, 0], sizes = [1, 64], strides = [1, 1]} : vector<15x64xf32> to vector<1x64xf32>
    %177 = vector.broadcast %175 : vector<70x1xf32> to vector<70x64xf32>
    %178 = vector.broadcast %176 : vector<1x64xf32> to vector<70x64xf32>
    %179 = arith.mulf %177, %178 : vector<70x64xf32>
    %180 = arith.addf %174, %179 : vector<70x64xf32>
    %181 = vector.extract_strided_slice %136 {offsets = [1, 2], sizes = [70, 1], strides = [1, 1]} : vector<72x5xf32> to vector<70x1xf32>
    %182 = vector.extract_strided_slice %137 {offsets = [7, 0], sizes = [1, 64], strides = [1, 1]} : vector<15x64xf32> to vector<1x64xf32>
    %183 = vector.broadcast %181 : vector<70x1xf32> to vector<70x64xf32>
    %184 = vector.broadcast %182 : vector<1x64xf32> to vector<70x64xf32>
    %185 = arith.mulf %183, %184 : vector<70x64xf32>
    %186 = arith.addf %180, %185 : vector<70x64xf32>
    %187 = vector.extract_strided_slice %136 {offsets = [1, 3], sizes = [70, 1], strides = [1, 1]} : vector<72x5xf32> to vector<70x1xf32>
    %188 = vector.extract_strided_slice %137 {offsets = [8, 0], sizes = [1, 64], strides = [1, 1]} : vector<15x64xf32> to vector<1x64xf32>
    %189 = vector.broadcast %187 : vector<70x1xf32> to vector<70x64xf32>
    %190 = vector.broadcast %188 : vector<1x64xf32> to vector<70x64xf32>
    %191 = arith.mulf %189, %190 : vector<70x64xf32>
    %192 = arith.addf %186, %191 : vector<70x64xf32>
    %193 = vector.extract_strided_slice %136 {offsets = [1, 4], sizes = [70, 1], strides = [1, 1]} : vector<72x5xf32> to vector<70x1xf32>
    %194 = vector.extract_strided_slice %137 {offsets = [9, 0], sizes = [1, 64], strides = [1, 1]} : vector<15x64xf32> to vector<1x64xf32>
    %195 = vector.broadcast %193 : vector<70x1xf32> to vector<70x64xf32>
    %196 = vector.broadcast %194 : vector<1x64xf32> to vector<70x64xf32>
    %197 = arith.mulf %195, %196 : vector<70x64xf32>
    %198 = arith.addf %192, %197 : vector<70x64xf32>
    %199 = vector.extract_strided_slice %136 {offsets = [2, 0], sizes = [70, 1], strides = [1, 1]} : vector<72x5xf32> to vector<70x1xf32>
    %200 = vector.extract_strided_slice %137 {offsets = [10, 0], sizes = [1, 64], strides = [1, 1]} : vector<15x64xf32> to vector<1x64xf32>
    %201 = vector.broadcast %199 : vector<70x1xf32> to vector<70x64xf32>
    %202 = vector.broadcast %200 : vector<1x64xf32> to vector<70x64xf32>
    %203 = arith.mulf %201, %202 : vector<70x64xf32>
    %204 = arith.addf %198, %203 : vector<70x64xf32>
    %205 = vector.extract_strided_slice %136 {offsets = [2, 1], sizes = [70, 1], strides = [1, 1]} : vector<72x5xf32> to vector<70x1xf32>
    %206 = vector.extract_strided_slice %137 {offsets = [11, 0], sizes = [1, 64], strides = [1, 1]} : vector<15x64xf32> to vector<1x64xf32>
    %207 = vector.broadcast %205 : vector<70x1xf32> to vector<70x64xf32>
    %208 = vector.broadcast %206 : vector<1x64xf32> to vector<70x64xf32>
    %209 = arith.mulf %207, %208 : vector<70x64xf32>
    %210 = arith.addf %204, %209 : vector<70x64xf32>
    %211 = vector.extract_strided_slice %136 {offsets = [2, 2], sizes = [70, 1], strides = [1, 1]} : vector<72x5xf32> to vector<70x1xf32>
    %212 = vector.extract_strided_slice %137 {offsets = [12, 0], sizes = [1, 64], strides = [1, 1]} : vector<15x64xf32> to vector<1x64xf32>
    %213 = vector.broadcast %211 : vector<70x1xf32> to vector<70x64xf32>
    %214 = vector.broadcast %212 : vector<1x64xf32> to vector<70x64xf32>
    %215 = arith.mulf %213, %214 : vector<70x64xf32>
    %216 = arith.addf %210, %215 : vector<70x64xf32>
    %217 = vector.extract_strided_slice %136 {offsets = [2, 3], sizes = [70, 1], strides = [1, 1]} : vector<72x5xf32> to vector<70x1xf32>
    %218 = vector.extract_strided_slice %137 {offsets = [13, 0], sizes = [1, 64], strides = [1, 1]} : vector<15x64xf32> to vector<1x64xf32>
    %219 = vector.broadcast %217 : vector<70x1xf32> to vector<70x64xf32>
    %220 = vector.broadcast %218 : vector<1x64xf32> to vector<70x64xf32>
    %221 = arith.mulf %219, %220 : vector<70x64xf32>
    %222 = arith.addf %216, %221 : vector<70x64xf32>
    %223 = vector.extract_strided_slice %136 {offsets = [2, 4], sizes = [70, 1], strides = [1, 1]} : vector<72x5xf32> to vector<70x1xf32>
    %224 = vector.extract_strided_slice %137 {offsets = [14, 0], sizes = [1, 64], strides = [1, 1]} : vector<15x64xf32> to vector<1x64xf32>
    %225 = vector.broadcast %223 : vector<70x1xf32> to vector<70x64xf32>
    %226 = vector.broadcast %224 : vector<1x64xf32> to vector<70x64xf32>
    %227 = arith.mulf %225, %226 : vector<70x64xf32>
    %228 = arith.addf %222, %227 : vector<70x64xf32>
    %c0_59 = arith.constant 0 : index
    %c0_60 = arith.constant 0 : index
    %229 = vector.load %arg12[%c0_59, %c0_60] : memref<1x64xf32, #tpu.memory_space<vmem>>, vector<1x64xf32>
    %230 = vector.broadcast %229 : vector<1x64xf32> to vector<70x64xf32>
    %231 = arith.addf %228, %230 : vector<70x64xf32>
    %cst_61 = arith.constant 0.000000e+00 : f32
    %232 = vector.broadcast %cst_61 : f32 to vector<70x64xf32>
    %233 = arith.maximumf %231, %232 : vector<70x64xf32>
    %234 = vector.extract_strided_slice %233 {offsets = [0, 0], sizes = [68, 64], strides = [1, 1]} : vector<70x64xf32> to vector<68x64xf32>
    %235 = vector.extract_strided_slice %233 {offsets = [1, 0], sizes = [68, 64], strides = [1, 1]} : vector<70x64xf32> to vector<68x64xf32>
    %236 = arith.maximumf %234, %235 : vector<68x64xf32>
    %237 = vector.extract_strided_slice %233 {offsets = [2, 0], sizes = [68, 64], strides = [1, 1]} : vector<70x64xf32> to vector<68x64xf32>
    %238 = arith.maximumf %236, %237 : vector<68x64xf32>
    %c0_62 = arith.constant 0 : index
    %c0_63 = arith.constant 0 : index
    %239 = vector.load %arg13[%c0_62, %c0_63] : memref<3x68xf32, #tpu.memory_space<vmem>>, vector<3x68xf32>
    %cst_64 = arith.constant dense<0.000000e+00> : vector<3x64xf32>
    %240 = tpu.matmul %239, %238, %cst_64 {dimension_numbers = #tpu.dot_dimension_numbers<[1], [0], [0], [1], [0, 0, 1, 1], [], []>} : vector<3x68xf32>, vector<68x64xf32>, vector<3x64xf32> -> vector<3x64xf32>
    %c0_65 = arith.constant 0 : index
    %c0_66 = arith.constant 0 : index
    %241 = vector.load %arg14[%c0_65, %c0_66] : memref<3x1xf32, #tpu.memory_space<vmem>>, vector<3x1xf32>
    %242 = vector.broadcast %241 : vector<3x1xf32> to vector<3x64xf32>
    %243 = arith.addf %240, %242 : vector<3x64xf32>
    %244 = vector.extract_strided_slice %243 {offsets = [0, 0], sizes = [1, 64], strides = [1, 1]} : vector<3x64xf32> to vector<1x64xf32>
    %c0_67 = arith.constant 0 : index
    %c192 = arith.constant 192 : index
    %245 = vector.load %arg26[%c0_67, %c192] : memref<1x576xf32, #tpu.memory_space<vmem>>, vector<1x64xf32>
    tpu.vector_store %arg26[%c0_67, %c192], %244 {strides = array<i32>} : memref<1x576xf32, #tpu.memory_space<vmem>>, vector<1x64xf32>,
    %246 = vector.extract_strided_slice %243 {offsets = [1, 0], sizes = [1, 64], strides = [1, 1]} : vector<3x64xf32> to vector<1x64xf32>
    %c0_68 = arith.constant 0 : index
    %c256 = arith.constant 256 : index
    %247 = vector.load %arg26[%c0_68, %c256] : memref<1x576xf32, #tpu.memory_space<vmem>>, vector<1x64xf32>
    tpu.vector_store %arg26[%c0_68, %c256], %246 {strides = array<i32>} : memref<1x576xf32, #tpu.memory_space<vmem>>, vector<1x64xf32>,
    %248 = vector.extract_strided_slice %243 {offsets = [2, 0], sizes = [1, 64], strides = [1, 1]} : vector<3x64xf32> to vector<1x64xf32>
    %c0_69 = arith.constant 0 : index
    %c320 = arith.constant 320 : index
    %249 = vector.load %arg26[%c0_69, %c320] : memref<1x576xf32, #tpu.memory_space<vmem>>, vector<1x64xf32>
    tpu.vector_store %arg26[%c0_69, %c320], %248 {strides = array<i32>} : memref<1x576xf32, #tpu.memory_space<vmem>>, vector<1x64xf32>,
    %c0_70 = arith.constant 0 : index
    %c0_71 = arith.constant 0 : index
    %c0_72 = arith.constant 0 : index
    %250 = vector.load %arg3[%c0_70, %c0_71, %c0_72] : memref<1x328x2xf32, #tpu.memory_space<vmem>>, vector<1x328x2xf32>
    %251 = vector.shape_cast %250 : vector<1x328x2xf32> to vector<328x2xf32>
    %c0_73 = arith.constant 0 : index
    %c0_74 = arith.constant 0 : index
    %252 = vector.load %arg15[%c0_73, %c0_74] : memref<6x64xf32, #tpu.memory_space<vmem>>, vector<6x64xf32>
    %cst_75 = arith.constant 0.000000e+00 : f32
    %253 = vector.broadcast %cst_75 : f32 to vector<326x64xf32>
    %254 = vector.extract_strided_slice %251 {offsets = [0, 0], sizes = [326, 1], strides = [1, 1]} : vector<328x2xf32> to vector<326x1xf32>
    %255 = vector.extract_strided_slice %252 {offsets = [0, 0], sizes = [1, 64], strides = [1, 1]} : vector<6x64xf32> to vector<1x64xf32>
    %256 = vector.broadcast %254 : vector<326x1xf32> to vector<326x64xf32>
    %257 = vector.broadcast %255 : vector<1x64xf32> to vector<326x64xf32>
    %258 = arith.mulf %256, %257 : vector<326x64xf32>
    %259 = arith.addf %253, %258 : vector<326x64xf32>
    %260 = vector.extract_strided_slice %251 {offsets = [0, 1], sizes = [326, 1], strides = [1, 1]} : vector<328x2xf32> to vector<326x1xf32>
    %261 = vector.extract_strided_slice %252 {offsets = [1, 0], sizes = [1, 64], strides = [1, 1]} : vector<6x64xf32> to vector<1x64xf32>
    %262 = vector.broadcast %260 : vector<326x1xf32> to vector<326x64xf32>
    %263 = vector.broadcast %261 : vector<1x64xf32> to vector<326x64xf32>
    %264 = arith.mulf %262, %263 : vector<326x64xf32>
    %265 = arith.addf %259, %264 : vector<326x64xf32>
    %266 = vector.extract_strided_slice %251 {offsets = [1, 0], sizes = [326, 1], strides = [1, 1]} : vector<328x2xf32> to vector<326x1xf32>
    %267 = vector.extract_strided_slice %252 {offsets = [2, 0], sizes = [1, 64], strides = [1, 1]} : vector<6x64xf32> to vector<1x64xf32>
    %268 = vector.broadcast %266 : vector<326x1xf32> to vector<326x64xf32>
    %269 = vector.broadcast %267 : vector<1x64xf32> to vector<326x64xf32>
    %270 = arith.mulf %268, %269 : vector<326x64xf32>
    %271 = arith.addf %265, %270 : vector<326x64xf32>
    %272 = vector.extract_strided_slice %251 {offsets = [1, 1], sizes = [326, 1], strides = [1, 1]} : vector<328x2xf32> to vector<326x1xf32>
    %273 = vector.extract_strided_slice %252 {offsets = [3, 0], sizes = [1, 64], strides = [1, 1]} : vector<6x64xf32> to vector<1x64xf32>
    %274 = vector.broadcast %272 : vector<326x1xf32> to vector<326x64xf32>
    %275 = vector.broadcast %273 : vector<1x64xf32> to vector<326x64xf32>
    %276 = arith.mulf %274, %275 : vector<326x64xf32>
    %277 = arith.addf %271, %276 : vector<326x64xf32>
    %278 = vector.extract_strided_slice %251 {offsets = [2, 0], sizes = [326, 1], strides = [1, 1]} : vector<328x2xf32> to vector<326x1xf32>
    %279 = vector.extract_strided_slice %252 {offsets = [4, 0], sizes = [1, 64], strides = [1, 1]} : vector<6x64xf32> to vector<1x64xf32>
    %280 = vector.broadcast %278 : vector<326x1xf32> to vector<326x64xf32>
    %281 = vector.broadcast %279 : vector<1x64xf32> to vector<326x64xf32>
    %282 = arith.mulf %280, %281 : vector<326x64xf32>
    %283 = arith.addf %277, %282 : vector<326x64xf32>
    %284 = vector.extract_strided_slice %251 {offsets = [2, 1], sizes = [326, 1], strides = [1, 1]} : vector<328x2xf32> to vector<326x1xf32>
    %285 = vector.extract_strided_slice %252 {offsets = [5, 0], sizes = [1, 64], strides = [1, 1]} : vector<6x64xf32> to vector<1x64xf32>
    %286 = vector.broadcast %284 : vector<326x1xf32> to vector<326x64xf32>
    %287 = vector.broadcast %285 : vector<1x64xf32> to vector<326x64xf32>
    %288 = arith.mulf %286, %287 : vector<326x64xf32>
    %289 = arith.addf %283, %288 : vector<326x64xf32>
    %c0_76 = arith.constant 0 : index
    %c0_77 = arith.constant 0 : index
    %290 = vector.load %arg16[%c0_76, %c0_77] : memref<1x64xf32, #tpu.memory_space<vmem>>, vector<1x64xf32>
    %291 = vector.broadcast %290 : vector<1x64xf32> to vector<326x64xf32>
    %292 = arith.addf %289, %291 : vector<326x64xf32>
    %cst_78 = arith.constant 0.000000e+00 : f32
    %293 = vector.broadcast %cst_78 : f32 to vector<326x64xf32>
    %294 = arith.maximumf %292, %293 : vector<326x64xf32>
    %295 = vector.extract_strided_slice %294 {offsets = [0, 0], sizes = [324, 64], strides = [1, 1]} : vector<326x64xf32> to vector<324x64xf32>
    %296 = vector.extract_strided_slice %294 {offsets = [1, 0], sizes = [324, 64], strides = [1, 1]} : vector<326x64xf32> to vector<324x64xf32>
    %297 = arith.maximumf %295, %296 : vector<324x64xf32>
    %298 = vector.extract_strided_slice %294 {offsets = [2, 0], sizes = [324, 64], strides = [1, 1]} : vector<326x64xf32> to vector<324x64xf32>
    %299 = arith.maximumf %297, %298 : vector<324x64xf32>
    %c0_79 = arith.constant 0 : index
    %c0_80 = arith.constant 0 : index
    %300 = vector.load %arg17[%c0_79, %c0_80] : memref<64x324xf32, #tpu.memory_space<vmem>>, vector<64x324xf32>
    %cst_81 = arith.constant dense<0.000000e+00> : vector<64x64xf32>
    %301 = tpu.matmul %300, %299, %cst_81 {dimension_numbers = #tpu.dot_dimension_numbers<[1], [0], [0], [1], [0, 0, 1, 1], [], []>} : vector<64x324xf32>, vector<324x64xf32>, vector<64x64xf32> -> vector<64x64xf32>
    %c0_82 = arith.constant 0 : index
    %c0_83 = arith.constant 0 : index
    %302 = vector.load %arg18[%c0_82, %c0_83] : memref<64x1xf32, #tpu.memory_space<vmem>>, vector<64x1xf32>
    %303 = vector.broadcast %302 : vector<64x1xf32> to vector<64x64xf32>
    %304 = arith.addf %301, %303 : vector<64x64xf32>
    %cst_84 = arith.constant 0.000000e+00 : f32
    %305 = vector.broadcast %cst_84 : f32 to vector<64x64xf32>
    %306 = arith.maximumf %304, %305 : vector<64x64xf32>
    %c0_85 = arith.constant 0 : index
    %c0_86 = arith.constant 0 : index
    %307 = vector.load %arg19[%c0_85, %c0_86] : memref<3x64xf32, #tpu.memory_space<vmem>>, vector<3x64xf32>
    %cst_87 = arith.constant dense<0.000000e+00> : vector<3x64xf32>
    %308 = tpu.matmul %307, %306, %cst_87 {dimension_numbers = #tpu.dot_dimension_numbers<[1], [0], [0], [1], [0, 0, 1, 1], [], []>} : vector<3x64xf32>, vector<64x64xf32>, vector<3x64xf32> -> vector<3x64xf32>
    %c0_88 = arith.constant 0 : index
    %c0_89 = arith.constant 0 : index
    %309 = vector.load %arg20[%c0_88, %c0_89] : memref<3x1xf32, #tpu.memory_space<vmem>>, vector<3x1xf32>
    %310 = vector.broadcast %309 : vector<3x1xf32> to vector<3x64xf32>
    %311 = arith.addf %308, %310 : vector<3x64xf32>
    %cst_90 = arith.constant 0.000000e+00 : f32
    %312 = vector.broadcast %cst_90 : f32 to vector<3x64xf32>
    %313 = arith.maximumf %311, %312 : vector<3x64xf32>
    %314 = vector.extract_strided_slice %313 {offsets = [0, 0], sizes = [1, 64], strides = [1, 1]} : vector<3x64xf32> to vector<1x64xf32>
    %c0_91 = arith.constant 0 : index
    %c384 = arith.constant 384 : index
    %315 = vector.load %arg26[%c0_91, %c384] : memref<1x576xf32, #tpu.memory_space<vmem>>, vector<1x64xf32>
    tpu.vector_store %arg26[%c0_91, %c384], %314 {strides = array<i32>} : memref<1x576xf32, #tpu.memory_space<vmem>>, vector<1x64xf32>,
    %316 = vector.extract_strided_slice %313 {offsets = [1, 0], sizes = [1, 64], strides = [1, 1]} : vector<3x64xf32> to vector<1x64xf32>
    %c0_92 = arith.constant 0 : index
    %c448 = arith.constant 448 : index
    %317 = vector.load %arg26[%c0_92, %c448] : memref<1x576xf32, #tpu.memory_space<vmem>>, vector<1x64xf32>
    tpu.vector_store %arg26[%c0_92, %c448], %316 {strides = array<i32>} : memref<1x576xf32, #tpu.memory_space<vmem>>, vector<1x64xf32>,
    %318 = vector.extract_strided_slice %313 {offsets = [2, 0], sizes = [1, 64], strides = [1, 1]} : vector<3x64xf32> to vector<1x64xf32>
    %c0_93 = arith.constant 0 : index
    %c512 = arith.constant 512 : index
    %319 = vector.load %arg26[%c0_93, %c512] : memref<1x576xf32, #tpu.memory_space<vmem>>, vector<1x64xf32>
    tpu.vector_store %arg26[%c0_93, %c512], %318 {strides = array<i32>} : memref<1x576xf32, #tpu.memory_space<vmem>>, vector<1x64xf32>,
    %c0_94 = arith.constant 0 : index
    %c0_95 = arith.constant 0 : index
    %320 = vector.load %arg26[%c0_94, %c0_95] : memref<1x576xf32, #tpu.memory_space<vmem>>, vector<1x576xf32>
    %c0_96 = arith.constant 0 : index
    %c0_97 = arith.constant 0 : index
    %321 = vector.load %arg21[%c0_96, %c0_97] : memref<576x128xf32, #tpu.memory_space<vmem>>, vector<576x128xf32>
    %cst_98 = arith.constant dense<0.000000e+00> : vector<1x128xf32>
    %322 = tpu.matmul %320, %321, %cst_98 {dimension_numbers = #tpu.dot_dimension_numbers<[1], [0], [0], [1], [0, 0, 1, 1], [], []>} : vector<1x576xf32>, vector<576x128xf32>, vector<1x128xf32> -> vector<1x128xf32>
    %c0_99 = arith.constant 0 : index
    %c0_100 = arith.constant 0 : index
    %323 = vector.load %arg22[%c0_99, %c0_100] : memref<1x128xf32, #tpu.memory_space<vmem>>, vector<1x128xf32>
    %324 = arith.addf %322, %323 : vector<1x128xf32>
    %c0_101 = arith.constant 0 : index
    %c0_102 = arith.constant 0 : index
    %325 = vector.load %arg23[%c0_101, %c0_102] : memref<128x10xf32, #tpu.memory_space<vmem>>, vector<128x10xf32>
    %cst_103 = arith.constant dense<0.000000e+00> : vector<1x10xf32>
    %326 = tpu.matmul %324, %325, %cst_103 {dimension_numbers = #tpu.dot_dimension_numbers<[1], [0], [0], [1], [0, 0, 1, 1], [], []>} : vector<1x128xf32>, vector<128x10xf32>, vector<1x10xf32> -> vector<1x10xf32>
    %c0_104 = arith.constant 0 : index
    %c0_105 = arith.constant 0 : index
    %327 = vector.load %arg24[%c0_104, %c0_105] : memref<1x10xf32, #tpu.memory_space<vmem>>, vector<1x10xf32>
    %328 = arith.addf %326, %327 : vector<1x10xf32>
    %c0_106 = arith.constant 0 : index
    %c0_107 = arith.constant 0 : index
    %c0_108 = arith.constant 0 : index
    %329 = vector.load %arg25[%c0_106, %c0_107, %c0_108] : memref<1x1x10xf32, #tpu.memory_space<vmem>>, vector<1x1x10xf32>
    %330 = vector.shape_cast %329 : vector<1x1x10xf32> to vector<1x10xf32>
    %331 = vector.shape_cast %328 : vector<1x10xf32> to vector<1x1x10xf32>
    tpu.vector_store %arg25[%c0_106, %c0_107, %c0_108], %331 {strides = array<i32>} : memref<1x1x10xf32, #tpu.memory_space<vmem>>, vector<1x1x10xf32>,
    return
  }
  func.func @transform_0(%arg0: i32) -> (i32, i32, i32) {
    %c0_i32 = arith.constant 0 : i32
    %c0_i32_0 = arith.constant 0 : i32
    %c0_i32_1 = arith.constant 0 : i32
    return %arg0, %c0_i32, %c0_i32_0 : i32, i32, i32
  }
  func.func @transform_1(%arg0: i32) -> (i32, i32, i32) {
    %c0_i32 = arith.constant 0 : i32
    %c0_i32_0 = arith.constant 0 : i32
    %c0_i32_1 = arith.constant 0 : i32
    return %arg0, %c0_i32, %c0_i32_0 : i32, i32, i32
  }
  func.func @transform_2(%arg0: i32) -> (i32, i32, i32) {
    %c0_i32 = arith.constant 0 : i32
    %c0_i32_0 = arith.constant 0 : i32
    %c0_i32_1 = arith.constant 0 : i32
    return %arg0, %c0_i32, %c0_i32_0 : i32, i32, i32
  }
  func.func @transform_3(%arg0: i32) -> (i32, i32, i32) {
    %c0_i32 = arith.constant 0 : i32
    %c0_i32_0 = arith.constant 0 : i32
    %c0_i32_1 = arith.constant 0 : i32
    %c0_i32_2 = arith.constant 0 : i32
    return %c0_i32, %c0_i32_0, %c0_i32_1 : i32, i32, i32
  }
  func.func @transform_4(%arg0: i32) -> (i32, i32) {
    %c0_i32 = arith.constant 0 : i32
    %c0_i32_0 = arith.constant 0 : i32
    %c0_i32_1 = arith.constant 0 : i32
    return %c0_i32, %c0_i32_0 : i32, i32
  }
  func.func @transform_5(%arg0: i32) -> (i32, i32) {
    %c0_i32 = arith.constant 0 : i32
    %c0_i32_0 = arith.constant 0 : i32
    %c0_i32_1 = arith.constant 0 : i32
    return %c0_i32, %c0_i32_0 : i32, i32
  }
  func.func @transform_6(%arg0: i32) -> (i32, i32) {
    %c0_i32 = arith.constant 0 : i32
    %c0_i32_0 = arith.constant 0 : i32
    %c0_i32_1 = arith.constant 0 : i32
    return %c0_i32, %c0_i32_0 : i32, i32
  }
  func.func @transform_7(%arg0: i32) -> (i32, i32) {
    %c0_i32 = arith.constant 0 : i32
    %c0_i32_0 = arith.constant 0 : i32
    %c0_i32_1 = arith.constant 0 : i32
    return %c0_i32, %c0_i32_0 : i32, i32
  }
  func.func @transform_8(%arg0: i32) -> (i32, i32) {
    %c0_i32 = arith.constant 0 : i32
    %c0_i32_0 = arith.constant 0 : i32
    %c0_i32_1 = arith.constant 0 : i32
    return %c0_i32, %c0_i32_0 : i32, i32
  }
  func.func @transform_9(%arg0: i32) -> (i32, i32) {
    %c0_i32 = arith.constant 0 : i32
    %c0_i32_0 = arith.constant 0 : i32
    %c0_i32_1 = arith.constant 0 : i32
    return %c0_i32, %c0_i32_0 : i32, i32
  }
  func.func @transform_10(%arg0: i32) -> (i32, i32) {
    %c0_i32 = arith.constant 0 : i32
    %c0_i32_0 = arith.constant 0 : i32
    %c0_i32_1 = arith.constant 0 : i32
    return %c0_i32, %c0_i32_0 : i32, i32
  }
  func.func @transform_11(%arg0: i32) -> (i32, i32) {
    %c0_i32 = arith.constant 0 : i32
    %c0_i32_0 = arith.constant 0 : i32
    %c0_i32_1 = arith.constant 0 : i32
    return %c0_i32, %c0_i32_0 : i32, i32
  }
  func.func @transform_12(%arg0: i32) -> (i32, i32) {
    %c0_i32 = arith.constant 0 : i32
    %c0_i32_0 = arith.constant 0 : i32
    %c0_i32_1 = arith.constant 0 : i32
    return %c0_i32, %c0_i32_0 : i32, i32
  }
  func.func @transform_13(%arg0: i32) -> (i32, i32) {
    %c0_i32 = arith.constant 0 : i32
    %c0_i32_0 = arith.constant 0 : i32
    %c0_i32_1 = arith.constant 0 : i32
    return %c0_i32, %c0_i32_0 : i32, i32
  }
  func.func @transform_14(%arg0: i32) -> (i32, i32) {
    %c0_i32 = arith.constant 0 : i32
    %c0_i32_0 = arith.constant 0 : i32
    %c0_i32_1 = arith.constant 0 : i32
    return %c0_i32, %c0_i32_0 : i32, i32
  }
  func.func @transform_15(%arg0: i32) -> (i32, i32) {
    %c0_i32 = arith.constant 0 : i32
    %c0_i32_0 = arith.constant 0 : i32
    %c0_i32_1 = arith.constant 0 : i32
    return %c0_i32, %c0_i32_0 : i32, i32
  }
  func.func @transform_16(%arg0: i32) -> (i32, i32) {
    %c0_i32 = arith.constant 0 : i32
    %c0_i32_0 = arith.constant 0 : i32
    %c0_i32_1 = arith.constant 0 : i32
    return %c0_i32, %c0_i32_0 : i32, i32
  }
  func.func @transform_17(%arg0: i32) -> (i32, i32) {
    %c0_i32 = arith.constant 0 : i32
    %c0_i32_0 = arith.constant 0 : i32
    %c0_i32_1 = arith.constant 0 : i32
    return %c0_i32, %c0_i32_0 : i32, i32
  }
  func.func @transform_18(%arg0: i32) -> (i32, i32) {
    %c0_i32 = arith.constant 0 : i32
    %c0_i32_0 = arith.constant 0 : i32
    %c0_i32_1 = arith.constant 0 : i32
    return %c0_i32, %c0_i32_0 : i32, i32
  }
  func.func @transform_19(%arg0: i32) -> (i32, i32) {
    %c0_i32 = arith.constant 0 : i32
    %c0_i32_0 = arith.constant 0 : i32
    %c0_i32_1 = arith.constant 0 : i32
    return %c0_i32, %c0_i32_0 : i32, i32
  }
  func.func @transform_20(%arg0: i32) -> (i32, i32) {
    %c0_i32 = arith.constant 0 : i32
    %c0_i32_0 = arith.constant 0 : i32
    %c0_i32_1 = arith.constant 0 : i32
    return %c0_i32, %c0_i32_0 : i32, i32
  }
  func.func @transform_21(%arg0: i32) -> (i32, i32) {
    %c0_i32 = arith.constant 0 : i32
    %c0_i32_0 = arith.constant 0 : i32
    %c0_i32_1 = arith.constant 0 : i32
    return %c0_i32, %c0_i32_0 : i32, i32
  }
  func.func @transform_22(%arg0: i32) -> (i32, i32) {
    %c0_i32 = arith.constant 0 : i32
    %c0_i32_0 = arith.constant 0 : i32
    %c0_i32_1 = arith.constant 0 : i32
    return %c0_i32, %c0_i32_0 : i32, i32
  }
  func.func @transform_23(%arg0: i32) -> (i32, i32) {
    %c0_i32 = arith.constant 0 : i32
    %c0_i32_0 = arith.constant 0 : i32
    %c0_i32_1 = arith.constant 0 : i32
    return %c0_i32, %c0_i32_0 : i32, i32
  }
  func.func @transform_24(%arg0: i32) -> (i32, i32, i32) {
    %c0_i32 = arith.constant 0 : i32
    %c0_i32_0 = arith.constant 0 : i32
    %c0_i32_1 = arith.constant 0 : i32
    return %arg0, %c0_i32, %c0_i32_0 : i32, i32, i32
  }
}

</mosaic_0001>

<llo_original>
// kernel: all_net_forward.1
$region0: #{all_net_forward.1}
  #allocation0 [shape = 'u32[]', space=smem, size = 0x4, offset = 0x4, fixed_abs, tag = 'smem constant byte address 0x4 - core index']
  #allocation1 [shape = 'u32[72,128]{1,0:T(1,128)}', space=vmem, size = 0x9000, scoped, tag = 'internal scratch']
  #allocation2 [shape = 'f32[1,576]{1,0:T(1,128)}', space=vmem, size = 0xa00, scoped, tag = 'scratch operand']
  #allocation3 [shape = 'f32[3,128]{1,0:T(4,128)}', space=vmem, size = 0x800, scoped, tag = 'scratch operand']
  %s0 = inlined_call_operand.vmem [shape: f32[2,7,320], index: 0, kind: input, shape index: {}]
  %s1 = inlined_call_operand.vmem [shape: f32[2,72,5], index: 1, kind: input, shape index: {}]
  %s2 = inlined_call_operand.vmem [shape: f32[2,328,2], index: 2, kind: input, shape index: {}]
  %s3 = inlined_call_operand.vmem [shape: f32[3,320,128], index: 3, kind: input, shape index: {}]
  %s4 = inlined_call_operand.vmem [shape: f32[1,128], index: 4, kind: input, shape index: {}]
  %s5 = inlined_call_operand.vmem [shape: f32[128,512], index: 5, kind: input, shape index: {}]
  %s6 = inlined_call_operand.vmem [shape: f32[128,512], index: 6, kind: input, shape index: {}]
  %s7 = inlined_call_operand.vmem [shape: f32[1,512], index: 7, kind: input, shape index: {}]
  %s8 = inlined_call_operand.vmem [shape: f32[128,64], index: 8, kind: input, shape index: {}]
  %s9 = inlined_call_operand.vmem [shape: f32[1,64], index: 9, kind: input, shape index: {}]
  %s10 = inlined_call_operand.vmem [shape: f32[15,64], index: 10, kind: input, shape index: {}]
  %s11 = inlined_call_operand.vmem [shape: f32[1,64], index: 11, kind: input, shape index: {}]
  %s12 = inlined_call_operand.vmem [shape: f32[3,68], index: 12, kind: input, shape index: {}]
  %s13 = inlined_call_operand.vmem [shape: f32[3,1], index: 13, kind: input, shape index: {}]
  %s14 = inlined_call_operand.vmem [shape: f32[6,64], index: 14, kind: input, shape index: {}]
  %s15 = inlined_call_operand.vmem [shape: f32[1,64], index: 15, kind: input, shape index: {}]
  %s16 = inlined_call_operand.vmem [shape: f32[64,324], index: 16, kind: input, shape index: {}]
  %s17 = inlined_call_operand.vmem [shape: f32[64,1], index: 17, kind: input, shape index: {}]
  %s18 = inlined_call_operand.vmem [shape: f32[3,64], index: 18, kind: input, shape index: {}]
  %s19 = inlined_call_operand.vmem [shape: f32[3,1], index: 19, kind: input, shape index: {}]
  %s20 = inlined_call_operand.vmem [shape: f32[576,128], index: 20, kind: input, shape index: {}]
  %s21 = inlined_call_operand.vmem [shape: f32[1,128], index: 21, kind: input, shape index: {}]
  %s22 = inlined_call_operand.vmem [shape: f32[128,10], index: 22, kind: input, shape index: {}]
  %s23 = inlined_call_operand.vmem [shape: f32[1,10], index: 23, kind: input, shape index: {}]
  %s24 = inlined_call_operand.hbm [shape: f32[2,1,10], index: 24, kind: output, shape index: {}]
  %s25 = sld [smem:[#allocation0]]
  $region129: #{all_net_forward.1} parent=0
    _
  %s27 = ssub.s32 1, %s25
  %s28 = scalar_select 0, %s27, %s25
  $region1: #{all_net_forward.1} parent=0
    #allocation4 [shape = 'u8[1024]{0}', space=vmem, size = 0x400, scoped, tag = 'output window, operand 0']
    #allocation5 [shape = 's32[2]{0}', space=sflag, size = 0x8, scoped, tag = 'scoped memory for all_net_forward.1']
    %29 = vsyncpa [#allocation5], 0
    %s30 = scalar_lea.sflag [#allocation5], 1
    %31 = vsyncpa %s30, 0
    loop: start=0, step=1, limit=4
    $region2: #{all_net_forward.1} parent=1 // loop_pre_header
      _
    $region3: #{all_net_forward.1} parent=1 // loop_header
      %s33 = sphi 0, %s37
      %p34 = scmp.ge.s32.totalorder %s33, 4
      %s43 = sphi 0, %s45
      %s46 = sphi 0, %s43
      %s47 = sphi 0, %s46
      %s63 = sphi 0, %s47
      %s69 = sphi 0, %s71
      %s72 = sphi 0, %s69
      %s73 = sphi 0, %s72
      %s89 = sphi 0, %s73
      %s95 = sphi 0, %s97
      %s98 = sphi 0, %s95
      %s99 = sphi 0, %s98
      %s115 = sphi 0, %s99
      %s119 = sphi 0, %s119
      %s121 = sphi 0, %s119
      %s122 = sphi 0, %s121
      %s136 = sphi 0, %s122
      %s140 = sphi 0, %s140
      %s142 = sphi 0, %s140
      %s143 = sphi 0, %s142
      %s157 = sphi 0, %s143
      %s161 = sphi 0, %s161
      %s163 = sphi 0, %s161
      %s164 = sphi 0, %s163
      %s178 = sphi 0, %s164
      %s182 = sphi 0, %s182
      %s184 = sphi 0, %s182
      %s185 = sphi 0, %s184
      %s199 = sphi 0, %s185
      %s203 = sphi 0, %s203
      %s205 = sphi 0, %s203
      %s206 = sphi 0, %s205
      %s220 = sphi 0, %s206
      %s224 = sphi 0, %s224
      %s226 = sphi 0, %s224
      %s227 = sphi 0, %s226
      %s241 = sphi 0, %s227
      %s245 = sphi 0, %s245
      %s247 = sphi 0, %s245
      %s248 = sphi 0, %s247
      %s262 = sphi 0, %s248
      %s266 = sphi 0, %s266
      %s268 = sphi 0, %s266
      %s269 = sphi 0, %s268
      %s283 = sphi 0, %s269
      %s287 = sphi 0, %s287
      %s289 = sphi 0, %s287
      %s290 = sphi 0, %s289
      %s304 = sphi 0, %s290
      %s308 = sphi 0, %s308
      %s310 = sphi 0, %s308
      %s311 = sphi 0, %s310
      %s325 = sphi 0, %s311
      %s329 = sphi 0, %s329
      %s331 = sphi 0, %s329
      %s332 = sphi 0, %s331
      %s346 = sphi 0, %s332
      %s350 = sphi 0, %s350
      %s352 = sphi 0, %s350
      %s353 = sphi 0, %s352
      %s367 = sphi 0, %s353
      %s371 = sphi 0, %s371
      %s373 = sphi 0, %s371
      %s374 = sphi 0, %s373
      %s388 = sphi 0, %s374
      %s392 = sphi 0, %s392
      %s394 = sphi 0, %s392
      %s395 = sphi 0, %s394
      %s409 = sphi 0, %s395
      %s413 = sphi 0, %s413
      %s415 = sphi 0, %s413
      %s416 = sphi 0, %s415
      %s430 = sphi 0, %s416
      %s434 = sphi 0, %s434
      %s436 = sphi 0, %s434
      %s437 = sphi 0, %s436
      %s451 = sphi 0, %s437
      %s455 = sphi 0, %s455
      %s457 = sphi 0, %s455
      %s458 = sphi 0, %s457
      %s472 = sphi 0, %s458
      %s476 = sphi 0, %s476
      %s478 = sphi 0, %s476
      %s479 = sphi 0, %s478
      %s493 = sphi 0, %s479
      %s497 = sphi 0, %s497
      %s499 = sphi 0, %s497
      %s500 = sphi 0, %s499
      %s514 = sphi 0, %s500
      %s518 = sphi 0, %s518
      %s520 = sphi 0, %s518
      %s521 = sphi 0, %s520
      %s535 = sphi 0, %s521
      %s539 = sphi 0, %s539
      %s541 = sphi 0, %s539
      %s542 = sphi 0, %s541
      %s556 = sphi 0, %s542
      %s562 = sphi 0, %s564
      %s565 = sphi 0, %s562
      %s566 = sphi 0, %s565
      %s582 = sphi 0, %s566
    $region4: #{all_net_forward.1} parent=1 // loop_header_branch
      %36 = sbr.rel (%p34) target = $region8
    $region5: #{all_net_forward.1} parent=1 // loop_body
      %s38 = ssub.s32 %s33, 1
      %s39 = ssub.s32 %s33, 2
      %s40 = sadd.s32 %s33, 1
      %s41 = ssub.s32 %s33, %s40
      %p42 = scmp.eq.s32.totalorder %s41, 0
      %s44 = sadd.s32 %s43, 1
      %s45 = scalar_select %p42, %s43, %s44
      %p48 = pneg %p42
      %p49 = scmp.eq.s32.totalorder %s33, 1
      %p50 = por %p48, %p49
      %p51 = scmp.ne.s32.totalorder %s43, %s46
      %p52 = scmp.eq.s32.totalorder %s33, 0
      %p53 = por %p51, %p52
      %p54 = scmp.ne.s32.totalorder %s43, %s46
      %p55 = scmp.eq.s32.totalorder %s38, 1
      %p56 = por %p54, %p55
      %p57 = scmp.ne.s32.totalorder %s46, %s47
      %p58 = scmp.eq.s32.totalorder %s38, 0
      %p59 = por %p57, %p58
      %p60 = scmp.ne.s32.totalorder %s46, %s47
      %p61 = scmp.eq.s32.totalorder %s39, 1
      %p62 = por %p60, %p61
      %p64 = scmp.ne.s32.totalorder %s47, %s63
      %p65 = scmp.eq.s32.totalorder %s39, 0
      %p66 = por %p64, %p65
      %s67 = ssub.s32 %s33, %s40
      %p68 = scmp.eq.s32.totalorder %s67, 0
      %s70 = sadd.s32 %s69, 1
      %s71 = scalar_select %p68, %s69, %s70
      %p74 = pneg %p68
      %p75 = scmp.eq.s32.totalorder %s33, 1
      %p76 = por %p74, %p75
      %p77 = scmp.ne.s32.totalorder %s69, %s72
      %p78 = scmp.eq.s32.totalorder %s33, 0
      %p79 = por %p77, %p78
      %p80 = scmp.ne.s32.totalorder %s69, %s72
      %p81 = scmp.eq.s32.totalorder %s38, 1
      %p82 = por %p80, %p81
      %p83 = scmp.ne.s32.totalorder %s72, %s73
      %p84 = scmp.eq.s32.totalorder %s38, 0
      %p85 = por %p83, %p84
      %p86 = scmp.ne.s32.totalorder %s72, %s73
      %p87 = scmp.eq.s32.totalorder %s39, 1
      %p88 = por %p86, %p87
      %p90 = scmp.ne.s32.totalorder %s73, %s89
      %p91 = scmp.eq.s32.totalorder %s39, 0
      %p92 = por %p90, %p91
      %s93 = ssub.s32 %s33, %s40
      %p94 = scmp.eq.s32.totalorder %s93, 0
      %s96 = sadd.s32 %s95, 1
      %s97 = scalar_select %p94, %s95, %s96
      %p100 = pneg %p94
      %p101 = scmp.eq.s32.totalorder %s33, 1
      %p102 = por %p100, %p101
      %p103 = scmp.ne.s32.totalorder %s95, %s98
      %p104 = scmp.eq.s32.totalorder %s33, 0
      %p105 = por %p103, %p104
      %p106 = scmp.ne.s32.totalorder %s95, %s98
      %p107 = scmp.eq.s32.totalorder %s38, 1
      %p108 = por %p106, %p107
      %p109 = scmp.ne.s32.totalorder %s98, %s99
      %p110 = scmp.eq.s32.totalorder %s38, 0
      %p111 = por %p109, %p110
      %p112 = scmp.ne.s32.totalorder %s98, %s99
      %p113 = scmp.eq.s32.totalorder %s39, 1
      %p114 = por %p112, %p113
      %p116 = scmp.ne.s32.totalorder %s99, %s115
      %p117 = scmp.eq.s32.totalorder %s39, 0
      %p118 = por %p116, %p117
      %s120 = sadd.s32 %s119, 1
      %p123 = scmp.eq.s32.totalorder %s33, 1
      %p124 = scmp.ne.s32.totalorder %s119, %s121
      %p125 = scmp.eq.s32.totalorder %s33, 0
      %p126 = por %p124, %p125
      %p127 = scmp.ne.s32.totalorder %s119, %s121
      %p128 = scmp.eq.s32.totalorder %s38, 1
      %p129 = por %p127, %p128
      %p130 = scmp.ne.s32.totalorder %s121, %s122
      %p131 = scmp.eq.s32.totalorder %s38, 0
      %p132 = por %p130, %p131
      %p133 = scmp.ne.s32.totalorder %s121, %s122
      %p134 = scmp.eq.s32.totalorder %s39, 1
      %p135 = por %p133, %p134
      %p137 = scmp.ne.s32.totalorder %s122, %s136
      %p138 = scmp.eq.s32.totalorder %s39, 0
      %p139 = por %p137, %p138
      %s141 = sadd.s32 %s140, 1
      %p144 = scmp.eq.s32.totalorder %s33, 1
      %p145 = scmp.ne.s32.totalorder %s140, %s142
      %p146 = scmp.eq.s32.totalorder %s33, 0
      %p147 = por %p145, %p146
      %p148 = scmp.ne.s32.totalorder %s140, %s142
      %p149 = scmp.eq.s32.totalorder %s38, 1
      %p150 = por %p148, %p149
      %p151 = scmp.ne.s32.totalorder %s142, %s143
      %p152 = scmp.eq.s32.totalorder %s38, 0
      %p153 = por %p151, %p152
      %p154 = scmp.ne.s32.totalorder %s142, %s143
      %p155 = scmp.eq.s32.totalorder %s39, 1
      %p156 = por %p154, %p155
      %p158 = scmp.ne.s32.totalorder %s143, %s157
      %p159 = scmp.eq.s32.totalorder %s39, 0
      %p160 = por %p158, %p159
      %s162 = sadd.s32 %s161, 1
      %p165 = scmp.eq.s32.totalorder %s33, 1
      %p166 = scmp.ne.s32.totalorder %s161, %s163
      %p167 = scmp.eq.s32.totalorder %s33, 0
      %p168 = por %p166, %p167
      %p169 = scmp.ne.s32.totalorder %s161, %s163
      %p170 = scmp.eq.s32.totalorder %s38, 1
      %p171 = por %p169, %p170
      %p172 = scmp.ne.s32.totalorder %s163, %s164
      %p173 = scmp.eq.s32.totalorder %s38, 0
      %p174 = por %p172, %p173
      %p175 = scmp.ne.s32.totalorder %s163, %s164
      %p176 = scmp.eq.s32.totalorder %s39, 1
      %p177 = por %p175, %p176
      %p179 = scmp.ne.s32.totalorder %s164, %s178
      %p180 = scmp.eq.s32.totalorder %s39, 0
      %p181 = por %p179, %p180
      %s183 = sadd.s32 %s182, 1
      %p186 = scmp.eq.s32.totalorder %s33, 1
      %p187 = scmp.ne.s32.totalorder %s182, %s184
      %p188 = scmp.eq.s32.totalorder %s33, 0
      %p189 = por %p187, %p188
      %p190 = scmp.ne.s32.totalorder %s182, %s184
      %p191 = scmp.eq.s32.totalorder %s38, 1
      %p192 = por %p190, %p191
      %p193 = scmp.ne.s32.totalorder %s184, %s185
      %p194 = scmp.eq.s32.totalorder %s38, 0
      %p195 = por %p193, %p194
      %p196 = scmp.ne.s32.totalorder %s184, %s185
      %p197 = scmp.eq.s32.totalorder %s39, 1
      %p198 = por %p196, %p197
      %p200 = scmp.ne.s32.totalorder %s185, %s199
      %p201 = scmp.eq.s32.totalorder %s39, 0
      %p202 = por %p200, %p201
      %s204 = sadd.s32 %s203, 1
      %p207 = scmp.eq.s32.totalorder %s33, 1
      %p208 = scmp.ne.s32.totalorder %s203, %s205
      %p209 = scmp.eq.s32.totalorder %s33, 0
      %p210 = por %p208, %p209
      %p211 = scmp.ne.s32.totalorder %s203, %s205
      %p212 = scmp.eq.s32.totalorder %s38, 1
      %p213 = por %p211, %p212
      %p214 = scmp.ne.s32.totalorder %s205, %s206
      %p215 = scmp.eq.s32.totalorder %s38, 0
      %p216 = por %p214, %p215
      %p217 = scmp.ne.s32.totalorder %s205, %s206
      %p218 = scmp.eq.s32.totalorder %s39, 1
      %p219 = por %p217, %p218
      %p221 = scmp.ne.s32.totalorder %s206, %s220
      %p222 = scmp.eq.s32.totalorder %s39, 0
      %p223 = por %p221, %p222
      %s225 = sadd.s32 %s224, 1
      %p228 = scmp.eq.s32.totalorder %s33, 1
      %p229 = scmp.ne.s32.totalorder %s224, %s226
      %p230 = scmp.eq.s32.totalorder %s33, 0
      %p231 = por %p229, %p230
      %p232 = scmp.ne.s32.totalorder %s224, %s226
      %p233 = scmp.eq.s32.totalorder %s38, 1
      %p234 = por %p232, %p233
      %p235 = scmp.ne.s32.totalorder %s226, %s227
      %p236 = scmp.eq.s32.totalorder %s38, 0
      %p237 = por %p235, %p236
      %p238 = scmp.ne.s32.totalorder %s226, %s227
      %p239 = scmp.eq.s32.totalorder %s39, 1
      %p240 = por %p238, %p239
      %p242 = scmp.ne.s32.totalorder %s227, %s241
      %p243 = scmp.eq.s32.totalorder %s39, 0
      %p244 = por %p242, %p243
      %s246 = sadd.s32 %s245, 1
      %p249 = scmp.eq.s32.totalorder %s33, 1
      %p250 = scmp.ne.s32.totalorder %s245, %s247
      %p251 = scmp.eq.s32.totalorder %s33, 0
      %p252 = por %p250, %p251
      %p253 = scmp.ne.s32.totalorder %s245, %s247
      %p254 = scmp.eq.s32.totalorder %s38, 1
      %p255 = por %p253, %p254
      %p256 = scmp.ne.s32.totalorder %s247, %s248
      %p257 = scmp.eq.s32.totalorder %s38, 0
      %p258 = por %p256, %p257
      %p259 = scmp.ne.s32.totalorder %s247, %s248
      %p260 = scmp.eq.s32.totalorder %s39, 1
      %p261 = por %p259, %p260
      %p263 = scmp.ne.s32.totalorder %s248, %s262
      %p264 = scmp.eq.s32.totalorder %s39, 0
      %p265 = por %p263, %p264
      %s267 = sadd.s32 %s266, 1
      %p270 = scmp.eq.s32.totalorder %s33, 1
      %p271 = scmp.ne.s32.totalorder %s266, %s268
      %p272 = scmp.eq.s32.totalorder %s33, 0
      %p273 = por %p271, %p272
      %p274 = scmp.ne.s32.totalorder %s266, %s268
      %p275 = scmp.eq.s32.totalorder %s38, 1
      %p276 = por %p274, %p275
      %p277 = scmp.ne.s32.totalorder %s268, %s269
      %p278 = scmp.eq.s32.totalorder %s38, 0
      %p279 = por %p277, %p278
      %p280 = scmp.ne.s32.totalorder %s268, %s269
      %p281 = scmp.eq.s32.totalorder %s39, 1
      %p282 = por %p280, %p281
      %p284 = scmp.ne.s32.totalorder %s269, %s283
      %p285 = scmp.eq.s32.totalorder %s39, 0
      %p286 = por %p284, %p285
      %s288 = sadd.s32 %s287, 1
      %p291 = scmp.eq.s32.totalorder %s33, 1
      %p292 = scmp.ne.s32.totalorder %s287, %s289
      %p293 = scmp.eq.s32.totalorder %s33, 0
      %p294 = por %p292, %p293
      %p295 = scmp.ne.s32.totalorder %s287, %s289
      %p296 = scmp.eq.s32.totalorder %s38, 1
      %p297 = por %p295, %p296
      %p298 = scmp.ne.s32.totalorder %s289, %s290
      %p299 = scmp.eq.s32.totalorder %s38, 0
      %p300 = por %p298, %p299
      %p301 = scmp.ne.s32.totalorder %s289, %s290
      %p302 = scmp.eq.s32.totalorder %s39, 1
      %p303 = por %p301, %p302
      %p305 = scmp.ne.s32.totalorder %s290, %s304
      %p306 = scmp.eq.s32.totalorder %s39, 0
      %p307 = por %p305, %p306
      %s309 = sadd.s32 %s308, 1
      %p312 = scmp.eq.s32.totalorder %s33, 1
      %p313 = scmp.ne.s32.totalorder %s308, %s310
      %p314 = scmp.eq.s32.totalorder %s33, 0
      %p315 = por %p313, %p314
      %p316 = scmp.ne.s32.totalorder %s308, %s310
      %p317 = scmp.eq.s32.totalorder %s38, 1
      %p318 = por %p316, %p317
      %p319 = scmp.ne.s32.totalorder %s310, %s311
      %p320 = scmp.eq.s32.totalorder %s38, 0
      %p321 = por %p319, %p320
      %p322 = scmp.ne.s32.totalorder %s310, %s311
      %p323 = scmp.eq.s32.totalorder %s39, 1
      %p324 = por %p322, %p323
      %p326 = scmp.ne.s32.totalorder %s311, %s325
      %p327 = scmp.eq.s32.totalorder %s39, 0
      %p328 = por %p326, %p327
      %s330 = sadd.s32 %s329, 1
      %p333 = scmp.eq.s32.totalorder %s33, 1
      %p334 = scmp.ne.s32.totalorder %s329, %s331
      %p335 = scmp.eq.s32.totalorder %s33, 0
      %p336 = por %p334, %p335
      %p337 = scmp.ne.s32.totalorder %s329, %s331
      %p338 = scmp.eq.s32.totalorder %s38, 1
      %p339 = por %p337, %p338
      %p340 = scmp.ne.s32.totalorder %s331, %s332
      %p341 = scmp.eq.s32.totalorder %s38, 0
      %p342 = por %p340, %p341
      %p343 = scmp.ne.s32.totalorder %s331, %s332
      %p344 = scmp.eq.s32.totalorder %s39, 1
      %p345 = por %p343, %p344
      %p347 = scmp.ne.s32.totalorder %s332, %s346
      %p348 = scmp.eq.s32.totalorder %s39, 0
      %p349 = por %p347, %p348
      %s351 = sadd.s32 %s350, 1
      %p354 = scmp.eq.s32.totalorder %s33, 1
      %p355 = scmp.ne.s32.totalorder %s350, %s352
      %p356 = scmp.eq.s32.totalorder %s33, 0
      %p357 = por %p355, %p356
      %p358 = scmp.ne.s32.totalorder %s350, %s352
      %p359 = scmp.eq.s32.totalorder %s38, 1
      %p360 = por %p358, %p359
      %p361 = scmp.ne.s32.totalorder %s352, %s353
      %p362 = scmp.eq.s32.totalorder %s38, 0
      %p363 = por %p361, %p362
      %p364 = scmp.ne.s32.totalorder %s352, %s353
      %p365 = scmp.eq.s32.totalorder %s39, 1
      %p366 = por %p364, %p365
      %p368 = scmp.ne.s32.totalorder %s353, %s367
      %p369 = scmp.eq.s32.totalorder %s39, 0
      %p370 = por %p368, %p369
      %s372 = sadd.s32 %s371, 1
      %p375 = scmp.eq.s32.totalorder %s33, 1
      %p376 = scmp.ne.s32.totalorder %s371, %s373
      %p377 = scmp.eq.s32.totalorder %s33, 0
      %p378 = por %p376, %p377
      %p379 = scmp.ne.s32.totalorder %s371, %s373
      %p380 = scmp.eq.s32.totalorder %s38, 1
      %p381 = por %p379, %p380
      %p382 = scmp.ne.s32.totalorder %s373, %s374
      %p383 = scmp.eq.s32.totalorder %s38, 0
      %p384 = por %p382, %p383
      %p385 = scmp.ne.s32.totalorder %s373, %s374
      %p386 = scmp.eq.s32.totalorder %s39, 1
      %p387 = por %p385, %p386
      %p389 = scmp.ne.s32.totalorder %s374, %s388
      %p390 = scmp.eq.s32.totalorder %s39, 0
      %p391 = por %p389, %p390
      %s393 = sadd.s32 %s392, 1
      %p396 = scmp.eq.s32.totalorder %s33, 1
      %p397 = scmp.ne.s32.totalorder %s392, %s394
      %p398 = scmp.eq.s32.totalorder %s33, 0
      %p399 = por %p397, %p398
      %p400 = scmp.ne.s32.totalorder %s392, %s394
      %p401 = scmp.eq.s32.totalorder %s38, 1
      %p402 = por %p400, %p401
      %p403 = scmp.ne.s32.totalorder %s394, %s395
      %p404 = scmp.eq.s32.totalorder %s38, 0
      %p405 = por %p403, %p404
      %p406 = scmp.ne.s32.totalorder %s394, %s395
      %p407 = scmp.eq.s32.totalorder %s39, 1
      %p408 = por %p406, %p407
      %p410 = scmp.ne.s32.totalorder %s395, %s409
      %p411 = scmp.eq.s32.totalorder %s39, 0
      %p412 = por %p410, %p411
      %s414 = sadd.s32 %s413, 1
      %p417 = scmp.eq.s32.totalorder %s33, 1
      %p418 = scmp.ne.s32.totalorder %s413, %s415
      %p419 = scmp.eq.s32.totalorder %s33, 0
      %p420 = por %p418, %p419
      %p421 = scmp.ne.s32.totalorder %s413, %s415
      %p422 = scmp.eq.s32.totalorder %s38, 1
      %p423 = por %p421, %p422
      %p424 = scmp.ne.s32.totalorder %s415, %s416
      %p425 = scmp.eq.s32.totalorder %s38, 0
      %p426 = por %p424, %p425
      %p427 = scmp.ne.s32.totalorder %s415, %s416
      %p428 = scmp.eq.s32.totalorder %s39, 1
      %p429 = por %p427, %p428
      %p431 = scmp.ne.s32.totalorder %s416, %s430
      %p432 = scmp.eq.s32.totalorder %s39, 0
      %p433 = por %p431, %p432
      %s435 = sadd.s32 %s434, 1
      %p438 = scmp.eq.s32.totalorder %s33, 1
      %p439 = scmp.ne.s32.totalorder %s434, %s436
      %p440 = scmp.eq.s32.totalorder %s33, 0
      %p441 = por %p439, %p440
      %p442 = scmp.ne.s32.totalorder %s434, %s436
      %p443 = scmp.eq.s32.totalorder %s38, 1
      %p444 = por %p442, %p443
      %p445 = scmp.ne.s32.totalorder %s436, %s437
      %p446 = scmp.eq.s32.totalorder %s38, 0
      %p447 = por %p445, %p446
      %p448 = scmp.ne.s32.totalorder %s436, %s437
      %p449 = scmp.eq.s32.totalorder %s39, 1
      %p450 = por %p448, %p449
      %p452 = scmp.ne.s32.totalorder %s437, %s451
      %p453 = scmp.eq.s32.totalorder %s39, 0
      %p454 = por %p452, %p453
      %s456 = sadd.s32 %s455, 1
      %p459 = scmp.eq.s32.totalorder %s33, 1
      %p460 = scmp.ne.s32.totalorder %s455, %s457
      %p461 = scmp.eq.s32.totalorder %s33, 0
      %p462 = por %p460, %p461
      %p463 = scmp.ne.s32.totalorder %s455, %s457
      %p464 = scmp.eq.s32.totalorder %s38, 1
      %p465 = por %p463, %p464
      %p466 = scmp.ne.s32.totalorder %s457, %s458
      %p467 = scmp.eq.s32.totalorder %s38, 0
      %p468 = por %p466, %p467
      %p469 = scmp.ne.s32.totalorder %s457, %s458
      %p470 = scmp.eq.s32.totalorder %s39, 1
      %p471 = por %p469, %p470
      %p473 = scmp.ne.s32.totalorder %s458, %s472
      %p474 = scmp.eq.s32.totalorder %s39, 0
      %p475 = por %p473, %p474
      %s477 = sadd.s32 %s476, 1
      %p480 = scmp.eq.s32.totalorder %s33, 1
      %p481 = scmp.ne.s32.totalorder %s476, %s478
      %p482 = scmp.eq.s32.totalorder %s33, 0
      %p483 = por %p481, %p482
      %p484 = scmp.ne.s32.totalorder %s476, %s478
      %p485 = scmp.eq.s32.totalorder %s38, 1
      %p486 = por %p484, %p485
      %p487 = scmp.ne.s32.totalorder %s478, %s479
      %p488 = scmp.eq.s32.totalorder %s38, 0
      %p489 = por %p487, %p488
      %p490 = scmp.ne.s32.totalorder %s478, %s479
      %p491 = scmp.eq.s32.totalorder %s39, 1
      %p492 = por %p490, %p491
      %p494 = scmp.ne.s32.totalorder %s479, %s493
      %p495 = scmp.eq.s32.totalorder %s39, 0
      %p496 = por %p494, %p495
      %s498 = sadd.s32 %s497, 1
      %p501 = scmp.eq.s32.totalorder %s33, 1
      %p502 = scmp.ne.s32.totalorder %s497, %s499
      %p503 = scmp.eq.s32.totalorder %s33, 0
      %p504 = por %p502, %p503
      %p505 = scmp.ne.s32.totalorder %s497, %s499
      %p506 = scmp.eq.s32.totalorder %s38, 1
      %p507 = por %p505, %p506
      %p508 = scmp.ne.s32.totalorder %s499, %s500
      %p509 = scmp.eq.s32.totalorder %s38, 0
      %p510 = por %p508, %p509
      %p511 = scmp.ne.s32.totalorder %s499, %s500
      %p512 = scmp.eq.s32.totalorder %s39, 1
      %p513 = por %p511, %p512
      %p515 = scmp.ne.s32.totalorder %s500, %s514
      %p516 = scmp.eq.s32.totalorder %s39, 0
      %p517 = por %p515, %p516
      %s519 = sadd.s32 %s518, 1
      %p522 = scmp.eq.s32.totalorder %s33, 1
      %p523 = scmp.ne.s32.totalorder %s518, %s520
      %p524 = scmp.eq.s32.totalorder %s33, 0
      %p525 = por %p523, %p524
      %p526 = scmp.ne.s32.totalorder %s518, %s520
      %p527 = scmp.eq.s32.totalorder %s38, 1
      %p528 = por %p526, %p527
      %p529 = scmp.ne.s32.totalorder %s520, %s521
      %p530 = scmp.eq.s32.totalorder %s38, 0
      %p531 = por %p529, %p530
      %p532 = scmp.ne.s32.totalorder %s520, %s521
      %p533 = scmp.eq.s32.totalorder %s39, 1
      %p534 = por %p532, %p533
      %p536 = scmp.ne.s32.totalorder %s521, %s535
      %p537 = scmp.eq.s32.totalorder %s39, 0
      %p538 = por %p536, %p537
      %s540 = sadd.s32 %s539, 1
      %p543 = scmp.eq.s32.totalorder %s33, 1
      %p544 = scmp.ne.s32.totalorder %s539, %s541
      %p545 = scmp.eq.s32.totalorder %s33, 0
      %p546 = por %p544, %p545
      %p547 = scmp.ne.s32.totalorder %s539, %s541
      %p548 = scmp.eq.s32.totalorder %s38, 1
      %p549 = por %p547, %p548
      %p550 = scmp.ne.s32.totalorder %s541, %s542
      %p551 = scmp.eq.s32.totalorder %s38, 0
      %p552 = por %p550, %p551
      %p553 = scmp.ne.s32.totalorder %s541, %s542
      %p554 = scmp.eq.s32.totalorder %s39, 1
      %p555 = por %p553, %p554
      %p557 = scmp.ne.s32.totalorder %s542, %s556
      %p558 = scmp.eq.s32.totalorder %s39, 0
      %p559 = por %p557, %p558
      %s560 = ssub.s32 %s33, %s40
      %p561 = scmp.eq.s32.totalorder %s560, 0
      %s563 = sadd.s32 %s562, 1
      %s564 = scalar_select %p561, %s562, %s563
      %p567 = pneg %p561
      %p568 = scmp.eq.s32.totalorder %s33, 1
      %p569 = por %p567, %p568
      %p570 = scmp.ne.s32.totalorder %s562, %s565
      %p571 = scmp.eq.s32.totalorder %s33, 0
      %p572 = por %p570, %p571
      %p573 = scmp.ne.s32.totalorder %s562, %s565
      %p574 = scmp.eq.s32.totalorder %s38, 1
      %p575 = por %p573, %p574
      %p576 = scmp.ne.s32.totalorder %s565, %s566
      %p577 = scmp.eq.s32.totalorder %s38, 0
      %p578 = por %p576, %p577
      %p579 = scmp.ne.s32.totalorder %s565, %s566
      %p580 = scmp.eq.s32.totalorder %s39, 1
      %p581 = por %p579, %p580
      %p583 = scmp.ne.s32.totalorder %s566, %s582
      %p584 = scmp.eq.s32.totalorder %s39, 0
      %p585 = por %p583, %p584
      %p586 = scmp.le.s32.totalorder 1, %s33
      %p587 = scmp.lt.s32.totalorder %s33, 3
      %p588 = pnand %p586, %p587
      %p589 = pneg %p588
      // Predicated region
      $region9: #{all_net_forward.1} parent=5 // pred_check
        _
      $region10: #{all_net_forward.1} parent=5 // pred_check_branch
        %591 = sbr.rel (%p588) target = $region12
      $region11: #{all_net_forward.1} parent=5 // pred_region
        %s592 = ssub.s32 %s33, 1
        // Predicated region
        $region13: #{all_net_forward.1} parent=11 // pred_check
          %p593 = pneg %p132
        $region14: #{all_net_forward.1} parent=11 // pred_check_branch
          %595 = sbr.rel (%p593) target = $region16
        $region15: #{all_net_forward.1} parent=11 // pred_region
          _
        $region16: #{all_net_forward.1} parent=11 // pred_fallthru
          _
        // Predicated region
        $region17: #{all_net_forward.1} parent=11 // pred_check
          %p596 = pneg %p153
        $region18: #{all_net_forward.1} parent=11 // pred_check_branch
          %598 = sbr.rel (%p596) target = $region20
        $region19: #{all_net_forward.1} parent=11 // pred_region
          _
        $region20: #{all_net_forward.1} parent=11 // pred_fallthru
          _
        // Predicated region
        $region21: #{all_net_forward.1} parent=11 // pred_check
          %p599 = pneg %p174
        $region22: #{all_net_forward.1} parent=11 // pred_check_branch
          %601 = sbr.rel (%p599) target = $region24
        $region23: #{all_net_forward.1} parent=11 // pred_region
          _
        $region24: #{all_net_forward.1} parent=11 // pred_fallthru
          _
        // Predicated region
        $region25: #{all_net_forward.1} parent=11 // pred_check
          %p602 = pneg %p195
        $region26: #{all_net_forward.1} parent=11 // pred_check_branch
          %604 = sbr.rel (%p602) target = $region28
        $region27: #{all_net_forward.1} parent=11 // pred_region
          _
        $region28: #{all_net_forward.1} parent=11 // pred_fallthru
          _
        // Predicated region
        $region29: #{all_net_forward.1} parent=11 // pred_check
          %p605 = pneg %p216
        $region30: #{all_net_forward.1} parent=11 // pred_check_branch
          %607 = sbr.rel (%p605) target = $region32
        $region31: #{all_net_forward.1} parent=11 // pred_region
          _
        $region32: #{all_net_forward.1} parent=11 // pred_fallthru
          _
        // Predicated region
        $region33: #{all_net_forward.1} parent=11 // pred_check
          %p608 = pneg %p237
        $region34: #{all_net_forward.1} parent=11 // pred_check_branch
          %610 = sbr.rel (%p608) target = $region36
        $region35: #{all_net_forward.1} parent=11 // pred_region
          _
        $region36: #{all_net_forward.1} parent=11 // pred_fallthru
          _
        // Predicated region
        $region37: #{all_net_forward.1} parent=11 // pred_check
          %p611 = pneg %p258
        $region38: #{all_net_forward.1} parent=11 // pred_check_branch
          %613 = sbr.rel (%p611) target = $region40
        $region39: #{all_net_forward.1} parent=11 // pred_region
          _
        $region40: #{all_net_forward.1} parent=11 // pred_fallthru
          _
        // Predicated region
        $region41: #{all_net_forward.1} parent=11 // pred_check
          %p614 = pneg %p279
        $region42: #{all_net_forward.1} parent=11 // pred_check_branch
          %616 = sbr.rel (%p614) target = $region44
        $region43: #{all_net_forward.1} parent=11 // pred_region
          _
        $region44: #{all_net_forward.1} parent=11 // pred_fallthru
          _
        // Predicated region
        $region45: #{all_net_forward.1} parent=11 // pred_check
          %p617 = pneg %p300
        $region46: #{all_net_forward.1} parent=11 // pred_check_branch
          %619 = sbr.rel (%p617) target = $region48
        $region47: #{all_net_forward.1} parent=11 // pred_region
          _
        $region48: #{all_net_forward.1} parent=11 // pred_fallthru
          _
        // Predicated region
        $region49: #{all_net_forward.1} parent=11 // pred_check
          %p620 = pneg %p321
        $region50: #{all_net_forward.1} parent=11 // pred_check_branch
          %622 = sbr.rel (%p620) target = $region52
        $region51: #{all_net_forward.1} parent=11 // pred_region
          _
        $region52: #{all_net_forward.1} parent=11 // pred_fallthru
          _
        // Predicated region
        $region53: #{all_net_forward.1} parent=11 // pred_check
          %p623 = pneg %p342
        $region54: #{all_net_forward.1} parent=11 // pred_check_branch
          %625 = sbr.rel (%p623) target = $region56
        $region55: #{all_net_forward.1} parent=11 // pred_region
          _
        $region56: #{all_net_forward.1} parent=11 // pred_fallthru
          _
        // Predicated region
        $region57: #{all_net_forward.1} parent=11 // pred_check
          %p626 = pneg %p363
        $region58: #{all_net_forward.1} parent=11 // pred_check_branch
          %628 = sbr.rel (%p626) target = $region60
        $region59: #{all_net_forward.1} parent=11 // pred_region
          _
        $region60: #{all_net_forward.1} parent=11 // pred_fallthru
          _
        // Predicated region
        $region61: #{all_net_forward.1} parent=11 // pred_check
          %p629 = pneg %p384
        $region62: #{all_net_forward.1} parent=11 // pred_check_branch
          %631 = sbr.rel (%p629) target = $region64
        $region63: #{all_net_forward.1} parent=11 // pred_region
          _
        $region64: #{all_net_forward.1} parent=11 // pred_fallthru
          _
        // Predicated region
        $region65: #{all_net_forward.1} parent=11 // pred_check
          %p632 = pneg %p405
        $region66: #{all_net_forward.1} parent=11 // pred_check_branch
          %634 = sbr.rel (%p632) target = $region68
        $region67: #{all_net_forward.1} parent=11 // pred_region
          _
        $region68: #{all_net_forward.1} parent=11 // pred_fallthru
          _
        // Predicated region
        $region69: #{all_net_forward.1} parent=11 // pred_check
          %p635 = pneg %p426
        $region70: #{all_net_forward.1} parent=11 // pred_check_branch
          %637 = sbr.rel (%p635) target = $region72
        $region71: #{all_net_forward.1} parent=11 // pred_region
          _
        $region72: #{all_net_forward.1} parent=11 // pred_fallthru
          _
        // Predicated region
        $region73: #{all_net_forward.1} parent=11 // pred_check
          %p638 = pneg %p447
        $region74: #{all_net_forward.1} parent=11 // pred_check_branch
          %640 = sbr.rel (%p638) target = $region76
        $region75: #{all_net_forward.1} parent=11 // pred_region
          _
        $region76: #{all_net_forward.1} parent=11 // pred_fallthru
          _
        // Predicated region
        $region77: #{all_net_forward.1} parent=11 // pred_check
          %p641 = pneg %p468
        $region78: #{all_net_forward.1} parent=11 // pred_check_branch
          %643 = sbr.rel (%p641) target = $region80
        $region79: #{all_net_forward.1} parent=11 // pred_region
          _
        $region80: #{all_net_forward.1} parent=11 // pred_fallthru
          _
        // Predicated region
        $region81: #{all_net_forward.1} parent=11 // pred_check
          %p644 = pneg %p489
        $region82: #{all_net_forward.1} parent=11 // pred_check_branch
          %646 = sbr.rel (%p644) target = $region84
        $region83: #{all_net_forward.1} parent=11 // pred_region
          _
        $region84: #{all_net_forward.1} parent=11 // pred_fallthru
          _
        // Predicated region
        $region85: #{all_net_forward.1} parent=11 // pred_check
          %p647 = pneg %p510
        $region86: #{all_net_forward.1} parent=11 // pred_check_branch
          %649 = sbr.rel (%p647) target = $region88
        $region87: #{all_net_forward.1} parent=11 // pred_region
          _
        $region88: #{all_net_forward.1} parent=11 // pred_fallthru
          _
        // Predicated region
        $region89: #{all_net_forward.1} parent=11 // pred_check
          %p650 = pneg %p531
        $region90: #{all_net_forward.1} parent=11 // pred_check_branch
          %652 = sbr.rel (%p650) target = $region92
        $region91: #{all_net_forward.1} parent=11 // pred_region
          _
        $region92: #{all_net_forward.1} parent=11 // pred_fallthru
          _
        // Predicated region
        $region93: #{all_net_forward.1} parent=11 // pred_check
          %p653 = pneg %p552
        $region94: #{all_net_forward.1} parent=11 // pred_check_branch
          %655 = sbr.rel (%p653) target = $region96
        $region95: #{all_net_forward.1} parent=11 // pred_region
          _
        $region96: #{all_net_forward.1} parent=11 // pred_fallthru
          _
      $region12: #{all_net_forward.1} parent=5 // pred_fallthru
        _
      %p656 = scmp.lt.s32.totalorder %s33, 2
      // Predicated region
      $region97: #{all_net_forward.1} parent=5 // pred_check
        %p657 = pneg %p656
      $region98: #{all_net_forward.1} parent=5 // pred_check_branch
        %659 = sbr.rel (%p657) target = $region100
      $region99: #{all_net_forward.1} parent=5 // pred_region
        // Predicated region
        $region101: #{all_net_forward.1} parent=99 // pred_check
          %p660 = pneg %p53
        $region102: #{all_net_forward.1} parent=99 // pred_check_branch
          %662 = sbr.rel (%p660) target = $region104
        $region103: #{all_net_forward.1} parent=99 // pred_region
          %p663 = scmp.lt.s32.totalorder %s33, 1
          %s664 = scalar_select %p663, %s33, 1
          %s665 = smul.addr %s664, 3
          %s666 = smul.addr %s665, 8
          %s667 = scalar_lea.vmem %s0, %s666
        $region104: #{all_net_forward.1} parent=99 // pred_fallthru
          _
        // Predicated region
        $region105: #{all_net_forward.1} parent=99 // pred_check
          %p668 = pneg %p79
        $region106: #{all_net_forward.1} parent=99 // pred_check_branch
          %670 = sbr.rel (%p668) target = $region108
        $region107: #{all_net_forward.1} parent=99 // pred_region
          %p671 = scmp.lt.s32.totalorder %s33, 1
          %s672 = scalar_select %p671, %s33, 1
          %s673 = smul.addr %s672, 9
          %s674 = smul.addr %s673, 8
          %s675 = scalar_lea.vmem %s1, %s674
        $region108: #{all_net_forward.1} parent=99 // pred_fallthru
          _
        // Predicated region
        $region109: #{all_net_forward.1} parent=99 // pred_check
          %p676 = pneg %p105
        $region110: #{all_net_forward.1} parent=99 // pred_check_branch
          %678 = sbr.rel (%p676) target = $region112
        $region111: #{all_net_forward.1} parent=99 // pred_region
          %p679 = scmp.lt.s32.totalorder %s33, 1
          %s680 = scalar_select %p679, %s33, 1
          %s681 = smul.addr %s680, 41
          %s682 = smul.addr %s681, 8
          %s683 = scalar_lea.vmem %s2, %s682
        $region112: #{all_net_forward.1} parent=99 // pred_fallthru
          _
      $region100: #{all_net_forward.1} parent=5 // pred_fallthru
        _
      %p684 = scmp.le.s32.totalorder 1, %s33
      %p685 = scmp.lt.s32.totalorder %s33, 3
      %p686 = pnand %p684, %p685
      %p687 = pneg %p686
      // Predicated region
      $region113: #{all_net_forward.1} parent=5 // pred_check
        _
      $region114: #{all_net_forward.1} parent=5 // pred_check_branch
        %689 = sbr.rel (%p686) target = $region116
      $region115: #{all_net_forward.1} parent=5 // pred_region
        %s690 = ssub.s32 %s33, 1
        %p691 = scmp.lt.s32.totalorder %s38, 1
        %s692 = scalar_select %p691, %s38, 1
        %s693 = smul.addr %s692, 3
        %s694 = smul.addr %s693, 8
        %s695 = scalar_lea.vmem %s0, %s694
        %p696 = pneg %p59
        %p697 = pneg %p56
        %p698 = scmp.lt.s32.totalorder %s38, 1
        %s699 = scalar_select %p698, %s38, 1
        %s700 = smul.addr %s699, 9
        %s701 = smul.addr %s700, 8
        %s702 = scalar_lea.vmem %s1, %s701
        %p703 = pneg %p85
        %p704 = pneg %p82
        %p705 = scmp.lt.s32.totalorder %s38, 1
        %s706 = scalar_select %p705, %s38, 1
        %s707 = smul.addr %s706, 41
        %s708 = smul.addr %s707, 8
        %s709 = scalar_lea.vmem %s2, %s708
        %p710 = pneg %p111
        %p711 = pneg %p108
        %p712 = pneg %p132
        %p713 = pneg %p129
        %p714 = pneg %p153
        %p715 = pneg %p150
        %p716 = pneg %p174
        %p717 = pneg %p171
        %p718 = pneg %p195
        %p719 = pneg %p192
        %p720 = pneg %p216
        %p721 = pneg %p213
        %p722 = pneg %p237
        %p723 = pneg %p234
        %p724 = pneg %p258
        %p725 = pneg %p255
        %p726 = pneg %p279
        %p727 = pneg %p276
        %p728 = pneg %p300
        %p729 = pneg %p297
        %p730 = pneg %p321
        %p731 = pneg %p318
        %p732 = pneg %p342
        %p733 = pneg %p339
        %p734 = pneg %p363
        %p735 = pneg %p360
        %p736 = pneg %p384
        %p737 = pneg %p381
        %p738 = pneg %p405
        %p739 = pneg %p402
        %p740 = pneg %p426
        %p741 = pneg %p423
        %p742 = pneg %p447
        %p743 = pneg %p444
        %p744 = pneg %p468
        %p745 = pneg %p465
        %p746 = pneg %p489
        %p747 = pneg %p486
        %p748 = pneg %p510
        %p749 = pneg %p507
        %p750 = pneg %p531
        %p751 = pneg %p528
        %p752 = pneg %p552
        %p753 = pneg %p549
        %p754 = pneg %p578
        %p755 = pneg %p575
        %s756 = sand.u32 %s565, 1
        %s757 = scalar_lea.sflag [#allocation5], %s756
        %s758 = sand.u32 %s565, 1
        %s759 = scalar_lea.vmem [#allocation4], %s758
        %p760 = scmp.lt.s32.totalorder %s38, 1
        %s761 = scalar_select %p760, %s38, 1
        %s762 = smul.addr %s761, 3
        %s763 = smul.addr %s762, 8
        %s764 = scalar_lea.vmem %s0, %s763
        %p765 = scmp.lt.s32.totalorder %s38, 1
        %s766 = scalar_select %p765, %s38, 1
        %s767 = smul.addr %s766, 9
        %s768 = smul.addr %s767, 8
        %s769 = scalar_lea.vmem %s1, %s768
        %p770 = scmp.lt.s32.totalorder %s38, 1
        %s771 = scalar_select %p770, %s38, 1
        %s772 = smul.addr %s771, 41
        %s773 = smul.addr %s772, 8
        %s774 = scalar_lea.vmem %s2, %s773
        %v775 = vld [vmem:[%s764] sm:$0x7f]
        %v776 = vld [vmem:[%s764 + $0x8] sm:$0x7f]
        %v777 = vld [vmem:[%s764 + $0x10] sm:$0x7f]
        %v778 = vld [vmem:[%s3] sm:$0xff]
        %v779 = vld [vmem:[%s3 + $0x8] sm:$0xff]
        %v780 = vld [vmem:[%s3 + $0x10] sm:$0xff]
        %v781 = vld [vmem:[%s3 + $0x18] sm:$0xff]
        %v782 = vld [vmem:[%s3 + $0x20] sm:$0xff]
        %v783 = vld [vmem:[%s3 + $0x28] sm:$0xff]
        %v784 = vld [vmem:[%s3 + $0x30] sm:$0xff]
        %v785 = vld [vmem:[%s3 + $0x38] sm:$0xff]
        %v786 = vld [vmem:[%s3 + $0x40] sm:$0xff]
        %v787 = vld [vmem:[%s3 + $0x48] sm:$0xff]
        %v788 = vld [vmem:[%s3 + $0x50] sm:$0xff]
        %v789 = vld [vmem:[%s3 + $0x58] sm:$0xff]
        %v790 = vld [vmem:[%s3 + $0x60] sm:$0xff]
        %v791 = vld [vmem:[%s3 + $0x68] sm:$0xff]
        %v792 = vld [vmem:[%s3 + $0x70] sm:$0xff]
        %v793 = vld [vmem:[%s3 + $0x78] sm:$0xff]
        %v794 = vld [vmem:[%s3 + $0x80] sm:$0xff]
        %v795 = vld [vmem:[%s3 + $0x88] sm:$0xff]
        %v796 = vld [vmem:[%s3 + $0x90] sm:$0xff]
        %v797 = vld [vmem:[%s3 + $0x98] sm:$0xff]
        %v798 = vld [vmem:[%s3 + $0xa0] sm:$0xff]
        %v799 = vld [vmem:[%s3 + $0xa8] sm:$0xff]
        %v800 = vld [vmem:[%s3 + $0xb0] sm:$0xff]
        %v801 = vld [vmem:[%s3 + $0xb8] sm:$0xff]
        %v802 = vld [vmem:[%s3 + $0xc0] sm:$0xff]
        %v803 = vld [vmem:[%s3 + $0xc8] sm:$0xff]
        %v804 = vld [vmem:[%s3 + $0xd0] sm:$0xff]
        %v805 = vld [vmem:[%s3 + $0xd8] sm:$0xff]
        %v806 = vld [vmem:[%s3 + $0xe0] sm:$0xff]
        %v807 = vld [vmem:[%s3 + $0xe8] sm:$0xff]
        %v808 = vld [vmem:[%s3 + $0xf0] sm:$0xff]
        %v809 = vld [vmem:[%s3 + $0xf8] sm:$0xff]
        %v810 = vld [vmem:[%s3 + $0x100] sm:$0xff]
        %v811 = vld [vmem:[%s3 + $0x108] sm:$0xff]
        %v812 = vld [vmem:[%s3 + $0x110] sm:$0xff]
        %v813 = vld [vmem:[%s3 + $0x118] sm:$0xff]
        %v814 = vld [vmem:[%s3 + $0x120] sm:$0xff]
        %v815 = vld [vmem:[%s3 + $0x128] sm:$0xff]
        %v816 = vld [vmem:[%s3 + $0x130] sm:$0xff]
        %v817 = vld [vmem:[%s3 + $0x138] sm:$0xff]
        %s818 = scalar_lea.vmem %s3, 320
        %v819 = vld [vmem:[%s818] sm:$0xff]
        %v820 = vld [vmem:[%s818 + $0x8] sm:$0xff]
        %v821 = vld [vmem:[%s818 + $0x10] sm:$0xff]
        %v822 = vld [vmem:[%s818 + $0x18] sm:$0xff]
        %v823 = vld [vmem:[%s818 + $0x20] sm:$0xff]
        %v824 = vld [vmem:[%s818 + $0x28] sm:$0xff]
        %v825 = vld [vmem:[%s818 + $0x30] sm:$0xff]
        %v826 = vld [vmem:[%s818 + $0x38] sm:$0xff]
        %v827 = vld [vmem:[%s818 + $0x40] sm:$0xff]
        %v828 = vld [vmem:[%s818 + $0x48] sm:$0xff]
        %v829 = vld [vmem:[%s818 + $0x50] sm:$0xff]
        %v830 = vld [vmem:[%s818 + $0x58] sm:$0xff]
        %v831 = vld [vmem:[%s818 + $0x60] sm:$0xff]
        %v832 = vld [vmem:[%s818 + $0x68] sm:$0xff]
        %v833 = vld [vmem:[%s818 + $0x70] sm:$0xff]
        %v834 = vld [vmem:[%s818 + $0x78] sm:$0xff]
        %v835 = vld [vmem:[%s818 + $0x80] sm:$0xff]
        %v836 = vld [vmem:[%s818 + $0x88] sm:$0xff]
        %v837 = vld [vmem:[%s818 + $0x90] sm:$0xff]
        %v838 = vld [vmem:[%s818 + $0x98] sm:$0xff]
        %v839 = vld [vmem:[%s818 + $0xa0] sm:$0xff]
        %v840 = vld [vmem:[%s818 + $0xa8] sm:$0xff]
        %v841 = vld [vmem:[%s818 + $0xb0] sm:$0xff]
        %v842 = vld [vmem:[%s818 + $0xb8] sm:$0xff]
        %v843 = vld [vmem:[%s818 + $0xc0] sm:$0xff]
        %v844 = vld [vmem:[%s818 + $0xc8] sm:$0xff]
        %v845 = vld [vmem:[%s818 + $0xd0] sm:$0xff]
        %v846 = vld [vmem:[%s818 + $0xd8] sm:$0xff]
        %v847 = vld [vmem:[%s818 + $0xe0] sm:$0xff]
        %v848 = vld [vmem:[%s818 + $0xe8] sm:$0xff]
        %v849 = vld [vmem:[%s818 + $0xf0] sm:$0xff]
        %v850 = vld [vmem:[%s818 + $0xf8] sm:$0xff]
        %v851 = vld [vmem:[%s818 + $0x100] sm:$0xff]
        %v852 = vld [vmem:[%s818 + $0x108] sm:$0xff]
        %v853 = vld [vmem:[%s818 + $0x110] sm:$0xff]
        %v854 = vld [vmem:[%s818 + $0x118] sm:$0xff]
        %v855 = vld [vmem:[%s818 + $0x120] sm:$0xff]
        %v856 = vld [vmem:[%s818 + $0x128] sm:$0xff]
        %v857 = vld [vmem:[%s818 + $0x130] sm:$0xff]
        %v858 = vld [vmem:[%s818 + $0x138] sm:$0xff]
        %v862 = vrot.slane %v775, 1
        %v863 = vrot.slane %v776, 1
        %v864 = vrot.slane %v777, 1
        %vm867 = vcmask 523264
        %v868 = vsel %vm867, %v864, 0
        %870 = vmatpush.msra.mxu0 %v834
        %871 = vmatpush.msra.mxu0 %v833
        %872 = vmatpush.msra.mxu0 %v832
        %873 = vmatpush.msra.mxu0 %v831
        %874 = vmatpush.msra.mxu0 %v830
        %875 = vmatpush.msra.mxu0 %v829
        %876 = vmatpush.msra.mxu0 %v828
        %877 = vmatpush.msra.mxu0 %v827
        %878 = vmatpush.msra.mxu0 %v826
        %879 = vmatpush.msra.mxu0 %v825
        %880 = vmatpush.msra.mxu0 %v824
        %881 = vmatpush.msra.mxu0 %v823
        %882 = vmatpush.msra.mxu0 %v822
        %883 = vmatpush.msra.mxu0 %v821
        %884 = vmatpush.msra.mxu0 %v820
        %885 = vmatpush.msra.mxu0 %v819
        %886 = vmatmul.f32.gmra.mxu0 %v862
        %v887 = vpop.f32.mrf.mxu0
        %v888 = vadd.f32 0.0, %v887
        %889 = vdwg.mxu0
        %890 = vmatpush.msra.mxu0 %v850
        %891 = vmatpush.msra.mxu0 %v849
        %892 = vmatpush.msra.mxu0 %v848
        %893 = vmatpush.msra.mxu0 %v847
        %894 = vmatpush.msra.mxu0 %v846
        %895 = vmatpush.msra.mxu0 %v845
        %896 = vmatpush.msra.mxu0 %v844
        %897 = vmatpush.msra.mxu0 %v843
        %898 = vmatpush.msra.mxu0 %v842
        %899 = vmatpush.msra.mxu0 %v841
        %900 = vmatpush.msra.mxu0 %v840
        %901 = vmatpush.msra.mxu0 %v839
        %902 = vmatpush.msra.mxu0 %v838
        %903 = vmatpush.msra.mxu0 %v837
        %904 = vmatpush.msra.mxu0 %v836
        %905 = vmatpush.msra.mxu0 %v835
        %906 = vmatmul.f32.gmra.mxu0 %v863
        %v907 = vpop.f32.mrf.mxu0
        %v908 = vadd.f32 %v888, %v907
        %909 = vdwg.mxu0
        %910 = vmatpush.msra.mxu0 0.0
        %911 = vmatpush.msra.mxu0 0.0
        %912 = vmatpush.msra.mxu0 0.0
        %913 = vmatpush.msra.mxu0 0.0
        %914 = vmatpush.msra.mxu0 0.0
        %915 = vmatpush.msra.mxu0 0.0
        %916 = vmatpush.msra.mxu0 0.0
        %917 = vmatpush.msra.mxu0 0.0
        %918 = vmatpush.msra.mxu0 %v858
        %919 = vmatpush.msra.mxu0 %v857
        %920 = vmatpush.msra.mxu0 %v856
        %921 = vmatpush.msra.mxu0 %v855
        %922 = vmatpush.msra.mxu0 %v854
        %923 = vmatpush.msra.mxu0 %v853
        %924 = vmatpush.msra.mxu0 %v852
        %925 = vmatpush.msra.mxu0 %v851
        %926 = vmatmul.f32.gmra.mxu0 %v868
        %v927 = vpop.f32.mrf.mxu0
        %v928 = vadd.f32 %v908, %v927
        %929 = vdwg.mxu0
        %v930 = vsel %vm867, %v777, 0
        %932 = vmatpush.msra.mxu0 %v793
        %933 = vmatpush.msra.mxu0 %v792
        %934 = vmatpush.msra.mxu0 %v791
        %935 = vmatpush.msra.mxu0 %v790
        %936 = vmatpush.msra.mxu0 %v789
        %937 = vmatpush.msra.mxu0 %v788
        %938 = vmatpush.msra.mxu0 %v787
        %939 = vmatpush.msra.mxu0 %v786
        %940 = vmatpush.msra.mxu0 %v785
        %941 = vmatpush.msra.mxu0 %v784
        %942 = vmatpush.msra.mxu0 %v783
        %943 = vmatpush.msra.mxu0 %v782
        %944 = vmatpush.msra.mxu0 %v781
        %945 = vmatpush.msra.mxu0 %v780
        %946 = vmatpush.msra.mxu0 %v779
        %947 = vmatpush.msra.mxu0 %v778
        %948 = vmatmul.f32.gmra.mxu0 %v775
        %v949 = vpop.f32.mrf.mxu0
        %v950 = vadd.f32 %v928, %v949
        %951 = vdwg.mxu0
        %952 = vmatpush.msra.mxu0 %v809
        %953 = vmatpush.msra.mxu0 %v808
        %954 = vmatpush.msra.mxu0 %v807
        %955 = vmatpush.msra.mxu0 %v806
        %956 = vmatpush.msra.mxu0 %v805
        %957 = vmatpush.msra.mxu0 %v804
        %958 = vmatpush.msra.mxu0 %v803
        %959 = vmatpush.msra.mxu0 %v802
        %960 = vmatpush.msra.mxu0 %v801
        %961 = vmatpush.msra.mxu0 %v800
        %962 = vmatpush.msra.mxu0 %v799
        %963 = vmatpush.msra.mxu0 %v798
        %964 = vmatpush.msra.mxu0 %v797
        %965 = vmatpush.msra.mxu0 %v796
        %966 = vmatpush.msra.mxu0 %v795
        %967 = vmatpush.msra.mxu0 %v794
        %968 = vmatmul.f32.gmra.mxu0 %v776
        %v969 = vpop.f32.mrf.mxu0
        %v970 = vadd.f32 %v950, %v969
        %971 = vdwg.mxu0
        %972 = vmatpush.msra.mxu0 0.0
        %973 = vmatpush.msra.mxu0 0.0
        %974 = vmatpush.msra.mxu0 0.0
        %975 = vmatpush.msra.mxu0 0.0
        %976 = vmatpush.msra.mxu0 0.0
        %977 = vmatpush.msra.mxu0 0.0
        %978 = vmatpush.msra.mxu0 0.0
        %979 = vmatpush.msra.mxu0 0.0
        %980 = vmatpush.msra.mxu0 %v817
        %981 = vmatpush.msra.mxu0 %v816
        %982 = vmatpush.msra.mxu0 %v815
        %983 = vmatpush.msra.mxu0 %v814
        %984 = vmatpush.msra.mxu0 %v813
        %985 = vmatpush.msra.mxu0 %v812
        %986 = vmatpush.msra.mxu0 %v811
        %987 = vmatpush.msra.mxu0 %v810
        %988 = vmatmul.f32.gmra.mxu0 %v930
        %v989 = vpop.f32.mrf.mxu0
        %v990 = vadd.f32 %v970, %v989
        %991 = vdwg.mxu0
        %s992 = scalar_lea.vmem %s3, 640
        %v993 = vld [vmem:[%s992] sm:$0xff]
        %v994 = vld [vmem:[%s992 + $0x8] sm:$0xff]
        %v995 = vld [vmem:[%s992 + $0x10] sm:$0xff]
        %v996 = vld [vmem:[%s992 + $0x18] sm:$0xff]
        %v997 = vld [vmem:[%s992 + $0x20] sm:$0xff]
        %v998 = vld [vmem:[%s992 + $0x28] sm:$0xff]
        %v999 = vld [vmem:[%s992 + $0x30] sm:$0xff]
        %v1000 = vld [vmem:[%s992 + $0x38] sm:$0xff]
        %v1001 = vld [vmem:[%s992 + $0x40] sm:$0xff]
        %v1002 = vld [vmem:[%s992 + $0x48] sm:$0xff]
        %v1003 = vld [vmem:[%s992 + $0x50] sm:$0xff]
        %v1004 = vld [vmem:[%s992 + $0x58] sm:$0xff]
        %v1005 = vld [vmem:[%s992 + $0x60] sm:$0xff]
        %v1006 = vld [vmem:[%s992 + $0x68] sm:$0xff]
        %v1007 = vld [vmem:[%s992 + $0x70] sm:$0xff]
        %v1008 = vld [vmem:[%s992 + $0x78] sm:$0xff]
        %v1009 = vld [vmem:[%s992 + $0x80] sm:$0xff]
        %v1010 = vld [vmem:[%s992 + $0x88] sm:$0xff]
        %v1011 = vld [vmem:[%s992 + $0x90] sm:$0xff]
        %v1012 = vld [vmem:[%s992 + $0x98] sm:$0xff]
        %v1013 = vld [vmem:[%s992 + $0xa0] sm:$0xff]
        %v1014 = vld [vmem:[%s992 + $0xa8] sm:$0xff]
        %v1015 = vld [vmem:[%s992 + $0xb0] sm:$0xff]
        %v1016 = vld [vmem:[%s992 + $0xb8] sm:$0xff]
        %v1017 = vld [vmem:[%s992 + $0xc0] sm:$0xff]
        %v1018 = vld [vmem:[%s992 + $0xc8] sm:$0xff]
        %v1019 = vld [vmem:[%s992 + $0xd0] sm:$0xff]
        %v1020 = vld [vmem:[%s992 + $0xd8] sm:$0xff]
        %v1021 = vld [vmem:[%s992 + $0xe0] sm:$0xff]
        %v1022 = vld [vmem:[%s992 + $0xe8] sm:$0xff]
        %v1023 = vld [vmem:[%s992 + $0xf0] sm:$0xff]
        %v1024 = vld [vmem:[%s992 + $0xf8] sm:$0xff]
        %v1025 = vld [vmem:[%s992 + $0x100] sm:$0xff]
        %v1026 = vld [vmem:[%s992 + $0x108] sm:$0xff]
        %v1027 = vld [vmem:[%s992 + $0x110] sm:$0xff]
        %v1028 = vld [vmem:[%s992 + $0x118] sm:$0xff]
        %v1029 = vld [vmem:[%s992 + $0x120] sm:$0xff]
        %v1030 = vld [vmem:[%s992 + $0x128] sm:$0xff]
        %v1031 = vld [vmem:[%s992 + $0x130] sm:$0xff]
        %v1032 = vld [vmem:[%s992 + $0x138] sm:$0xff]
        %v1033 = vrot.slane %v775, 2
        %v1034 = vrot.slane %v776, 2
        %v1035 = vrot.slane %v777, 2
        %v1038 = vsel %vm867, %v1035, 0
        %1040 = vmatpush.msra.mxu0 %v1008
        %1041 = vmatpush.msra.mxu0 %v1007
        %1042 = vmatpush.msra.mxu0 %v1006
        %1043 = vmatpush.msra.mxu0 %v1005
        %1044 = vmatpush.msra.mxu0 %v1004
        %1045 = vmatpush.msra.mxu0 %v1003
        %1046 = vmatpush.msra.mxu0 %v1002
        %1047 = vmatpush.msra.mxu0 %v1001
        %1048 = vmatpush.msra.mxu0 %v1000
        %1049 = vmatpush.msra.mxu0 %v999
        %1050 = vmatpush.msra.mxu0 %v998
        %1051 = vmatpush.msra.mxu0 %v997
        %1052 = vmatpush.msra.mxu0 %v996
        %1053 = vmatpush.msra.mxu0 %v995
        %1054 = vmatpush.msra.mxu0 %v994
        %1055 = vmatpush.msra.mxu0 %v993
        %1056 = vmatmul.f32.gmra.mxu0 %v1033
        %v1057 = vpop.f32.mrf.mxu0
        %v1058 = vadd.f32 0.0, %v1057
        %1059 = vdwg.mxu0
        %1060 = vmatpush.msra.mxu0 %v1024
        %1061 = vmatpush.msra.mxu0 %v1023
        %1062 = vmatpush.msra.mxu0 %v1022
        %1063 = vmatpush.msra.mxu0 %v1021
        %1064 = vmatpush.msra.mxu0 %v1020
        %1065 = vmatpush.msra.mxu0 %v1019
        %1066 = vmatpush.msra.mxu0 %v1018
        %1067 = vmatpush.msra.mxu0 %v1017
        %1068 = vmatpush.msra.mxu0 %v1016
        %1069 = vmatpush.msra.mxu0 %v1015
        %1070 = vmatpush.msra.mxu0 %v1014
        %1071 = vmatpush.msra.mxu0 %v1013
        %1072 = vmatpush.msra.mxu0 %v1012
        %1073 = vmatpush.msra.mxu0 %v1011
        %1074 = vmatpush.msra.mxu0 %v1010
        %1075 = vmatpush.msra.mxu0 %v1009
        %1076 = vmatmul.f32.gmra.mxu0 %v1034
        %v1077 = vpop.f32.mrf.mxu0
        %v1078 = vadd.f32 %v1058, %v1077
        %1079 = vdwg.mxu0
        %1080 = vmatpush.msra.mxu0 0.0
        %1081 = vmatpush.msra.mxu0 0.0
        %1082 = vmatpush.msra.mxu0 0.0
        %1083 = vmatpush.msra.mxu0 0.0
        %1084 = vmatpush.msra.mxu0 0.0
        %1085 = vmatpush.msra.mxu0 0.0
        %1086 = vmatpush.msra.mxu0 0.0
        %1087 = vmatpush.msra.mxu0 0.0
        %1088 = vmatpush.msra.mxu0 %v1032
        %1089 = vmatpush.msra.mxu0 %v1031
        %1090 = vmatpush.msra.mxu0 %v1030
        %1091 = vmatpush.msra.mxu0 %v1029
        %1092 = vmatpush.msra.mxu0 %v1028
        %1093 = vmatpush.msra.mxu0 %v1027
        %1094 = vmatpush.msra.mxu0 %v1026
        %1095 = vmatpush.msra.mxu0 %v1025
        %1096 = vmatmul.f32.gmra.mxu0 %v1038
        %v1097 = vpop.f32.mrf.mxu0
        %v1098 = vadd.f32 %v1078, %v1097
        %1099 = vdwg.mxu0
        %v1100 = vadd.f32 %v990, %v1098
        %v1101 = vld [vmem:[%s4] sm:$0x1]
        %v1103 = vperm.slane %v1101, 0
        %v1105 = vadd.f32 %v1100, %v1103
        %v1106 = vmax.f32 %v1105, 0.0
        %v1108 = vrot.slane %v1106, 1
        %v1110 = vmax.f32 %v1106, %v1108
        %v1111 = vrot.slane %v1106, 2
        %v1113 = vmax.f32 %v1110, %v1111
        %v1114 = vld [vmem:[%s5] sm:$0xff]
        %v1115 = vld [vmem:[%s5 + $0x8] sm:$0xff]
        %v1116 = vld [vmem:[%s5 + $0x10] sm:$0xff]
        %v1117 = vld [vmem:[%s5 + $0x18] sm:$0xff]
        %v1118 = vld [vmem:[%s5 + $0x20] sm:$0xff]
        %v1119 = vld [vmem:[%s5 + $0x28] sm:$0xff]
        %v1120 = vld [vmem:[%s5 + $0x30] sm:$0xff]
        %v1121 = vld [vmem:[%s5 + $0x38] sm:$0xff]
        %v1122 = vld [vmem:[%s5 + $0x40] sm:$0xff]
        %v1123 = vld [vmem:[%s5 + $0x48] sm:$0xff]
        %v1124 = vld [vmem:[%s5 + $0x50] sm:$0xff]
        %v1125 = vld [vmem:[%s5 + $0x58] sm:$0xff]
        %v1126 = vld [vmem:[%s5 + $0x60] sm:$0xff]
        %v1127 = vld [vmem:[%s5 + $0x68] sm:$0xff]
        %v1128 = vld [vmem:[%s5 + $0x70] sm:$0xff]
        %v1129 = vld [vmem:[%s5 + $0x78] sm:$0xff]
        %v1130 = vld [vmem:[%s5 + $0x80] sm:$0xff]
        %v1131 = vld [vmem:[%s5 + $0x88] sm:$0xff]
        %v1132 = vld [vmem:[%s5 + $0x90] sm:$0xff]
        %v1133 = vld [vmem:[%s5 + $0x98] sm:$0xff]
        %v1134 = vld [vmem:[%s5 + $0xa0] sm:$0xff]
        %v1135 = vld [vmem:[%s5 + $0xa8] sm:$0xff]
        %v1136 = vld [vmem:[%s5 + $0xb0] sm:$0xff]
        %v1137 = vld [vmem:[%s5 + $0xb8] sm:$0xff]
        %v1138 = vld [vmem:[%s5 + $0xc0] sm:$0xff]
        %v1139 = vld [vmem:[%s5 + $0xc8] sm:$0xff]
        %v1140 = vld [vmem:[%s5 + $0xd0] sm:$0xff]
        %v1141 = vld [vmem:[%s5 + $0xd8] sm:$0xff]
        %v1142 = vld [vmem:[%s5 + $0xe0] sm:$0xff]
        %v1143 = vld [vmem:[%s5 + $0xe8] sm:$0xff]
        %v1144 = vld [vmem:[%s5 + $0xf0] sm:$0xff]
        %v1145 = vld [vmem:[%s5 + $0xf8] sm:$0xff]
        %v1146 = vld [vmem:[%s5 + $0x100] sm:$0xff]
        %v1147 = vld [vmem:[%s5 + $0x108] sm:$0xff]
        %v1148 = vld [vmem:[%s5 + $0x110] sm:$0xff]
        %v1149 = vld [vmem:[%s5 + $0x118] sm:$0xff]
        %v1150 = vld [vmem:[%s5 + $0x120] sm:$0xff]
        %v1151 = vld [vmem:[%s5 + $0x128] sm:$0xff]
        %v1152 = vld [vmem:[%s5 + $0x130] sm:$0xff]
        %v1153 = vld [vmem:[%s5 + $0x138] sm:$0xff]
        %v1154 = vld [vmem:[%s5 + $0x140] sm:$0xff]
        %v1155 = vld [vmem:[%s5 + $0x148] sm:$0xff]
        %v1156 = vld [vmem:[%s5 + $0x150] sm:$0xff]
        %v1157 = vld [vmem:[%s5 + $0x158] sm:$0xff]
        %v1158 = vld [vmem:[%s5 + $0x160] sm:$0xff]
        %v1159 = vld [vmem:[%s5 + $0x168] sm:$0xff]
        %v1160 = vld [vmem:[%s5 + $0x170] sm:$0xff]
        %v1161 = vld [vmem:[%s5 + $0x178] sm:$0xff]
        %v1162 = vld [vmem:[%s5 + $0x180] sm:$0xff]
        %v1163 = vld [vmem:[%s5 + $0x188] sm:$0xff]
        %v1164 = vld [vmem:[%s5 + $0x190] sm:$0xff]
        %v1165 = vld [vmem:[%s5 + $0x198] sm:$0xff]
        %v1166 = vld [vmem:[%s5 + $0x1a0] sm:$0xff]
        %v1167 = vld [vmem:[%s5 + $0x1a8] sm:$0xff]
        %v1168 = vld [vmem:[%s5 + $0x1b0] sm:$0xff]
        %v1169 = vld [vmem:[%s5 + $0x1b8] sm:$0xff]
        %v1170 = vld [vmem:[%s5 + $0x1c0] sm:$0xff]
        %v1171 = vld [vmem:[%s5 + $0x1c8] sm:$0xff]
        %v1172 = vld [vmem:[%s5 + $0x1d0] sm:$0xff]
        %v1173 = vld [vmem:[%s5 + $0x1d8] sm:$0xff]
        %v1174 = vld [vmem:[%s5 + $0x1e0] sm:$0xff]
        %v1175 = vld [vmem:[%s5 + $0x1e8] sm:$0xff]
        %v1176 = vld [vmem:[%s5 + $0x1f0] sm:$0xff]
        %v1177 = vld [vmem:[%s5 + $0x1f8] sm:$0xff]
        %v1178 = vld [vmem:[%s7] sm:$0xf]
        %v1180 = vperm.slane %v1178, 0
        %v1181 = vperm.slane %v1178, 1
        %v1182 = vperm.slane %v1178, 2
        %v1183 = vperm.slane %v1178, 3
        %1188 = vmatpush.msra.mxu0 %v1174
        %1189 = vmatpush.msra.mxu0 %v1170
        %1190 = vmatpush.msra.mxu0 %v1166
        %1191 = vmatpush.msra.mxu0 %v1162
        %1192 = vmatpush.msra.mxu0 %v1158
        %1193 = vmatpush.msra.mxu0 %v1154
        %1194 = vmatpush.msra.mxu0 %v1150
        %1195 = vmatpush.msra.mxu0 %v1146
        %1196 = vmatpush.msra.mxu0 %v1142
        %1197 = vmatpush.msra.mxu0 %v1138
        %1198 = vmatpush.msra.mxu0 %v1134
        %1199 = vmatpush.msra.mxu0 %v1130
        %1200 = vmatpush.msra.mxu0 %v1126
        %1201 = vmatpush.msra.mxu0 %v1122
        %1202 = vmatpush.msra.mxu0 %v1118
        %1203 = vmatpush.msra.mxu0 %v1114
        %1204 = vmatmul.f32.gmra.mxu0 %v1113
        %v1205 = vpop.f32.mrf.mxu0
        %v1206 = vadd.f32 %v1180, %v1205
        %1207 = vdwg.mxu0
        %1208 = vmatpush.msra.mxu0 %v1175
        %1209 = vmatpush.msra.mxu0 %v1171
        %1210 = vmatpush.msra.mxu0 %v1167
        %1211 = vmatpush.msra.mxu0 %v1163
        %1212 = vmatpush.msra.mxu0 %v1159
        %1213 = vmatpush.msra.mxu0 %v1155
        %1214 = vmatpush.msra.mxu0 %v1151
        %1215 = vmatpush.msra.mxu0 %v1147
        %1216 = vmatpush.msra.mxu0 %v1143
        %1217 = vmatpush.msra.mxu0 %v1139
        %1218 = vmatpush.msra.mxu0 %v1135
        %1219 = vmatpush.msra.mxu0 %v1131
        %1220 = vmatpush.msra.mxu0 %v1127
        %1221 = vmatpush.msra.mxu0 %v1123
        %1222 = vmatpush.msra.mxu0 %v1119
        %1223 = vmatpush.msra.mxu0 %v1115
        %1224 = vmatmul.f32.gmra.mxu0 %v1113
        %v1225 = vpop.f32.mrf.mxu0
        %v1226 = vadd.f32 %v1181, %v1225
        %1227 = vdwg.mxu0
        %1228 = vmatpush.msra.mxu0 %v1176
        %1229 = vmatpush.msra.mxu0 %v1172
        %1230 = vmatpush.msra.mxu0 %v1168
        %1231 = vmatpush.msra.mxu0 %v1164
        %1232 = vmatpush.msra.mxu0 %v1160
        %1233 = vmatpush.msra.mxu0 %v1156
        %1234 = vmatpush.msra.mxu0 %v1152
        %1235 = vmatpush.msra.mxu0 %v1148
        %1236 = vmatpush.msra.mxu0 %v1144
        %1237 = vmatpush.msra.mxu0 %v1140
        %1238 = vmatpush.msra.mxu0 %v1136
        %1239 = vmatpush.msra.mxu0 %v1132
        %1240 = vmatpush.msra.mxu0 %v1128
        %1241 = vmatpush.msra.mxu0 %v1124
        %1242 = vmatpush.msra.mxu0 %v1120
        %1243 = vmatpush.msra.mxu0 %v1116
        %1244 = vmatmul.f32.gmra.mxu0 %v1113
        %v1245 = vpop.f32.mrf.mxu0
        %v1246 = vadd.f32 %v1182, %v1245
        %1247 = vdwg.mxu0
        %1248 = vmatpush.msra.mxu0 %v1177
        %1249 = vmatpush.msra.mxu0 %v1173
        %1250 = vmatpush.msra.mxu0 %v1169
        %1251 = vmatpush.msra.mxu0 %v1165
        %1252 = vmatpush.msra.mxu0 %v1161
        %1253 = vmatpush.msra.mxu0 %v1157
        %1254 = vmatpush.msra.mxu0 %v1153
        %1255 = vmatpush.msra.mxu0 %v1149
        %1256 = vmatpush.msra.mxu0 %v1145
        %1257 = vmatpush.msra.mxu0 %v1141
        %1258 = vmatpush.msra.mxu0 %v1137
        %1259 = vmatpush.msra.mxu0 %v1133
        %1260 = vmatpush.msra.mxu0 %v1129
        %1261 = vmatpush.msra.mxu0 %v1125
        %1262 = vmatpush.msra.mxu0 %v1121
        %1263 = vmatpush.msra.mxu0 %v1117
        %1264 = vmatmul.f32.gmra.mxu0 %v1113
        %v1265 = vpop.f32.mrf.mxu0
        %v1266 = vadd.f32 %v1183, %v1265
        %1267 = vdwg.mxu0
        %v1268 = vld [vmem:[%s6] sm:$0xff]
        %v1269 = vld [vmem:[%s6 + $0x8] sm:$0xff]
        %v1270 = vld [vmem:[%s6 + $0x10] sm:$0xff]
        %v1271 = vld [vmem:[%s6 + $0x18] sm:$0xff]
        %v1272 = vld [vmem:[%s6 + $0x20] sm:$0xff]
        %v1273 = vld [vmem:[%s6 + $0x28] sm:$0xff]
        %v1274 = vld [vmem:[%s6 + $0x30] sm:$0xff]
        %v1275 = vld [vmem:[%s6 + $0x38] sm:$0xff]
        %v1276 = vld [vmem:[%s6 + $0x40] sm:$0xff]
        %v1277 = vld [vmem:[%s6 + $0x48] sm:$0xff]
        %v1278 = vld [vmem:[%s6 + $0x50] sm:$0xff]
        %v1279 = vld [vmem:[%s6 + $0x58] sm:$0xff]
        %v1280 = vld [vmem:[%s6 + $0x60] sm:$0xff]
        %v1281 = vld [vmem:[%s6 + $0x68] sm:$0xff]
        %v1282 = vld [vmem:[%s6 + $0x70] sm:$0xff]
        %v1283 = vld [vmem:[%s6 + $0x78] sm:$0xff]
        %v1284 = vld [vmem:[%s6 + $0x80] sm:$0xff]
        %v1285 = vld [vmem:[%s6 + $0x88] sm:$0xff]
        %v1286 = vld [vmem:[%s6 + $0x90] sm:$0xff]
        %v1287 = vld [vmem:[%s6 + $0x98] sm:$0xff]
        %v1288 = vld [vmem:[%s6 + $0xa0] sm:$0xff]
        %v1289 = vld [vmem:[%s6 + $0xa8] sm:$0xff]
        %v1290 = vld [vmem:[%s6 + $0xb0] sm:$0xff]
        %v1291 = vld [vmem:[%s6 + $0xb8] sm:$0xff]
        %v1292 = vld [vmem:[%s6 + $0xc0] sm:$0xff]
        %v1293 = vld [vmem:[%s6 + $0xc8] sm:$0xff]
        %v1294 = vld [vmem:[%s6 + $0xd0] sm:$0xff]
        %v1295 = vld [vmem:[%s6 + $0xd8] sm:$0xff]
        %v1296 = vld [vmem:[%s6 + $0xe0] sm:$0xff]
        %v1297 = vld [vmem:[%s6 + $0xe8] sm:$0xff]
        %v1298 = vld [vmem:[%s6 + $0xf0] sm:$0xff]
        %v1299 = vld [vmem:[%s6 + $0xf8] sm:$0xff]
        %v1300 = vld [vmem:[%s6 + $0x100] sm:$0xff]
        %v1301 = vld [vmem:[%s6 + $0x108] sm:$0xff]
        %v1302 = vld [vmem:[%s6 + $0x110] sm:$0xff]
        %v1303 = vld [vmem:[%s6 + $0x118] sm:$0xff]
        %v1304 = vld [vmem:[%s6 + $0x120] sm:$0xff]
        %v1305 = vld [vmem:[%s6 + $0x128] sm:$0xff]
        %v1306 = vld [vmem:[%s6 + $0x130] sm:$0xff]
        %v1307 = vld [vmem:[%s6 + $0x138] sm:$0xff]
        %v1308 = vld [vmem:[%s6 + $0x140] sm:$0xff]
        %v1309 = vld [vmem:[%s6 + $0x148] sm:$0xff]
        %v1310 = vld [vmem:[%s6 + $0x150] sm:$0xff]
        %v1311 = vld [vmem:[%s6 + $0x158] sm:$0xff]
        %v1312 = vld [vmem:[%s6 + $0x160] sm:$0xff]
        %v1313 = vld [vmem:[%s6 + $0x168] sm:$0xff]
        %v1314 = vld [vmem:[%s6 + $0x170] sm:$0xff]
        %v1315 = vld [vmem:[%s6 + $0x178] sm:$0xff]
        %v1316 = vld [vmem:[%s6 + $0x180] sm:$0xff]
        %v1317 = vld [vmem:[%s6 + $0x188] sm:$0xff]
        %v1318 = vld [vmem:[%s6 + $0x190] sm:$0xff]
        %v1319 = vld [vmem:[%s6 + $0x198] sm:$0xff]
        %v1320 = vld [vmem:[%s6 + $0x1a0] sm:$0xff]
        %v1321 = vld [vmem:[%s6 + $0x1a8] sm:$0xff]
        %v1322 = vld [vmem:[%s6 + $0x1b0] sm:$0xff]
        %v1323 = vld [vmem:[%s6 + $0x1b8] sm:$0xff]
        %v1324 = vld [vmem:[%s6 + $0x1c0] sm:$0xff]
        %v1325 = vld [vmem:[%s6 + $0x1c8] sm:$0xff]
        %v1326 = vld [vmem:[%s6 + $0x1d0] sm:$0xff]
        %v1327 = vld [vmem:[%s6 + $0x1d8] sm:$0xff]
        %v1328 = vld [vmem:[%s6 + $0x1e0] sm:$0xff]
        %v1329 = vld [vmem:[%s6 + $0x1e8] sm:$0xff]
        %v1330 = vld [vmem:[%s6 + $0x1f0] sm:$0xff]
        %v1331 = vld [vmem:[%s6 + $0x1f8] sm:$0xff]
        %1332 = vmatpush.msra.mxu0 %v1328
        %1333 = vmatpush.msra.mxu0 %v1324
        %1334 = vmatpush.msra.mxu0 %v1320
        %1335 = vmatpush.msra.mxu0 %v1316
        %1336 = vmatpush.msra.mxu0 %v1312
        %1337 = vmatpush.msra.mxu0 %v1308
        %1338 = vmatpush.msra.mxu0 %v1304
        %1339 = vmatpush.msra.mxu0 %v1300
        %1340 = vmatpush.msra.mxu0 %v1296
        %1341 = vmatpush.msra.mxu0 %v1292
        %1342 = vmatpush.msra.mxu0 %v1288
        %1343 = vmatpush.msra.mxu0 %v1284
        %1344 = vmatpush.msra.mxu0 %v1280
        %1345 = vmatpush.msra.mxu0 %v1276
        %1346 = vmatpush.msra.mxu0 %v1272
        %1347 = vmatpush.msra.mxu0 %v1268
        %1348 = vmatmul.f32.gmra.mxu0 0.0
        %v1349 = vpop.f32.mrf.mxu0
        %v1350 = vadd.f32 0.0, %v1349
        %1351 = vdwg.mxu0
        %1352 = vmatpush.msra.mxu0 %v1329
        %1353 = vmatpush.msra.mxu0 %v1325
        %1354 = vmatpush.msra.mxu0 %v1321
        %1355 = vmatpush.msra.mxu0 %v1317
        %1356 = vmatpush.msra.mxu0 %v1313
        %1357 = vmatpush.msra.mxu0 %v1309
        %1358 = vmatpush.msra.mxu0 %v1305
        %1359 = vmatpush.msra.mxu0 %v1301
        %1360 = vmatpush.msra.mxu0 %v1297
        %1361 = vmatpush.msra.mxu0 %v1293
        %1362 = vmatpush.msra.mxu0 %v1289
        %1363 = vmatpush.msra.mxu0 %v1285
        %1364 = vmatpush.msra.mxu0 %v1281
        %1365 = vmatpush.msra.mxu0 %v1277
        %1366 = vmatpush.msra.mxu0 %v1273
        %1367 = vmatpush.msra.mxu0 %v1269
        %1368 = vmatmul.f32.gmra.mxu0 0.0
        %v1369 = vpop.f32.mrf.mxu0
        %v1370 = vadd.f32 0.0, %v1369
        %1371 = vdwg.mxu0
        %1372 = vmatpush.msra.mxu0 %v1330
        %1373 = vmatpush.msra.mxu0 %v1326
        %1374 = vmatpush.msra.mxu0 %v1322
        %1375 = vmatpush.msra.mxu0 %v1318
        %1376 = vmatpush.msra.mxu0 %v1314
        %1377 = vmatpush.msra.mxu0 %v1310
        %1378 = vmatpush.msra.mxu0 %v1306
        %1379 = vmatpush.msra.mxu0 %v1302
        %1380 = vmatpush.msra.mxu0 %v1298
        %1381 = vmatpush.msra.mxu0 %v1294
        %1382 = vmatpush.msra.mxu0 %v1290
        %1383 = vmatpush.msra.mxu0 %v1286
        %1384 = vmatpush.msra.mxu0 %v1282
        %1385 = vmatpush.msra.mxu0 %v1278
        %1386 = vmatpush.msra.mxu0 %v1274
        %1387 = vmatpush.msra.mxu0 %v1270
        %1388 = vmatmul.f32.gmra.mxu0 0.0
        %v1389 = vpop.f32.mrf.mxu0
        %v1390 = vadd.f32 0.0, %v1389
        %1391 = vdwg.mxu0
        %1392 = vmatpush.msra.mxu0 %v1331
        %1393 = vmatpush.msra.mxu0 %v1327
        %1394 = vmatpush.msra.mxu0 %v1323
        %1395 = vmatpush.msra.mxu0 %v1319
        %1396 = vmatpush.msra.mxu0 %v1315
        %1397 = vmatpush.msra.mxu0 %v1311
        %1398 = vmatpush.msra.mxu0 %v1307
        %1399 = vmatpush.msra.mxu0 %v1303
        %1400 = vmatpush.msra.mxu0 %v1299
        %1401 = vmatpush.msra.mxu0 %v1295
        %1402 = vmatpush.msra.mxu0 %v1291
        %1403 = vmatpush.msra.mxu0 %v1287
        %1404 = vmatpush.msra.mxu0 %v1283
        %1405 = vmatpush.msra.mxu0 %v1279
        %1406 = vmatpush.msra.mxu0 %v1275
        %1407 = vmatpush.msra.mxu0 %v1271
        %1408 = vmatmul.f32.gmra.mxu0 0.0
        %v1409 = vpop.f32.mrf.mxu0
        %v1410 = vadd.f32 0.0, %v1409
        %1411 = vdwg.mxu0
        %v1412 = vadd.f32 %v1206, %v1350
        %v1413 = vadd.f32 %v1226, %v1370
        %v1414 = vadd.f32 %v1246, %v1390
        %v1415 = vadd.f32 %v1266, %v1410
        %v1416 = vxor.u32 %v1412, 2147483648
        %v1417 = vmul.f32 %v1416, 1.442695
        %v1418 = vpow.pop %v1417
        %v1419 = vadd.f32 %v1418, 1.0
        %v1420 = vrcp.pop %v1419
        %v1421 = vmul.f32 %v1419, %v1420
        %v1422 = vsub.f32 1.0, %v1421
        %v1423 = vmul.f32 %v1420, %v1422
        %v1424 = vadd.f32 %v1420, %v1423
        %vm1425 = vweird.f32 %v1419
        %vm1426 = vweird.f32 %v1420
        %vm1427 = vmor %vm1425, %vm1426
        %v1428 = vsel %vm1427, %v1420, %v1424
        %v1429 = vand.u32 2147483647, %v1419
        %vm1430 = vcmp.eq.f32.partialorder %v1429, 8.507059e+37
        %v1431 = vand.u32 %v1419, 2147483648
        %v1432 = vor.u32 1.1754944e-38, %v1431
        %v1433 = vsel %vm1430, %v1432, %v1428
        %v1434 = vmul.f32 1.0, %v1433
        %v1435 = vxor.u32 %v1413, 2147483648
        %v1436 = vmul.f32 %v1435, 1.442695
        %v1437 = vpow.pop %v1436
        %v1438 = vadd.f32 %v1437, 1.0
        %v1439 = vrcp.pop %v1438
        %v1440 = vmul.f32 %v1438, %v1439
        %v1441 = vsub.f32 1.0, %v1440
        %v1442 = vmul.f32 %v1439, %v1441
        %v1443 = vadd.f32 %v1439, %v1442
        %vm1444 = vweird.f32 %v1438
        %vm1445 = vweird.f32 %v1439
        %vm1446 = vmor %vm1444, %vm1445
        %v1447 = vsel %vm1446, %v1439, %v1443
        %v1448 = vand.u32 2147483647, %v1438
        %vm1449 = vcmp.eq.f32.partialorder %v1448, 8.507059e+37
        %v1450 = vand.u32 %v1438, 2147483648
        %v1451 = vor.u32 1.1754944e-38, %v1450
        %v1452 = vsel %vm1449, %v1451, %v1447
        %v1453 = vmul.f32 1.0, %v1452
        %v1454 = vtanh.pop %v1414
        %v1455 = vxor.u32 %v1415, 2147483648
        %v1456 = vmul.f32 %v1455, 1.442695
        %v1457 = vpow.pop %v1456
        %v1458 = vadd.f32 %v1457, 1.0
        %v1459 = vrcp.pop %v1458
        %v1460 = vmul.f32 %v1458, %v1459
        %v1461 = vsub.f32 1.0, %v1460
        %v1462 = vmul.f32 %v1459, %v1461
        %v1463 = vadd.f32 %v1459, %v1462
        %vm1464 = vweird.f32 %v1458
        %vm1465 = vweird.f32 %v1459
        %vm1466 = vmor %vm1464, %vm1465
        %v1467 = vsel %vm1466, %v1459, %v1463
        %v1468 = vand.u32 2147483647, %v1458
        %vm1469 = vcmp.eq.f32.partialorder %v1468, 8.507059e+37
        %v1470 = vand.u32 %v1458, 2147483648
        %v1471 = vor.u32 1.1754944e-38, %v1470
        %v1472 = vsel %vm1469, %v1471, %v1467
        %v1473 = vmul.f32 1.0, %v1472
        %v1474 = vmul.f32 %v1453, 0.0
        %v1475 = vmul.f32 %v1434, %v1454
        %v1476 = vadd.f32 %v1474, %v1475
        %v1477 = vtanh.pop %v1476
        %v1478 = vmul.f32 %v1473, %v1477
        %1479 = vst [vmem:[#allocation3] sm:$0x1] %v1478
        %1480 = vmatpush.msra.mxu0 %v1328
        %1481 = vmatpush.msra.mxu0 %v1324
        %1482 = vmatpush.msra.mxu0 %v1320
        %1483 = vmatpush.msra.mxu0 %v1316
        %1484 = vmatpush.msra.mxu0 %v1312
        %1485 = vmatpush.msra.mxu0 %v1308
        %1486 = vmatpush.msra.mxu0 %v1304
        %1487 = vmatpush.msra.mxu0 %v1300
        %1488 = vmatpush.msra.mxu0 %v1296
        %1489 = vmatpush.msra.mxu0 %v1292
        %1490 = vmatpush.msra.mxu0 %v1288
        %1491 = vmatpush.msra.mxu0 %v1284
        %1492 = vmatpush.msra.mxu0 %v1280
        %1493 = vmatpush.msra.mxu0 %v1276
        %1494 = vmatpush.msra.mxu0 %v1272
        %1495 = vmatpush.msra.mxu0 %v1268
        %1496 = vmatmul.f32.gmra.mxu0 %v1478
        %v1497 = vpop.f32.mrf.mxu0
        %v1498 = vadd.f32 0.0, %v1497
        %1499 = vdwg.mxu0
        %1500 = vmatpush.msra.mxu0 %v1329
        %1501 = vmatpush.msra.mxu0 %v1325
        %1502 = vmatpush.msra.mxu0 %v1321
        %1503 = vmatpush.msra.mxu0 %v1317
        %1504 = vmatpush.msra.mxu0 %v1313
        %1505 = vmatpush.msra.mxu0 %v1309
        %1506 = vmatpush.msra.mxu0 %v1305
        %1507 = vmatpush.msra.mxu0 %v1301
        %1508 = vmatpush.msra.mxu0 %v1297
        %1509 = vmatpush.msra.mxu0 %v1293
        %1510 = vmatpush.msra.mxu0 %v1289
        %1511 = vmatpush.msra.mxu0 %v1285
        %1512 = vmatpush.msra.mxu0 %v1281
        %1513 = vmatpush.msra.mxu0 %v1277
        %1514 = vmatpush.msra.mxu0 %v1273
        %1515 = vmatpush.msra.mxu0 %v1269
        %1516 = vmatmul.f32.gmra.mxu0 %v1478
        %v1517 = vpop.f32.mrf.mxu0
        %v1518 = vadd.f32 0.0, %v1517
        %1519 = vdwg.mxu0
        %1520 = vmatpush.msra.mxu0 %v1330
        %1521 = vmatpush.msra.mxu0 %v1326
        %1522 = vmatpush.msra.mxu0 %v1322
        %1523 = vmatpush.msra.mxu0 %v1318
        %1524 = vmatpush.msra.mxu0 %v1314
        %1525 = vmatpush.msra.mxu0 %v1310
        %1526 = vmatpush.msra.mxu0 %v1306
        %1527 = vmatpush.msra.mxu0 %v1302
        %1528 = vmatpush.msra.mxu0 %v1298
        %1529 = vmatpush.msra.mxu0 %v1294
        %1530 = vmatpush.msra.mxu0 %v1290
        %1531 = vmatpush.msra.mxu0 %v1286
        %1532 = vmatpush.msra.mxu0 %v1282
        %1533 = vmatpush.msra.mxu0 %v1278
        %1534 = vmatpush.msra.mxu0 %v1274
        %1535 = vmatpush.msra.mxu0 %v1270
        %1536 = vmatmul.f32.gmra.mxu0 %v1478
        %v1537 = vpop.f32.mrf.mxu0
        %v1538 = vadd.f32 0.0, %v1537
        %1539 = vdwg.mxu0
        %1540 = vmatpush.msra.mxu0 %v1331
        %1541 = vmatpush.msra.mxu0 %v1327
        %1542 = vmatpush.msra.mxu0 %v1323
        %1543 = vmatpush.msra.mxu0 %v1319
        %1544 = vmatpush.msra.mxu0 %v1315
        %1545 = vmatpush.msra.mxu0 %v1311
        %1546 = vmatpush.msra.mxu0 %v1307
        %1547 = vmatpush.msra.mxu0 %v1303
        %1548 = vmatpush.msra.mxu0 %v1299
        %1549 = vmatpush.msra.mxu0 %v1295
        %1550 = vmatpush.msra.mxu0 %v1291
        %1551 = vmatpush.msra.mxu0 %v1287
        %1552 = vmatpush.msra.mxu0 %v1283
        %1553 = vmatpush.msra.mxu0 %v1279
        %1554 = vmatpush.msra.mxu0 %v1275
        %1555 = vmatpush.msra.mxu0 %v1271
        %1556 = vmatmul.f32.gmra.mxu0 %v1478
        %v1557 = vpop.f32.mrf.mxu0
        %v1558 = vadd.f32 0.0, %v1557
        %1559 = vdwg.mxu0
        %v1564 = vrot.slane %v1498, 7
        %v1565 = vrot.slane %v1518, 7
        %v1566 = vrot.slane %v1538, 7
        %v1567 = vrot.slane %v1558, 7
        %v1572 = vadd.f32 %v1206, %v1564
        %v1573 = vadd.f32 %v1226, %v1565
        %v1574 = vadd.f32 %v1246, %v1566
        %v1575 = vadd.f32 %v1266, %v1567
        %v1576 = vxor.u32 %v1572, 2147483648
        %v1577 = vmul.f32 %v1576, 1.442695
        %v1578 = vpow.pop %v1577
        %v1579 = vadd.f32 %v1578, 1.0
        %v1580 = vrcp.pop %v1579
        %v1581 = vmul.f32 %v1579, %v1580
        %v1582 = vsub.f32 1.0, %v1581
        %v1583 = vmul.f32 %v1580, %v1582
        %v1584 = vadd.f32 %v1580, %v1583
        %vm1585 = vweird.f32 %v1579
        %vm1586 = vweird.f32 %v1580
        %vm1587 = vmor %vm1585, %vm1586
        %v1588 = vsel %vm1587, %v1580, %v1584
        %v1589 = vand.u32 2147483647, %v1579
        %vm1590 = vcmp.eq.f32.partialorder %v1589, 8.507059e+37
        %v1591 = vand.u32 %v1579, 2147483648
        %v1592 = vor.u32 1.1754944e-38, %v1591
        %v1593 = vsel %vm1590, %v1592, %v1588
        %v1594 = vmul.f32 1.0, %v1593
        %v1595 = vxor.u32 %v1573, 2147483648
        %v1596 = vmul.f32 %v1595, 1.442695
        %v1597 = vpow.pop %v1596
        %v1598 = vadd.f32 %v1597, 1.0
        %v1599 = vrcp.pop %v1598
        %v1600 = vmul.f32 %v1598, %v1599
        %v1601 = vsub.f32 1.0, %v1600
        %v1602 = vmul.f32 %v1599, %v1601
        %v1603 = vadd.f32 %v1599, %v1602
        %vm1604 = vweird.f32 %v1598
        %vm1605 = vweird.f32 %v1599
        %vm1606 = vmor %vm1604, %vm1605
        %v1607 = vsel %vm1606, %v1599, %v1603
        %v1608 = vand.u32 2147483647, %v1598
        %vm1609 = vcmp.eq.f32.partialorder %v1608, 8.507059e+37
        %v1610 = vand.u32 %v1598, 2147483648
        %v1611 = vor.u32 1.1754944e-38, %v1610
        %v1612 = vsel %vm1609, %v1611, %v1607
        %v1613 = vmul.f32 1.0, %v1612
        %v1614 = vtanh.pop %v1574
        %v1615 = vxor.u32 %v1575, 2147483648
        %v1616 = vmul.f32 %v1615, 1.442695
        %v1617 = vpow.pop %v1616
        %v1618 = vadd.f32 %v1617, 1.0
        %v1619 = vrcp.pop %v1618
        %v1620 = vmul.f32 %v1618, %v1619
        %v1621 = vsub.f32 1.0, %v1620
        %v1622 = vmul.f32 %v1619, %v1621
        %v1623 = vadd.f32 %v1619, %v1622
        %vm1624 = vweird.f32 %v1618
        %vm1625 = vweird.f32 %v1619
        %vm1626 = vmor %vm1624, %vm1625
        %v1627 = vsel %vm1626, %v1619, %v1623
        %v1628 = vand.u32 2147483647, %v1618
        %vm1629 = vcmp.eq.f32.partialorder %v1628, 8.507059e+37
        %v1630 = vand.u32 %v1618, 2147483648
        %v1631 = vor.u32 1.1754944e-38, %v1630
        %v1632 = vsel %vm1629, %v1631, %v1627
        %v1633 = vmul.f32 1.0, %v1632
        %v1635 = vrot.slane %v1476, 7
        %v1637 = vmul.f32 %v1613, %v1635
        %v1638 = vmul.f32 %v1594, %v1614
        %v1639 = vadd.f32 %v1637, %v1638
        %v1640 = vtanh.pop %v1639
        %v1641 = vmul.f32 %v1633, %v1640
        %1642 = vst [vmem:[#allocation3] sm:$0x2] %v1641
        %v1644 = vrot.slane %v1641, 1
        %1646 = vmatpush.msra.mxu0 %v1328
        %1647 = vmatpush.msra.mxu0 %v1324
        %1648 = vmatpush.msra.mxu0 %v1320
        %1649 = vmatpush.msra.mxu0 %v1316
        %1650 = vmatpush.msra.mxu0 %v1312
        %1651 = vmatpush.msra.mxu0 %v1308
        %1652 = vmatpush.msra.mxu0 %v1304
        %1653 = vmatpush.msra.mxu0 %v1300
        %1654 = vmatpush.msra.mxu0 %v1296
        %1655 = vmatpush.msra.mxu0 %v1292
        %1656 = vmatpush.msra.mxu0 %v1288
        %1657 = vmatpush.msra.mxu0 %v1284
        %1658 = vmatpush.msra.mxu0 %v1280
        %1659 = vmatpush.msra.mxu0 %v1276
        %1660 = vmatpush.msra.mxu0 %v1272
        %1661 = vmatpush.msra.mxu0 %v1268
        %1662 = vmatmul.f32.gmra.mxu0 %v1644
        %v1663 = vpop.f32.mrf.mxu0
        %v1664 = vadd.f32 0.0, %v1663
        %1665 = vdwg.mxu0
        %1666 = vmatpush.msra.mxu0 %v1329
        %1667 = vmatpush.msra.mxu0 %v1325
        %1668 = vmatpush.msra.mxu0 %v1321
        %1669 = vmatpush.msra.mxu0 %v1317
        %1670 = vmatpush.msra.mxu0 %v1313
        %1671 = vmatpush.msra.mxu0 %v1309
        %1672 = vmatpush.msra.mxu0 %v1305
        %1673 = vmatpush.msra.mxu0 %v1301
        %1674 = vmatpush.msra.mxu0 %v1297
        %1675 = vmatpush.msra.mxu0 %v1293
        %1676 = vmatpush.msra.mxu0 %v1289
        %1677 = vmatpush.msra.mxu0 %v1285
        %1678 = vmatpush.msra.mxu0 %v1281
        %1679 = vmatpush.msra.mxu0 %v1277
        %1680 = vmatpush.msra.mxu0 %v1273
        %1681 = vmatpush.msra.mxu0 %v1269
        %1682 = vmatmul.f32.gmra.mxu0 %v1644
        %v1683 = vpop.f32.mrf.mxu0
        %v1684 = vadd.f32 0.0, %v1683
        %1685 = vdwg.mxu0
        %1686 = vmatpush.msra.mxu0 %v1330
        %1687 = vmatpush.msra.mxu0 %v1326
        %1688 = vmatpush.msra.mxu0 %v1322
        %1689 = vmatpush.msra.mxu0 %v1318
        %1690 = vmatpush.msra.mxu0 %v1314
        %1691 = vmatpush.msra.mxu0 %v1310
        %1692 = vmatpush.msra.mxu0 %v1306
        %1693 = vmatpush.msra.mxu0 %v1302
        %1694 = vmatpush.msra.mxu0 %v1298
        %1695 = vmatpush.msra.mxu0 %v1294
        %1696 = vmatpush.msra.mxu0 %v1290
        %1697 = vmatpush.msra.mxu0 %v1286
        %1698 = vmatpush.msra.mxu0 %v1282
        %1699 = vmatpush.msra.mxu0 %v1278
        %1700 = vmatpush.msra.mxu0 %v1274
        %1701 = vmatpush.msra.mxu0 %v1270
        %1702 = vmatmul.f32.gmra.mxu0 %v1644
        %v1703 = vpop.f32.mrf.mxu0
        %v1704 = vadd.f32 0.0, %v1703
        %1705 = vdwg.mxu0
        %1706 = vmatpush.msra.mxu0 %v1331
        %1707 = vmatpush.msra.mxu0 %v1327
        %1708 = vmatpush.msra.mxu0 %v1323
        %1709 = vmatpush.msra.mxu0 %v1319
        %1710 = vmatpush.msra.mxu0 %v1315
        %1711 = vmatpush.msra.mxu0 %v1311
        %1712 = vmatpush.msra.mxu0 %v1307
        %1713 = vmatpush.msra.mxu0 %v1303
        %1714 = vmatpush.msra.mxu0 %v1299
        %1715 = vmatpush.msra.mxu0 %v1295
        %1716 = vmatpush.msra.mxu0 %v1291
        %1717 = vmatpush.msra.mxu0 %v1287
        %1718 = vmatpush.msra.mxu0 %v1283
        %1719 = vmatpush.msra.mxu0 %v1279
        %1720 = vmatpush.msra.mxu0 %v1275
        %1721 = vmatpush.msra.mxu0 %v1271
        %1722 = vmatmul.f32.gmra.mxu0 %v1644
        %v1723 = vpop.f32.mrf.mxu0
        %v1724 = vadd.f32 0.0, %v1723
        %1725 = vdwg.mxu0
        %v1730 = vrot.slane %v1664, 6
        %v1731 = vrot.slane %v1684, 6
        %v1732 = vrot.slane %v1704, 6
        %v1733 = vrot.slane %v1724, 6
        %v1738 = vadd.f32 %v1206, %v1730
        %v1739 = vadd.f32 %v1226, %v1731
        %v1740 = vadd.f32 %v1246, %v1732
        %v1741 = vadd.f32 %v1266, %v1733
        %v1742 = vxor.u32 %v1738, 2147483648
        %v1743 = vmul.f32 %v1742, 1.442695
        %v1744 = vpow.pop %v1743
        %v1745 = vadd.f32 %v1744, 1.0
        %v1746 = vrcp.pop %v1745
        %v1747 = vmul.f32 %v1745, %v1746
        %v1748 = vsub.f32 1.0, %v1747
        %v1749 = vmul.f32 %v1746, %v1748
        %v1750 = vadd.f32 %v1746, %v1749
        %vm1751 = vweird.f32 %v1745
        %vm1752 = vweird.f32 %v1746
        %vm1753 = vmor %vm1751, %vm1752
        %v1754 = vsel %vm1753, %v1746, %v1750
        %v1755 = vand.u32 2147483647, %v1745
        %vm1756 = vcmp.eq.f32.partialorder %v1755, 8.507059e+37
        %v1757 = vand.u32 %v1745, 2147483648
        %v1758 = vor.u32 1.1754944e-38, %v1757
        %v1759 = vsel %vm1756, %v1758, %v1754
        %v1760 = vmul.f32 1.0, %v1759
        %v1761 = vxor.u32 %v1739, 2147483648
        %v1762 = vmul.f32 %v1761, 1.442695
        %v1763 = vpow.pop %v1762
        %v1764 = vadd.f32 %v1763, 1.0
        %v1765 = vrcp.pop %v1764
        %v1766 = vmul.f32 %v1764, %v1765
        %v1767 = vsub.f32 1.0, %v1766
        %v1768 = vmul.f32 %v1765, %v1767
        %v1769 = vadd.f32 %v1765, %v1768
        %vm1770 = vweird.f32 %v1764
        %vm1771 = vweird.f32 %v1765
        %vm1772 = vmor %vm1770, %vm1771
        %v1773 = vsel %vm1772, %v1765, %v1769
        %v1774 = vand.u32 2147483647, %v1764
        %vm1775 = vcmp.eq.f32.partialorder %v1774, 8.507059e+37
        %v1776 = vand.u32 %v1764, 2147483648
        %v1777 = vor.u32 1.1754944e-38, %v1776
        %v1778 = vsel %vm1775, %v1777, %v1773
        %v1779 = vmul.f32 1.0, %v1778
        %v1780 = vtanh.pop %v1740
        %v1781 = vxor.u32 %v1741, 2147483648
        %v1782 = vmul.f32 %v1781, 1.442695
        %v1783 = vpow.pop %v1782
        %v1784 = vadd.f32 %v1783, 1.0
        %v1785 = vrcp.pop %v1784
        %v1786 = vmul.f32 %v1784, %v1785
        %v1787 = vsub.f32 1.0, %v1786
        %v1788 = vmul.f32 %v1785, %v1787
        %v1789 = vadd.f32 %v1785, %v1788
        %vm1790 = vweird.f32 %v1784
        %vm1791 = vweird.f32 %v1785
        %vm1792 = vmor %vm1790, %vm1791
        %v1793 = vsel %vm1792, %v1785, %v1789
        %v1794 = vand.u32 2147483647, %v1784
        %vm1795 = vcmp.eq.f32.partialorder %v1794, 8.507059e+37
        %v1796 = vand.u32 %v1784, 2147483648
        %v1797 = vor.u32 1.1754944e-38, %v1796
        %v1798 = vsel %vm1795, %v1797, %v1793
        %v1799 = vmul.f32 1.0, %v1798
        %v1801 = vrot.slane %v1639, 7
        %v1803 = vmul.f32 %v1779, %v1801
        %v1804 = vmul.f32 %v1760, %v1780
        %v1805 = vadd.f32 %v1803, %v1804
        %v1806 = vtanh.pop %v1805
        %v1807 = vmul.f32 %v1799, %v1806
        %1808 = vst [vmem:[#allocation3] sm:$0x4] %v1807
        %v1809 = vld [vmem:[#allocation3] sm:$0x7]
        %v1810 = vld [vmem:[%s8] sm:$0xff]
        %v1811 = vld [vmem:[%s8 + $0x8] sm:$0xff]
        %v1812 = vld [vmem:[%s8 + $0x10] sm:$0xff]
        %v1813 = vld [vmem:[%s8 + $0x18] sm:$0xff]
        %v1814 = vld [vmem:[%s8 + $0x20] sm:$0xff]
        %v1815 = vld [vmem:[%s8 + $0x28] sm:$0xff]
        %v1816 = vld [vmem:[%s8 + $0x30] sm:$0xff]
        %v1817 = vld [vmem:[%s8 + $0x38] sm:$0xff]
        %v1818 = vld [vmem:[%s8 + $0x40] sm:$0xff]
        %v1819 = vld [vmem:[%s8 + $0x48] sm:$0xff]
        %v1820 = vld [vmem:[%s8 + $0x50] sm:$0xff]
        %v1821 = vld [vmem:[%s8 + $0x58] sm:$0xff]
        %v1822 = vld [vmem:[%s8 + $0x60] sm:$0xff]
        %v1823 = vld [vmem:[%s8 + $0x68] sm:$0xff]
        %v1824 = vld [vmem:[%s8 + $0x70] sm:$0xff]
        %v1825 = vld [vmem:[%s8 + $0x78] sm:$0xff]
        %v1826 = vld [vmem:[%s9] sm:$0x1]
        %v1828 = vperm.slane %v1826, 0
        %1830 = vmatpush.msra.mxu0 %v1825
        %1831 = vmatpush.msra.mxu0 %v1824
        %1832 = vmatpush.msra.mxu0 %v1823
        %1833 = vmatpush.msra.mxu0 %v1822
        %1834 = vmatpush.msra.mxu0 %v1821
        %1835 = vmatpush.msra.mxu0 %v1820
        %1836 = vmatpush.msra.mxu0 %v1819
        %1837 = vmatpush.msra.mxu0 %v1818
        %1838 = vmatpush.msra.mxu0 %v1817
        %1839 = vmatpush.msra.mxu0 %v1816
        %1840 = vmatpush.msra.mxu0 %v1815
        %1841 = vmatpush.msra.mxu0 %v1814
        %1842 = vmatpush.msra.mxu0 %v1813
        %1843 = vmatpush.msra.mxu0 %v1812
        %1844 = vmatpush.msra.mxu0 %v1811
        %1845 = vmatpush.msra.mxu0 %v1810
        %1846 = vmatmul.f32.gmra.mxu0 %v1809
        %v1847 = vpop.f32.mrf.mxu0
        %v1848 = vadd.f32 %v1828, %v1847
        %1849 = vdwg.mxu0
        %v1850 = vlaneseq
        %vm1851 = vcmp.ge.s32.totalorder %v1850, 0
        %vm1852 = vcmp.lt.s32.totalorder %v1850, 64
        %vm1853 = vmand %vm1851, %vm1852
        %1854 = vst.msk [vmem:[#allocation2] sm:$0x1] %vm1853, %v1848
        %1856 = vst [vmem:[#allocation1] sm:$0xff] %v1848
        %s1857 = scalar_lea.vmem [#allocation1], 1
        %v1858 = vld [vmem:[%s1857] ss:$9 sm:$0xff]
        %1859 = vrot.lane.b32.xlu0 %v1858, 64
        %v1860 = vpop.permute.xlu0 %1859
        %vm1862 = vcmp.ge.s32.totalorder %v1850, 64
        %vm1863 = vcmp.lt.s32.totalorder %v1850, 128
        %vm1864 = vmand %vm1862, %vm1863
        %1865 = vst.msk [vmem:[#allocation2] sm:$0x1] %vm1864, %v1860
        %1866 = vst [vmem:[#allocation1] sm:$0xff] %v1848
        %s1867 = scalar_lea.vmem [#allocation1], 2
        %v1868 = vld [vmem:[%s1867] ss:$9 sm:$0xff]
        %1870 = vst.msk [vmem:[#allocation2 + $0x1] sm:$0x1] %vm1853, %v1868
        %v1871 = vld [vmem:[%s769] sm:$0xff]
        %v1872 = vld [vmem:[%s769 + $0x8] sm:$0xff]
        %v1873 = vld [vmem:[%s769 + $0x10] sm:$0xff]
        %v1874 = vld [vmem:[%s769 + $0x18] sm:$0xff]
        %v1875 = vld [vmem:[%s769 + $0x20] sm:$0xff]
        %v1876 = vld [vmem:[%s769 + $0x28] sm:$0xff]
        %v1877 = vld [vmem:[%s769 + $0x30] sm:$0xff]
        %v1878 = vld [vmem:[%s769 + $0x38] sm:$0xff]
        %v1879 = vld [vmem:[%s769 + $0x40] sm:$0xff]
        %v1880 = vld [vmem:[%s10] sm:$0xff]
        %v1881 = vld [vmem:[%s10 + $0x8] sm:$0x7f]
        %1883 = vset.pattern.permute.xlu0 0
        %1884 = vperm.xlu0 %1883, %v1871
        %v1885 = vpop.permute.xlu0 %1884
        %1888 = vset.pattern.permute.xlu0 0
        %1889 = vperm.xlu0 %1888, %v1872
        %v1890 = vpop.permute.xlu0 %1889
        %1893 = vset.pattern.permute.xlu0 0
        %1894 = vperm.xlu0 %1893, %v1873
        %v1895 = vpop.permute.xlu0 %1894
        %1898 = vset.pattern.permute.xlu0 0
        %1899 = vperm.xlu0 %1898, %v1874
        %v1900 = vpop.permute.xlu0 %1899
        %1903 = vset.pattern.permute.xlu0 0
        %1904 = vperm.xlu0 %1903, %v1875
        %v1905 = vpop.permute.xlu0 %1904
        %1908 = vset.pattern.permute.xlu0 0
        %1909 = vperm.xlu0 %1908, %v1876
        %v1910 = vpop.permute.xlu0 %1909
        %1913 = vset.pattern.permute.xlu0 0
        %1914 = vperm.xlu0 %1913, %v1877
        %v1915 = vpop.permute.xlu0 %1914
        %1918 = vset.pattern.permute.xlu0 0
        %1919 = vperm.xlu0 %1918, %v1878
        %v1920 = vpop.permute.xlu0 %1919
        %1923 = vset.pattern.permute.xlu0 0
        %1924 = vperm.xlu0 %1923, %v1879
        %v1925 = vpop.permute.xlu0 %1924
        %v1927 = vperm.slane %v1880, 0
        %v1928 = vmul.f32 %v1885, %v1927
        %v1929 = vmul.f32 %v1890, %v1927
        %v1930 = vmul.f32 %v1895, %v1927
        %v1931 = vmul.f32 %v1900, %v1927
        %v1932 = vmul.f32 %v1905, %v1927
        %v1933 = vmul.f32 %v1910, %v1927
        %v1934 = vmul.f32 %v1915, %v1927
        %v1935 = vmul.f32 %v1920, %v1927
        %v1936 = vmul.f32 %v1925, %v1927
        %v1937 = vadd.f32 %v1928, 0.0
        %v1938 = vadd.f32 %v1929, 0.0
        %v1939 = vadd.f32 %v1930, 0.0
        %v1940 = vadd.f32 %v1931, 0.0
        %v1941 = vadd.f32 %v1932, 0.0
        %v1942 = vadd.f32 %v1933, 0.0
        %v1943 = vadd.f32 %v1934, 0.0
        %v1944 = vadd.f32 %v1935, 0.0
        %v1945 = vadd.f32 %v1936, 0.0
        %1946 = vset.pattern.permute.xlu0 1
        %1947 = vperm.xlu0 %1946, %v1871
        %v1948 = vpop.permute.xlu0 %1947
        %1950 = vset.pattern.permute.xlu0 1
        %1951 = vperm.xlu0 %1950, %v1872
        %v1952 = vpop.permute.xlu0 %1951
        %1954 = vset.pattern.permute.xlu0 1
        %1955 = vperm.xlu0 %1954, %v1873
        %v1956 = vpop.permute.xlu0 %1955
        %1958 = vset.pattern.permute.xlu0 1
        %1959 = vperm.xlu0 %1958, %v1874
        %v1960 = vpop.permute.xlu0 %1959
        %1962 = vset.pattern.permute.xlu0 1
        %1963 = vperm.xlu0 %1962, %v1875
        %v1964 = vpop.permute.xlu0 %1963
        %1966 = vset.pattern.permute.xlu0 1
        %1967 = vperm.xlu0 %1966, %v1876
        %v1968 = vpop.permute.xlu0 %1967
        %1970 = vset.pattern.permute.xlu0 1
        %1971 = vperm.xlu0 %1970, %v1877
        %v1972 = vpop.permute.xlu0 %1971
        %1974 = vset.pattern.permute.xlu0 1
        %1975 = vperm.xlu0 %1974, %v1878
        %v1976 = vpop.permute.xlu0 %1975
        %1978 = vset.pattern.permute.xlu0 1
        %1979 = vperm.xlu0 %1978, %v1879
        %v1980 = vpop.permute.xlu0 %1979
        %v1982 = vperm.slane %v1880, 1
        %v1983 = vmul.f32 %v1948, %v1982
        %v1984 = vmul.f32 %v1952, %v1982
        %v1985 = vmul.f32 %v1956, %v1982
        %v1986 = vmul.f32 %v1960, %v1982
        %v1987 = vmul.f32 %v1964, %v1982
        %v1988 = vmul.f32 %v1968, %v1982
        %v1989 = vmul.f32 %v1972, %v1982
        %v1990 = vmul.f32 %v1976, %v1982
        %v1991 = vmul.f32 %v1980, %v1982
        %v1992 = vadd.f32 %v1937, %v1983
        %v1993 = vadd.f32 %v1938, %v1984
        %v1994 = vadd.f32 %v1939, %v1985
        %v1995 = vadd.f32 %v1940, %v1986
        %v1996 = vadd.f32 %v1941, %v1987
        %v1997 = vadd.f32 %v1942, %v1988
        %v1998 = vadd.f32 %v1943, %v1989
        %v1999 = vadd.f32 %v1944, %v1990
        %v2000 = vadd.f32 %v1945, %v1991
        %2001 = vset.pattern.permute.xlu0 2
        %2002 = vperm.xlu0 %2001, %v1871
        %v2003 = vpop.permute.xlu0 %2002
        %2005 = vset.pattern.permute.xlu0 2
        %2006 = vperm.xlu0 %2005, %v1872
        %v2007 = vpop.permute.xlu0 %2006
        %2009 = vset.pattern.permute.xlu0 2
        %2010 = vperm.xlu0 %2009, %v1873
        %v2011 = vpop.permute.xlu0 %2010
        %2013 = vset.pattern.permute.xlu0 2
        %2014 = vperm.xlu0 %2013, %v1874
        %v2015 = vpop.permute.xlu0 %2014
        %2017 = vset.pattern.permute.xlu0 2
        %2018 = vperm.xlu0 %2017, %v1875
        %v2019 = vpop.permute.xlu0 %2018
        %2021 = vset.pattern.permute.xlu0 2
        %2022 = vperm.xlu0 %2021, %v1876
        %v2023 = vpop.permute.xlu0 %2022
        %2025 = vset.pattern.permute.xlu0 2
        %2026 = vperm.xlu0 %2025, %v1877
        %v2027 = vpop.permute.xlu0 %2026
        %2029 = vset.pattern.permute.xlu0 2
        %2030 = vperm.xlu0 %2029, %v1878
        %v2031 = vpop.permute.xlu0 %2030
        %2033 = vset.pattern.permute.xlu0 2
        %2034 = vperm.xlu0 %2033, %v1879
        %v2035 = vpop.permute.xlu0 %2034
        %v2037 = vperm.slane %v1880, 2
        %v2038 = vmul.f32 %v2003, %v2037
        %v2039 = vmul.f32 %v2007, %v2037
        %v2040 = vmul.f32 %v2011, %v2037
        %v2041 = vmul.f32 %v2015, %v2037
        %v2042 = vmul.f32 %v2019, %v2037
        %v2043 = vmul.f32 %v2023, %v2037
        %v2044 = vmul.f32 %v2027, %v2037
        %v2045 = vmul.f32 %v2031, %v2037
        %v2046 = vmul.f32 %v2035, %v2037
        %v2047 = vadd.f32 %v1992, %v2038
        %v2048 = vadd.f32 %v1993, %v2039
        %v2049 = vadd.f32 %v1994, %v2040
        %v2050 = vadd.f32 %v1995, %v2041
        %v2051 = vadd.f32 %v1996, %v2042
        %v2052 = vadd.f32 %v1997, %v2043
        %v2053 = vadd.f32 %v1998, %v2044
        %v2054 = vadd.f32 %v1999, %v2045
        %v2055 = vadd.f32 %v2000, %v2046
        %2056 = vset.pattern.permute.xlu0 3
        %2057 = vperm.xlu0 %2056, %v1871
        %v2058 = vpop.permute.xlu0 %2057
        %2060 = vset.pattern.permute.xlu0 3
        %2061 = vperm.xlu0 %2060, %v1872
        %v2062 = vpop.permute.xlu0 %2061
        %2064 = vset.pattern.permute.xlu0 3
        %2065 = vperm.xlu0 %2064, %v1873
        %v2066 = vpop.permute.xlu0 %2065
        %2068 = vset.pattern.permute.xlu0 3
        %2069 = vperm.xlu0 %2068, %v1874
        %v2070 = vpop.permute.xlu0 %2069
        %2072 = vset.pattern.permute.xlu0 3
        %2073 = vperm.xlu0 %2072, %v1875
        %v2074 = vpop.permute.xlu0 %2073
        %2076 = vset.pattern.permute.xlu0 3
        %2077 = vperm.xlu0 %2076, %v1876
        %v2078 = vpop.permute.xlu0 %2077
        %2080 = vset.pattern.permute.xlu0 3
        %2081 = vperm.xlu0 %2080, %v1877
        %v2082 = vpop.permute.xlu0 %2081
        %2084 = vset.pattern.permute.xlu0 3
        %2085 = vperm.xlu0 %2084, %v1878
        %v2086 = vpop.permute.xlu0 %2085
        %2088 = vset.pattern.permute.xlu0 3
        %2089 = vperm.xlu0 %2088, %v1879
        %v2090 = vpop.permute.xlu0 %2089
        %v2092 = vperm.slane %v1880, 3
        %v2093 = vmul.f32 %v2058, %v2092
        %v2094 = vmul.f32 %v2062, %v2092
        %v2095 = vmul.f32 %v2066, %v2092
        %v2096 = vmul.f32 %v2070, %v2092
        %v2097 = vmul.f32 %v2074, %v2092
        %v2098 = vmul.f32 %v2078, %v2092
        %v2099 = vmul.f32 %v2082, %v2092
        %v2100 = vmul.f32 %v2086, %v2092
        %v2101 = vmul.f32 %v2090, %v2092
        %v2102 = vadd.f32 %v2047, %v2093
        %v2103 = vadd.f32 %v2048, %v2094
        %v2104 = vadd.f32 %v2049, %v2095
        %v2105 = vadd.f32 %v2050, %v2096
        %v2106 = vadd.f32 %v2051, %v2097
        %v2107 = vadd.f32 %v2052, %v2098
        %v2108 = vadd.f32 %v2053, %v2099
        %v2109 = vadd.f32 %v2054, %v2100
        %v2110 = vadd.f32 %v2055, %v2101
        %2111 = vset.pattern.permute.xlu0 4
        %2112 = vperm.xlu0 %2111, %v1871
        %v2113 = vpop.permute.xlu0 %2112
        %2115 = vset.pattern.permute.xlu0 4
        %2116 = vperm.xlu0 %2115, %v1872
        %v2117 = vpop.permute.xlu0 %2116
        %2119 = vset.pattern.permute.xlu0 4
        %2120 = vperm.xlu0 %2119, %v1873
        %v2121 = vpop.permute.xlu0 %2120
        %2123 = vset.pattern.permute.xlu0 4
        %2124 = vperm.xlu0 %2123, %v1874
        %v2125 = vpop.permute.xlu0 %2124
        %2127 = vset.pattern.permute.xlu0 4
        %2128 = vperm.xlu0 %2127, %v1875
        %v2129 = vpop.permute.xlu0 %2128
        %2131 = vset.pattern.permute.xlu0 4
        %2132 = vperm.xlu0 %2131, %v1876
        %v2133 = vpop.permute.xlu0 %2132
        %2135 = vset.pattern.permute.xlu0 4
        %2136 = vperm.xlu0 %2135, %v1877
        %v2137 = vpop.permute.xlu0 %2136
        %2139 = vset.pattern.permute.xlu0 4
        %2140 = vperm.xlu0 %2139, %v1878
        %v2141 = vpop.permute.xlu0 %2140
        %2143 = vset.pattern.permute.xlu0 4
        %2144 = vperm.xlu0 %2143, %v1879
        %v2145 = vpop.permute.xlu0 %2144
        %v2147 = vperm.slane %v1880, 4
        %v2148 = vmul.f32 %v2113, %v2147
        %v2149 = vmul.f32 %v2117, %v2147
        %v2150 = vmul.f32 %v2121, %v2147
        %v2151 = vmul.f32 %v2125, %v2147
        %v2152 = vmul.f32 %v2129, %v2147
        %v2153 = vmul.f32 %v2133, %v2147
        %v2154 = vmul.f32 %v2137, %v2147
        %v2155 = vmul.f32 %v2141, %v2147
        %v2156 = vmul.f32 %v2145, %v2147
        %v2157 = vadd.f32 %v2102, %v2148
        %v2158 = vadd.f32 %v2103, %v2149
        %v2159 = vadd.f32 %v2104, %v2150
        %v2160 = vadd.f32 %v2105, %v2151
        %v2161 = vadd.f32 %v2106, %v2152
        %v2162 = vadd.f32 %v2107, %v2153
        %v2163 = vadd.f32 %v2108, %v2154
        %v2164 = vadd.f32 %v2109, %v2155
        %v2165 = vadd.f32 %v2110, %v2156
        %v2166 = vperm.slane %v1880, 5
        %v2167 = vmul.f32 %v1885, %v2166
        %v2168 = vmul.f32 %v1890, %v2166
        %v2169 = vmul.f32 %v1895, %v2166
        %v2170 = vmul.f32 %v1900, %v2166
        %v2171 = vmul.f32 %v1905, %v2166
        %v2172 = vmul.f32 %v1910, %v2166
        %v2173 = vmul.f32 %v1915, %v2166
        %v2174 = vmul.f32 %v1920, %v2166
        %v2175 = vmul.f32 %v1925, %v2166
        %vm2185 = vcmask 1046528
        %v2186 = vrot.slane %v2167, 1
        %v2187 = vrot.slane %v2168, 1
        %v2188 = vsel %vm2185, %v2186, %v2187
        %v2189 = vrot.slane %v2169, 1
        %v2190 = vsel %vm2185, %v2187, %v2189
        %v2191 = vrot.slane %v2170, 1
        %v2192 = vsel %vm2185, %v2189, %v2191
        %v2193 = vrot.slane %v2171, 1
        %v2194 = vsel %vm2185, %v2191, %v2193
        %v2195 = vrot.slane %v2172, 1
        %v2196 = vsel %vm2185, %v2193, %v2195
        %v2197 = vrot.slane %v2173, 1
        %v2198 = vsel %vm2185, %v2195, %v2197
        %v2199 = vrot.slane %v2174, 1
        %v2200 = vsel %vm2185, %v2197, %v2199
        %v2201 = vrot.slane %v2175, 1
        %v2202 = vsel %vm2185, %v2199, %v2201
        %v2212 = vadd.f32 %v2157, %v2188
        %v2213 = vadd.f32 %v2158, %v2190
        %v2214 = vadd.f32 %v2159, %v2192
        %v2215 = vadd.f32 %v2160, %v2194
        %v2216 = vadd.f32 %v2161, %v2196
        %v2217 = vadd.f32 %v2162, %v2198
        %v2218 = vadd.f32 %v2163, %v2200
        %v2219 = vadd.f32 %v2164, %v2202
        %v2220 = vadd.f32 %v2165, %v2201
        %v2221 = vperm.slane %v1880, 6
        %v2222 = vmul.f32 %v1948, %v2221
        %v2223 = vmul.f32 %v1952, %v2221
        %v2224 = vmul.f32 %v1956, %v2221
        %v2225 = vmul.f32 %v1960, %v2221
        %v2226 = vmul.f32 %v1964, %v2221
        %v2227 = vmul.f32 %v1968, %v2221
        %v2228 = vmul.f32 %v1972, %v2221
        %v2229 = vmul.f32 %v1976, %v2221
        %v2230 = vmul.f32 %v1980, %v2221
        %v2240 = vrot.slane %v2222, 1
        %v2241 = vrot.slane %v2223, 1
        %v2242 = vsel %vm2185, %v2240, %v2241
        %v2243 = vrot.slane %v2224, 1
        %v2244 = vsel %vm2185, %v2241, %v2243
        %v2245 = vrot.slane %v2225, 1
        %v2246 = vsel %vm2185, %v2243, %v2245
        %v2247 = vrot.slane %v2226, 1
        %v2248 = vsel %vm2185, %v2245, %v2247
        %v2249 = vrot.slane %v2227, 1
        %v2250 = vsel %vm2185, %v2247, %v2249
        %v2251 = vrot.slane %v2228, 1
        %v2252 = vsel %vm2185, %v2249, %v2251
        %v2253 = vrot.slane %v2229, 1
        %v2254 = vsel %vm2185, %v2251, %v2253
        %v2255 = vrot.slane %v2230, 1
        %v2256 = vsel %vm2185, %v2253, %v2255
        %v2266 = vadd.f32 %v2212, %v2242
        %v2267 = vadd.f32 %v2213, %v2244
        %v2268 = vadd.f32 %v2214, %v2246
        %v2269 = vadd.f32 %v2215, %v2248
        %v2270 = vadd.f32 %v2216, %v2250
        %v2271 = vadd.f32 %v2217, %v2252
        %v2272 = vadd.f32 %v2218, %v2254
        %v2273 = vadd.f32 %v2219, %v2256
        %v2274 = vadd.f32 %v2220, %v2255
        %v2275 = vperm.slane %v1880, 7
        %v2276 = vmul.f32 %v2003, %v2275
        %v2277 = vmul.f32 %v2007, %v2275
        %v2278 = vmul.f32 %v2011, %v2275
        %v2279 = vmul.f32 %v2015, %v2275
        %v2280 = vmul.f32 %v2019, %v2275
        %v2281 = vmul.f32 %v2023, %v2275
        %v2282 = vmul.f32 %v2027, %v2275
        %v2283 = vmul.f32 %v2031, %v2275
        %v2284 = vmul.f32 %v2035, %v2275
        %v2294 = vrot.slane %v2276, 1
        %v2295 = vrot.slane %v2277, 1
        %v2296 = vsel %vm2185, %v2294, %v2295
        %v2297 = vrot.slane %v2278, 1
        %v2298 = vsel %vm2185, %v2295, %v2297
        %v2299 = vrot.slane %v2279, 1
        %v2300 = vsel %vm2185, %v2297, %v2299
        %v2301 = vrot.slane %v2280, 1
        %v2302 = vsel %vm2185, %v2299, %v2301
        %v2303 = vrot.slane %v2281, 1
        %v2304 = vsel %vm2185, %v2301, %v2303
        %v2305 = vrot.slane %v2282, 1
        %v2306 = vsel %vm2185, %v2303, %v2305
        %v2307 = vrot.slane %v2283, 1
        %v2308 = vsel %vm2185, %v2305, %v2307
        %v2309 = vrot.slane %v2284, 1
        %v2310 = vsel %vm2185, %v2307, %v2309
        %v2320 = vadd.f32 %v2266, %v2296
        %v2321 = vadd.f32 %v2267, %v2298
        %v2322 = vadd.f32 %v2268, %v2300
        %v2323 = vadd.f32 %v2269, %v2302
        %v2324 = vadd.f32 %v2270, %v2304
        %v2325 = vadd.f32 %v2271, %v2306
        %v2326 = vadd.f32 %v2272, %v2308
        %v2327 = vadd.f32 %v2273, %v2310
        %v2328 = vadd.f32 %v2274, %v2309
        %v2329 = vperm.slane %v1881, 0
        %v2330 = vmul.f32 %v2058, %v2329
        %v2331 = vmul.f32 %v2062, %v2329
        %v2332 = vmul.f32 %v2066, %v2329
        %v2333 = vmul.f32 %v2070, %v2329
        %v2334 = vmul.f32 %v2074, %v2329
        %v2335 = vmul.f32 %v2078, %v2329
        %v2336 = vmul.f32 %v2082, %v2329
        %v2337 = vmul.f32 %v2086, %v2329
        %v2338 = vmul.f32 %v2090, %v2329
        %v2348 = vrot.slane %v2330, 1
        %v2349 = vrot.slane %v2331, 1
        %v2350 = vsel %vm2185, %v2348, %v2349
        %v2351 = vrot.slane %v2332, 1
        %v2352 = vsel %vm2185, %v2349, %v2351
        %v2353 = vrot.slane %v2333, 1
        %v2354 = vsel %vm2185, %v2351, %v2353
        %v2355 = vrot.slane %v2334, 1
        %v2356 = vsel %vm2185, %v2353, %v2355
        %v2357 = vrot.slane %v2335, 1
        %v2358 = vsel %vm2185, %v2355, %v2357
        %v2359 = vrot.slane %v2336, 1
        %v2360 = vsel %vm2185, %v2357, %v2359
        %v2361 = vrot.slane %v2337, 1
        %v2362 = vsel %vm2185, %v2359, %v2361
        %v2363 = vrot.slane %v2338, 1
        %v2364 = vsel %vm2185, %v2361, %v2363
        %v2374 = vadd.f32 %v2320, %v2350
        %v2375 = vadd.f32 %v2321, %v2352
        %v2376 = vadd.f32 %v2322, %v2354
        %v2377 = vadd.f32 %v2323, %v2356
        %v2378 = vadd.f32 %v2324, %v2358
        %v2379 = vadd.f32 %v2325, %v2360
        %v2380 = vadd.f32 %v2326, %v2362
        %v2381 = vadd.f32 %v2327, %v2364
        %v2382 = vadd.f32 %v2328, %v2363
        %v2383 = vperm.slane %v1881, 1
        %v2384 = vmul.f32 %v2113, %v2383
        %v2385 = vmul.f32 %v2117, %v2383
        %v2386 = vmul.f32 %v2121, %v2383
        %v2387 = vmul.f32 %v2125, %v2383
        %v2388 = vmul.f32 %v2129, %v2383
        %v2389 = vmul.f32 %v2133, %v2383
        %v2390 = vmul.f32 %v2137, %v2383
        %v2391 = vmul.f32 %v2141, %v2383
        %v2392 = vmul.f32 %v2145, %v2383
        %v2402 = vrot.slane %v2384, 1
        %v2403 = vrot.slane %v2385, 1
        %v2404 = vsel %vm2185, %v2402, %v2403
        %v2405 = vrot.slane %v2386, 1
        %v2406 = vsel %vm2185, %v2403, %v2405
        %v2407 = vrot.slane %v2387, 1
        %v2408 = vsel %vm2185, %v2405, %v2407
        %v2409 = vrot.slane %v2388, 1
        %v2410 = vsel %vm2185, %v2407, %v2409
        %v2411 = vrot.slane %v2389, 1
        %v2412 = vsel %vm2185, %v2409, %v2411
        %v2413 = vrot.slane %v2390, 1
        %v2414 = vsel %vm2185, %v2411, %v2413
        %v2415 = vrot.slane %v2391, 1
        %v2416 = vsel %vm2185, %v2413, %v2415
        %v2417 = vrot.slane %v2392, 1
        %v2418 = vsel %vm2185, %v2415, %v2417
        %v2428 = vadd.f32 %v2374, %v2404
        %v2429 = vadd.f32 %v2375, %v2406
        %v2430 = vadd.f32 %v2376, %v2408
        %v2431 = vadd.f32 %v2377, %v2410
        %v2432 = vadd.f32 %v2378, %v2412
        %v2433 = vadd.f32 %v2379, %v2414
        %v2434 = vadd.f32 %v2380, %v2416
        %v2435 = vadd.f32 %v2381, %v2418
        %v2436 = vadd.f32 %v2382, %v2417
        %v2437 = vperm.slane %v1881, 2
        %v2438 = vmul.f32 %v1885, %v2437
        %v2439 = vmul.f32 %v1890, %v2437
        %v2440 = vmul.f32 %v1895, %v2437
        %v2441 = vmul.f32 %v1900, %v2437
        %v2442 = vmul.f32 %v1905, %v2437
        %v2443 = vmul.f32 %v1910, %v2437
        %v2444 = vmul.f32 %v1915, %v2437
        %v2445 = vmul.f32 %v1920, %v2437
        %v2446 = vmul.f32 %v1925, %v2437
        %vm2456 = vcmask 1045504
        %v2457 = vrot.slane %v2438, 2
        %v2458 = vrot.slane %v2439, 2
        %v2459 = vsel %vm2456, %v2457, %v2458
        %v2460 = vrot.slane %v2440, 2
        %v2461 = vsel %vm2456, %v2458, %v2460
        %v2462 = vrot.slane %v2441, 2
        %v2463 = vsel %vm2456, %v2460, %v2462
        %v2464 = vrot.slane %v2442, 2
        %v2465 = vsel %vm2456, %v2462, %v2464
        %v2466 = vrot.slane %v2443, 2
        %v2467 = vsel %vm2456, %v2464, %v2466
        %v2468 = vrot.slane %v2444, 2
        %v2469 = vsel %vm2456, %v2466, %v2468
        %v2470 = vrot.slane %v2445, 2
        %v2471 = vsel %vm2456, %v2468, %v2470
        %v2472 = vrot.slane %v2446, 2
        %v2473 = vsel %vm2456, %v2470, %v2472
        %v2483 = vadd.f32 %v2428, %v2459
        %v2484 = vadd.f32 %v2429, %v2461
        %v2485 = vadd.f32 %v2430, %v2463
        %v2486 = vadd.f32 %v2431, %v2465
        %v2487 = vadd.f32 %v2432, %v2467
        %v2488 = vadd.f32 %v2433, %v2469
        %v2489 = vadd.f32 %v2434, %v2471
        %v2490 = vadd.f32 %v2435, %v2473
        %v2491 = vadd.f32 %v2436, %v2472
        %v2492 = vperm.slane %v1881, 3
        %v2493 = vmul.f32 %v1948, %v2492
        %v2494 = vmul.f32 %v1952, %v2492
        %v2495 = vmul.f32 %v1956, %v2492
        %v2496 = vmul.f32 %v1960, %v2492
        %v2497 = vmul.f32 %v1964, %v2492
        %v2498 = vmul.f32 %v1968, %v2492
        %v2499 = vmul.f32 %v1972, %v2492
        %v2500 = vmul.f32 %v1976, %v2492
        %v2501 = vmul.f32 %v1980, %v2492
        %v2511 = vrot.slane %v2493, 2
        %v2512 = vrot.slane %v2494, 2
        %v2513 = vsel %vm2456, %v2511, %v2512
        %v2514 = vrot.slane %v2495, 2
        %v2515 = vsel %vm2456, %v2512, %v2514
        %v2516 = vrot.slane %v2496, 2
        %v2517 = vsel %vm2456, %v2514, %v2516
        %v2518 = vrot.slane %v2497, 2
        %v2519 = vsel %vm2456, %v2516, %v2518
        %v2520 = vrot.slane %v2498, 2
        %v2521 = vsel %vm2456, %v2518, %v2520
        %v2522 = vrot.slane %v2499, 2
        %v2523 = vsel %vm2456, %v2520, %v2522
        %v2524 = vrot.slane %v2500, 2
        %v2525 = vsel %vm2456, %v2522, %v2524
        %v2526 = vrot.slane %v2501, 2
        %v2527 = vsel %vm2456, %v2524, %v2526
        %v2537 = vadd.f32 %v2483, %v2513
        %v2538 = vadd.f32 %v2484, %v2515
        %v2539 = vadd.f32 %v2485, %v2517
        %v2540 = vadd.f32 %v2486, %v2519
        %v2541 = vadd.f32 %v2487, %v2521
        %v2542 = vadd.f32 %v2488, %v2523
        %v2543 = vadd.f32 %v2489, %v2525
        %v2544 = vadd.f32 %v2490, %v2527
        %v2545 = vadd.f32 %v2491, %v2526
        %v2546 = vperm.slane %v1881, 4
        %v2547 = vmul.f32 %v2003, %v2546
        %v2548 = vmul.f32 %v2007, %v2546
        %v2549 = vmul.f32 %v2011, %v2546
        %v2550 = vmul.f32 %v2015, %v2546
        %v2551 = vmul.f32 %v2019, %v2546
        %v2552 = vmul.f32 %v2023, %v2546
        %v2553 = vmul.f32 %v2027, %v2546
        %v2554 = vmul.f32 %v2031, %v2546
        %v2555 = vmul.f32 %v2035, %v2546
        %v2565 = vrot.slane %v2547, 2
        %v2566 = vrot.slane %v2548, 2
        %v2567 = vsel %vm2456, %v2565, %v2566
        %v2568 = vrot.slane %v2549, 2
        %v2569 = vsel %vm2456, %v2566, %v2568
        %v2570 = vrot.slane %v2550, 2
        %v2571 = vsel %vm2456, %v2568, %v2570
        %v2572 = vrot.slane %v2551, 2
        %v2573 = vsel %vm2456, %v2570, %v2572
        %v2574 = vrot.slane %v2552, 2
        %v2575 = vsel %vm2456, %v2572, %v2574
        %v2576 = vrot.slane %v2553, 2
        %v2577 = vsel %vm2456, %v2574, %v2576
        %v2578 = vrot.slane %v2554, 2
        %v2579 = vsel %vm2456, %v2576, %v2578
        %v2580 = vrot.slane %v2555, 2
        %v2581 = vsel %vm2456, %v2578, %v2580
        %v2591 = vadd.f32 %v2537, %v2567
        %v2592 = vadd.f32 %v2538, %v2569
        %v2593 = vadd.f32 %v2539, %v2571
        %v2594 = vadd.f32 %v2540, %v2573
        %v2595 = vadd.f32 %v2541, %v2575
        %v2596 = vadd.f32 %v2542, %v2577
        %v2597 = vadd.f32 %v2543, %v2579
        %v2598 = vadd.f32 %v2544, %v2581
        %v2599 = vadd.f32 %v2545, %v2580
        %v2600 = vperm.slane %v1881, 5
        %v2601 = vmul.f32 %v2058, %v2600
        %v2602 = vmul.f32 %v2062, %v2600
        %v2603 = vmul.f32 %v2066, %v2600
        %v2604 = vmul.f32 %v2070, %v2600
        %v2605 = vmul.f32 %v2074, %v2600
        %v2606 = vmul.f32 %v2078, %v2600
        %v2607 = vmul.f32 %v2082, %v2600
        %v2608 = vmul.f32 %v2086, %v2600
        %v2609 = vmul.f32 %v2090, %v2600
        %v2619 = vrot.slane %v2601, 2
        %v2620 = vrot.slane %v2602, 2
        %v2621 = vsel %vm2456, %v2619, %v2620
        %v2622 = vrot.slane %v2603, 2
        %v2623 = vsel %vm2456, %v2620, %v2622
        %v2624 = vrot.slane %v2604, 2
        %v2625 = vsel %vm2456, %v2622, %v2624
        %v2626 = vrot.slane %v2605, 2
        %v2627 = vsel %vm2456, %v2624, %v2626
        %v2628 = vrot.slane %v2606, 2
        %v2629 = vsel %vm2456, %v2626, %v2628
        %v2630 = vrot.slane %v2607, 2
        %v2631 = vsel %vm2456, %v2628, %v2630
        %v2632 = vrot.slane %v2608, 2
        %v2633 = vsel %vm2456, %v2630, %v2632
        %v2634 = vrot.slane %v2609, 2
        %v2635 = vsel %vm2456, %v2632, %v2634
        %v2645 = vadd.f32 %v2591, %v2621
        %v2646 = vadd.f32 %v2592, %v2623
        %v2647 = vadd.f32 %v2593, %v2625
        %v2648 = vadd.f32 %v2594, %v2627
        %v2649 = vadd.f32 %v2595, %v2629
        %v2650 = vadd.f32 %v2596, %v2631
        %v2651 = vadd.f32 %v2597, %v2633
        %v2652 = vadd.f32 %v2598, %v2635
        %v2653 = vadd.f32 %v2599, %v2634
        %v2654 = vperm.slane %v1881, 6
        %v2655 = vmul.f32 %v2113, %v2654
        %v2656 = vmul.f32 %v2117, %v2654
        %v2657 = vmul.f32 %v2121, %v2654
        %v2658 = vmul.f32 %v2125, %v2654
        %v2659 = vmul.f32 %v2129, %v2654
        %v2660 = vmul.f32 %v2133, %v2654
        %v2661 = vmul.f32 %v2137, %v2654
        %v2662 = vmul.f32 %v2141, %v2654
        %v2663 = vmul.f32 %v2145, %v2654
        %v2673 = vrot.slane %v2655, 2
        %v2674 = vrot.slane %v2656, 2
        %v2675 = vsel %vm2456, %v2673, %v2674
        %v2676 = vrot.slane %v2657, 2
        %v2677 = vsel %vm2456, %v2674, %v2676
        %v2678 = vrot.slane %v2658, 2
        %v2679 = vsel %vm2456, %v2676, %v2678
        %v2680 = vrot.slane %v2659, 2
        %v2681 = vsel %vm2456, %v2678, %v2680
        %v2682 = vrot.slane %v2660, 2
        %v2683 = vsel %vm2456, %v2680, %v2682
        %v2684 = vrot.slane %v2661, 2
        %v2685 = vsel %vm2456, %v2682, %v2684
        %v2686 = vrot.slane %v2662, 2
        %v2687 = vsel %vm2456, %v2684, %v2686
        %v2688 = vrot.slane %v2663, 2
        %v2689 = vsel %vm2456, %v2686, %v2688
        %v2699 = vadd.f32 %v2645, %v2675
        %v2700 = vadd.f32 %v2646, %v2677
        %v2701 = vadd.f32 %v2647, %v2679
        %v2702 = vadd.f32 %v2648, %v2681
        %v2703 = vadd.f32 %v2649, %v2683
        %v2704 = vadd.f32 %v2650, %v2685
        %v2705 = vadd.f32 %v2651, %v2687
        %v2706 = vadd.f32 %v2652, %v2689
        %v2707 = vadd.f32 %v2653, %v2688
        %v2708 = vld [vmem:[%s11] sm:$0x1]
        %v2710 = vperm.slane %v2708, 0
        %v2712 = vadd.f32 %v2699, %v2710
        %v2713 = vadd.f32 %v2700, %v2710
        %v2714 = vadd.f32 %v2701, %v2710
        %v2715 = vadd.f32 %v2702, %v2710
        %v2716 = vadd.f32 %v2703, %v2710
        %v2717 = vadd.f32 %v2704, %v2710
        %v2718 = vadd.f32 %v2705, %v2710
        %v2719 = vadd.f32 %v2706, %v2710
        %v2720 = vadd.f32 %v2707, %v2710
        %v2721 = vmax.f32 %v2712, 0.0
        %v2722 = vmax.f32 %v2713, 0.0
        %v2723 = vmax.f32 %v2714, 0.0
        %v2724 = vmax.f32 %v2715, 0.0
        %v2725 = vmax.f32 %v2716, 0.0
        %v2726 = vmax.f32 %v2717, 0.0
        %v2727 = vmax.f32 %v2718, 0.0
        %v2728 = vmax.f32 %v2719, 0.0
        %v2729 = vmax.f32 %v2720, 0.0
        %v2739 = vrot.slane %v2721, 1
        %v2740 = vrot.slane %v2722, 1
        %v2741 = vsel %vm2185, %v2739, %v2740
        %v2742 = vrot.slane %v2723, 1
        %v2743 = vsel %vm2185, %v2740, %v2742
        %v2744 = vrot.slane %v2724, 1
        %v2745 = vsel %vm2185, %v2742, %v2744
        %v2746 = vrot.slane %v2725, 1
        %v2747 = vsel %vm2185, %v2744, %v2746
        %v2748 = vrot.slane %v2726, 1
        %v2749 = vsel %vm2185, %v2746, %v2748
        %v2750 = vrot.slane %v2727, 1
        %v2751 = vsel %vm2185, %v2748, %v2750
        %v2752 = vrot.slane %v2728, 1
        %v2753 = vsel %vm2185, %v2750, %v2752
        %v2754 = vrot.slane %v2729, 1
        %v2755 = vsel %vm2185, %v2752, %v2754
        %v2765 = vmax.f32 %v2721, %v2741
        %v2766 = vmax.f32 %v2722, %v2743
        %v2767 = vmax.f32 %v2723, %v2745
        %v2768 = vmax.f32 %v2724, %v2747
        %v2769 = vmax.f32 %v2725, %v2749
        %v2770 = vmax.f32 %v2726, %v2751
        %v2771 = vmax.f32 %v2727, %v2753
        %v2772 = vmax.f32 %v2728, %v2755
        %v2773 = vmax.f32 %v2729, %v2754
        %v2774 = vrot.slane %v2721, 2
        %v2775 = vrot.slane %v2722, 2
        %v2776 = vsel %vm2456, %v2774, %v2775
        %v2777 = vrot.slane %v2723, 2
        %v2778 = vsel %vm2456, %v2775, %v2777
        %v2779 = vrot.slane %v2724, 2
        %v2780 = vsel %vm2456, %v2777, %v2779
        %v2781 = vrot.slane %v2725, 2
        %v2782 = vsel %vm2456, %v2779, %v2781
        %v2783 = vrot.slane %v2726, 2
        %v2784 = vsel %vm2456, %v2781, %v2783
        %v2785 = vrot.slane %v2727, 2
        %v2786 = vsel %vm2456, %v2783, %v2785
        %v2787 = vrot.slane %v2728, 2
        %v2788 = vsel %vm2456, %v2785, %v2787
        %v2789 = vrot.slane %v2729, 2
        %v2790 = vsel %vm2456, %v2787, %v2789
        %v2800 = vmax.f32 %v2765, %v2776
        %v2801 = vmax.f32 %v2766, %v2778
        %v2802 = vmax.f32 %v2767, %v2780
        %v2803 = vmax.f32 %v2768, %v2782
        %v2804 = vmax.f32 %v2769, %v2784
        %v2805 = vmax.f32 %v2770, %v2786
        %v2806 = vmax.f32 %v2771, %v2788
        %v2807 = vmax.f32 %v2772, %v2790
        %v2808 = vmax.f32 %v2773, %v2789
        %v2809 = vld [vmem:[%s12] sm:$0x7]
        %v2810 = vld [vmem:[%s13] sm:$0x7]
        %2812 = vset.pattern.permute.xlu0 0
        %2813 = vperm.xlu0 %2812, %v2810
        %v2814 = vpop.permute.xlu0 %2813
        %vm2816 = vcmask 556032
        %v2818 = vsel %vm2816, %v2809, 0
        %vm2820 = vcmask 1043456
        %v2822 = vsel %vm2820, %v2808, 0
        %2824 = vmatpush.msra.mxu0 0.0
        %2825 = vmatpush.msra.mxu0 0.0
        %2826 = vmatpush.msra.mxu0 0.0
        %2827 = vmatpush.msra.mxu0 0.0
        %2828 = vmatpush.msra.mxu0 0.0
        %2829 = vmatpush.msra.mxu0 0.0
        %2830 = vmatpush.msra.mxu0 0.0
        %2831 = vmatpush.msra.mxu0 %v2822
        %2832 = vmatpush.msra.mxu0 %v2807
        %2833 = vmatpush.msra.mxu0 %v2806
        %2834 = vmatpush.msra.mxu0 %v2805
        %2835 = vmatpush.msra.mxu0 %v2804
        %2836 = vmatpush.msra.mxu0 %v2803
        %2837 = vmatpush.msra.mxu0 %v2802
        %2838 = vmatpush.msra.mxu0 %v2801
        %2839 = vmatpush.msra.mxu0 %v2800
        %2840 = vmatmul.f32.gmra.mxu0 %v2818
        %v2841 = vpop.f32.mrf.mxu0
        %v2842 = vadd.f32 %v2814, %v2841
        %2843 = vdwg.mxu0
        %2845 = vrot.lane.b32.xlu0 %v2842, 64
        %v2846 = vpop.permute.xlu0 %2845
        %2848 = vst.msk [vmem:[#allocation2 + $0x1] sm:$0x1] %vm1864, %v2846
        %2849 = vst [vmem:[#allocation1] sm:$0xff] %v2842
        %s2850 = scalar_lea.vmem [#allocation1], 1
        %v2851 = vld [vmem:[%s2850] ss:$9 sm:$0xff]
        %2853 = vst.msk [vmem:[#allocation2 + $0x2] sm:$0x1] %vm1853, %v2851
        %2854 = vst [vmem:[#allocation1] sm:$0xff] %v2842
        %s2855 = scalar_lea.vmem [#allocation1], 2
        %v2856 = vld [vmem:[%s2855] ss:$9 sm:$0xff]
        %2857 = vrot.lane.b32.xlu0 %v2856, 64
        %v2858 = vpop.permute.xlu0 %2857
        %2860 = vst.msk [vmem:[#allocation2 + $0x2] sm:$0x1] %vm1864, %v2858
        %v2861 = vld [vmem:[%s774] sm:$0xff]
        %v2862 = vld [vmem:[%s774 + $0x8] sm:$0xff]
        %v2863 = vld [vmem:[%s774 + $0x10] sm:$0xff]
        %v2864 = vld [vmem:[%s774 + $0x18] sm:$0xff]
        %v2865 = vld [vmem:[%s774 + $0x20] sm:$0xff]
        %v2866 = vld [vmem:[%s774 + $0x28] sm:$0xff]
        %v2867 = vld [vmem:[%s774 + $0x30] sm:$0xff]
        %v2868 = vld [vmem:[%s774 + $0x38] sm:$0xff]
        %v2869 = vld [vmem:[%s774 + $0x40] sm:$0xff]
        %v2870 = vld [vmem:[%s774 + $0x48] sm:$0xff]
        %v2871 = vld [vmem:[%s774 + $0x50] sm:$0xff]
        %v2872 = vld [vmem:[%s774 + $0x58] sm:$0xff]
        %v2873 = vld [vmem:[%s774 + $0x60] sm:$0xff]
        %v2874 = vld [vmem:[%s774 + $0x68] sm:$0xff]
        %v2875 = vld [vmem:[%s774 + $0x70] sm:$0xff]
        %v2876 = vld [vmem:[%s774 + $0x78] sm:$0xff]
        %v2877 = vld [vmem:[%s774 + $0x80] sm:$0xff]
        %v2878 = vld [vmem:[%s774 + $0x88] sm:$0xff]
        %v2879 = vld [vmem:[%s774 + $0x90] sm:$0xff]
        %v2880 = vld [vmem:[%s774 + $0x98] sm:$0xff]
        %v2881 = vld [vmem:[%s774 + $0xa0] sm:$0xff]
        %v2882 = vld [vmem:[%s774 + $0xa8] sm:$0xff]
        %v2883 = vld [vmem:[%s774 + $0xb0] sm:$0xff]
        %v2884 = vld [vmem:[%s774 + $0xb8] sm:$0xff]
        %v2885 = vld [vmem:[%s774 + $0xc0] sm:$0xff]
        %v2886 = vld [vmem:[%s774 + $0xc8] sm:$0xff]
        %v2887 = vld [vmem:[%s774 + $0xd0] sm:$0xff]
        %v2888 = vld [vmem:[%s774 + $0xd8] sm:$0xff]
        %v2889 = vld [vmem:[%s774 + $0xe0] sm:$0xff]
        %v2890 = vld [vmem:[%s774 + $0xe8] sm:$0xff]
        %v2891 = vld [vmem:[%s774 + $0xf0] sm:$0xff]
        %v2892 = vld [vmem:[%s774 + $0xf8] sm:$0xff]
        %v2893 = vld [vmem:[%s774 + $0x100] sm:$0xff]
        %v2894 = vld [vmem:[%s774 + $0x108] sm:$0xff]
        %v2895 = vld [vmem:[%s774 + $0x110] sm:$0xff]
        %v2896 = vld [vmem:[%s774 + $0x118] sm:$0xff]
        %v2897 = vld [vmem:[%s774 + $0x120] sm:$0xff]
        %v2898 = vld [vmem:[%s774 + $0x128] sm:$0xff]
        %v2899 = vld [vmem:[%s774 + $0x130] sm:$0xff]
        %v2900 = vld [vmem:[%s774 + $0x138] sm:$0xff]
        %v2901 = vld [vmem:[%s774 + $0x140] sm:$0xff]
        %v2902 = vld [vmem:[%s14] sm:$0x3f]
        %2904 = vset.pattern.permute.xlu0 0
        %2905 = vperm.xlu0 %2904, %v2861
        %v2906 = vpop.permute.xlu0 %2905
        %2909 = vset.pattern.permute.xlu0 0
        %2910 = vperm.xlu0 %2909, %v2862
        %v2911 = vpop.permute.xlu0 %2910
        %2914 = vset.pattern.permute.xlu0 0
        %2915 = vperm.xlu0 %2914, %v2863
        %v2916 = vpop.permute.xlu0 %2915
        %2919 = vset.pattern.permute.xlu0 0
        %2920 = vperm.xlu0 %2919, %v2864
        %v2921 = vpop.permute.xlu0 %2920
        %2924 = vset.pattern.permute.xlu0 0
        %2925 = vperm.xlu0 %2924, %v2865
        %v2926 = vpop.permute.xlu0 %2925
        %2929 = vset.pattern.permute.xlu0 0
        %2930 = vperm.xlu0 %2929, %v2866
        %v2931 = vpop.permute.xlu0 %2930
        %2934 = vset.pattern.permute.xlu0 0
        %2935 = vperm.xlu0 %2934, %v2867
        %v2936 = vpop.permute.xlu0 %2935
        %2939 = vset.pattern.permute.xlu0 0
        %2940 = vperm.xlu0 %2939, %v2868
        %v2941 = vpop.permute.xlu0 %2940
        %2944 = vset.pattern.permute.xlu0 0
        %2945 = vperm.xlu0 %2944, %v2869
        %v2946 = vpop.permute.xlu0 %2945
        %2949 = vset.pattern.permute.xlu0 0
        %2950 = vperm.xlu0 %2949, %v2870
        %v2951 = vpop.permute.xlu0 %2950
        %2954 = vset.pattern.permute.xlu0 0
        %2955 = vperm.xlu0 %2954, %v2871
        %v2956 = vpop.permute.xlu0 %2955
        %2959 = vset.pattern.permute.xlu0 0
        %2960 = vperm.xlu0 %2959, %v2872
        %v2961 = vpop.permute.xlu0 %2960
        %2964 = vset.pattern.permute.xlu0 0
        %2965 = vperm.xlu0 %2964, %v2873
        %v2966 = vpop.permute.xlu0 %2965
        %2969 = vset.pattern.permute.xlu0 0
        %2970 = vperm.xlu0 %2969, %v2874
        %v2971 = vpop.permute.xlu0 %2970
        %2974 = vset.pattern.permute.xlu0 0
        %2975 = vperm.xlu0 %2974, %v2875
        %v2976 = vpop.permute.xlu0 %2975
        %2979 = vset.pattern.permute.xlu0 0
        %2980 = vperm.xlu0 %2979, %v2876
        %v2981 = vpop.permute.xlu0 %2980
        %2984 = vset.pattern.permute.xlu0 0
        %2985 = vperm.xlu0 %2984, %v2877
        %v2986 = vpop.permute.xlu0 %2985
        %2989 = vset.pattern.permute.xlu0 0
        %2990 = vperm.xlu0 %2989, %v2878
        %v2991 = vpop.permute.xlu0 %2990
        %2994 = vset.pattern.permute.xlu0 0
        %2995 = vperm.xlu0 %2994, %v2879
        %v2996 = vpop.permute.xlu0 %2995
        %2999 = vset.pattern.permute.xlu0 0
        %3000 = vperm.xlu0 %2999, %v2880
        %v3001 = vpop.permute.xlu0 %3000
        %3004 = vset.pattern.permute.xlu0 0
        %3005 = vperm.xlu0 %3004, %v2881
        %v3006 = vpop.permute.xlu0 %3005
        %3009 = vset.pattern.permute.xlu0 0
        %3010 = vperm.xlu0 %3009, %v2882
        %v3011 = vpop.permute.xlu0 %3010
        %3014 = vset.pattern.permute.xlu0 0
        %3015 = vperm.xlu0 %3014, %v2883
        %v3016 = vpop.permute.xlu0 %3015
        %3019 = vset.pattern.permute.xlu0 0
        %3020 = vperm.xlu0 %3019, %v2884
        %v3021 = vpop.permute.xlu0 %3020
        %3024 = vset.pattern.permute.xlu0 0
        %3025 = vperm.xlu0 %3024, %v2885
        %v3026 = vpop.permute.xlu0 %3025
        %3029 = vset.pattern.permute.xlu0 0
        %3030 = vperm.xlu0 %3029, %v2886
        %v3031 = vpop.permute.xlu0 %3030
        %3034 = vset.pattern.permute.xlu0 0
        %3035 = vperm.xlu0 %3034, %v2887
        %v3036 = vpop.permute.xlu0 %3035
        %3039 = vset.pattern.permute.xlu0 0
        %3040 = vperm.xlu0 %3039, %v2888
        %v3041 = vpop.permute.xlu0 %3040
        %3044 = vset.pattern.permute.xlu0 0
        %3045 = vperm.xlu0 %3044, %v2889
        %v3046 = vpop.permute.xlu0 %3045
        %3049 = vset.pattern.permute.xlu0 0
        %3050 = vperm.xlu0 %3049, %v2890
        %v3051 = vpop.permute.xlu0 %3050
        %3054 = vset.pattern.permute.xlu0 0
        %3055 = vperm.xlu0 %3054, %v2891
        %v3056 = vpop.permute.xlu0 %3055
        %3059 = vset.pattern.permute.xlu0 0
        %3060 = vperm.xlu0 %3059, %v2892
        %v3061 = vpop.permute.xlu0 %3060
        %3064 = vset.pattern.permute.xlu0 0
        %3065 = vperm.xlu0 %3064, %v2893
        %v3066 = vpop.permute.xlu0 %3065
        %3069 = vset.pattern.permute.xlu0 0
        %3070 = vperm.xlu0 %3069, %v2894
        %v3071 = vpop.permute.xlu0 %3070
        %3074 = vset.pattern.permute.xlu0 0
        %3075 = vperm.xlu0 %3074, %v2895
        %v3076 = vpop.permute.xlu0 %3075
        %3079 = vset.pattern.permute.xlu0 0
        %3080 = vperm.xlu0 %3079, %v2896
        %v3081 = vpop.permute.xlu0 %3080
        %3084 = vset.pattern.permute.xlu0 0
        %3085 = vperm.xlu0 %3084, %v2897
        %v3086 = vpop.permute.xlu0 %3085
        %3089 = vset.pattern.permute.xlu0 0
        %3090 = vperm.xlu0 %3089, %v2898
        %v3091 = vpop.permute.xlu0 %3090
        %3094 = vset.pattern.permute.xlu0 0
        %3095 = vperm.xlu0 %3094, %v2899
        %v3096 = vpop.permute.xlu0 %3095
        %3099 = vset.pattern.permute.xlu0 0
        %3100 = vperm.xlu0 %3099, %v2900
        %v3101 = vpop.permute.xlu0 %3100
        %3104 = vset.pattern.permute.xlu0 0
        %3105 = vperm.xlu0 %3104, %v2901
        %v3106 = vpop.permute.xlu0 %3105
        %v3108 = vperm.slane %v2902, 0
        %v3109 = vmul.f32 %v2906, %v3108
        %v3110 = vmul.f32 %v2911, %v3108
        %v3111 = vmul.f32 %v2916, %v3108
        %v3112 = vmul.f32 %v2921, %v3108
        %v3113 = vmul.f32 %v2926, %v3108
        %v3114 = vmul.f32 %v2931, %v3108
        %v3115 = vmul.f32 %v2936, %v3108
        %v3116 = vmul.f32 %v2941, %v3108
        %v3117 = vmul.f32 %v2946, %v3108
        %v3118 = vmul.f32 %v2951, %v3108
        %v3119 = vmul.f32 %v2956, %v3108
        %v3120 = vmul.f32 %v2961, %v3108
        %v3121 = vmul.f32 %v2966, %v3108
        %v3122 = vmul.f32 %v2971, %v3108
        %v3123 = vmul.f32 %v2976, %v3108
        %v3124 = vmul.f32 %v2981, %v3108
        %v3125 = vmul.f32 %v2986, %v3108
        %v3126 = vmul.f32 %v2991, %v3108
        %v3127 = vmul.f32 %v2996, %v3108
        %v3128 = vmul.f32 %v3001, %v3108
        %v3129 = vmul.f32 %v3006, %v3108
        %v3130 = vmul.f32 %v3011, %v3108
        %v3131 = vmul.f32 %v3016, %v3108
        %v3132 = vmul.f32 %v3021, %v3108
        %v3133 = vmul.f32 %v3026, %v3108
        %v3134 = vmul.f32 %v3031, %v3108
        %v3135 = vmul.f32 %v3036, %v3108
        %v3136 = vmul.f32 %v3041, %v3108
        %v3137 = vmul.f32 %v3046, %v3108
        %v3138 = vmul.f32 %v3051, %v3108
        %v3139 = vmul.f32 %v3056, %v3108
        %v3140 = vmul.f32 %v3061, %v3108
        %v3141 = vmul.f32 %v3066, %v3108
        %v3142 = vmul.f32 %v3071, %v3108
        %v3143 = vmul.f32 %v3076, %v3108
        %v3144 = vmul.f32 %v3081, %v3108
        %v3145 = vmul.f32 %v3086, %v3108
        %v3146 = vmul.f32 %v3091, %v3108
        %v3147 = vmul.f32 %v3096, %v3108
        %v3148 = vmul.f32 %v3101, %v3108
        %v3149 = vmul.f32 %v3106, %v3108
        %v3150 = vadd.f32 %v3109, 0.0
        %v3151 = vadd.f32 %v3110, 0.0
        %v3152 = vadd.f32 %v3111, 0.0
        %v3153 = vadd.f32 %v3112, 0.0
        %v3154 = vadd.f32 %v3113, 0.0
        %v3155 = vadd.f32 %v3114, 0.0
        %v3156 = vadd.f32 %v3115, 0.0
        %v3157 = vadd.f32 %v3116, 0.0
        %v3158 = vadd.f32 %v3117, 0.0
        %v3159 = vadd.f32 %v3118, 0.0
        %v3160 = vadd.f32 %v3119, 0.0
        %v3161 = vadd.f32 %v3120, 0.0
        %v3162 = vadd.f32 %v3121, 0.0
        %v3163 = vadd.f32 %v3122, 0.0
        %v3164 = vadd.f32 %v3123, 0.0
        %v3165 = vadd.f32 %v3124, 0.0
        %v3166 = vadd.f32 %v3125, 0.0
        %v3167 = vadd.f32 %v3126, 0.0
        %v3168 = vadd.f32 %v3127, 0.0
        %v3169 = vadd.f32 %v3128, 0.0
        %v3170 = vadd.f32 %v3129, 0.0
        %v3171 = vadd.f32 %v3130, 0.0
        %v3172 = vadd.f32 %v3131, 0.0
        %v3173 = vadd.f32 %v3132, 0.0
        %v3174 = vadd.f32 %v3133, 0.0
        %v3175 = vadd.f32 %v3134, 0.0
        %v3176 = vadd.f32 %v3135, 0.0
        %v3177 = vadd.f32 %v3136, 0.0
        %v3178 = vadd.f32 %v3137, 0.0
        %v3179 = vadd.f32 %v3138, 0.0
        %v3180 = vadd.f32 %v3139, 0.0
        %v3181 = vadd.f32 %v3140, 0.0
        %v3182 = vadd.f32 %v3141, 0.0
        %v3183 = vadd.f32 %v3142, 0.0
        %v3184 = vadd.f32 %v3143, 0.0
        %v3185 = vadd.f32 %v3144, 0.0
        %v3186 = vadd.f32 %v3145, 0.0
        %v3187 = vadd.f32 %v3146, 0.0
        %v3188 = vadd.f32 %v3147, 0.0
        %v3189 = vadd.f32 %v3148, 0.0
        %v3190 = vadd.f32 %v3149, 0.0
        %3191 = vset.pattern.permute.xlu0 1
        %3192 = vperm.xlu0 %3191, %v2861
        %v3193 = vpop.permute.xlu0 %3192
        %3195 = vset.pattern.permute.xlu0 1
        %3196 = vperm.xlu0 %3195, %v2862
        %v3197 = vpop.permute.xlu0 %3196
        %3199 = vset.pattern.permute.xlu0 1
        %3200 = vperm.xlu0 %3199, %v2863
        %v3201 = vpop.permute.xlu0 %3200
        %3203 = vset.pattern.permute.xlu0 1
        %3204 = vperm.xlu0 %3203, %v2864
        %v3205 = vpop.permute.xlu0 %3204
        %3207 = vset.pattern.permute.xlu0 1
        %3208 = vperm.xlu0 %3207, %v2865
        %v3209 = vpop.permute.xlu0 %3208
        %3211 = vset.pattern.permute.xlu0 1
        %3212 = vperm.xlu0 %3211, %v2866
        %v3213 = vpop.permute.xlu0 %3212
        %3215 = vset.pattern.permute.xlu0 1
        %3216 = vperm.xlu0 %3215, %v2867
        %v3217 = vpop.permute.xlu0 %3216
        %3219 = vset.pattern.permute.xlu0 1
        %3220 = vperm.xlu0 %3219, %v2868
        %v3221 = vpop.permute.xlu0 %3220
        %3223 = vset.pattern.permute.xlu0 1
        %3224 = vperm.xlu0 %3223, %v2869
        %v3225 = vpop.permute.xlu0 %3224
        %3227 = vset.pattern.permute.xlu0 1
        %3228 = vperm.xlu0 %3227, %v2870
        %v3229 = vpop.permute.xlu0 %3228
        %3231 = vset.pattern.permute.xlu0 1
        %3232 = vperm.xlu0 %3231, %v2871
        %v3233 = vpop.permute.xlu0 %3232
        %3235 = vset.pattern.permute.xlu0 1
        %3236 = vperm.xlu0 %3235, %v2872
        %v3237 = vpop.permute.xlu0 %3236
        %3239 = vset.pattern.permute.xlu0 1
        %3240 = vperm.xlu0 %3239, %v2873
        %v3241 = vpop.permute.xlu0 %3240
        %3243 = vset.pattern.permute.xlu0 1
        %3244 = vperm.xlu0 %3243, %v2874
        %v3245 = vpop.permute.xlu0 %3244
        %3247 = vset.pattern.permute.xlu0 1
        %3248 = vperm.xlu0 %3247, %v2875
        %v3249 = vpop.permute.xlu0 %3248
        %3251 = vset.pattern.permute.xlu0 1
        %3252 = vperm.xlu0 %3251, %v2876
        %v3253 = vpop.permute.xlu0 %3252
        %3255 = vset.pattern.permute.xlu0 1
        %3256 = vperm.xlu0 %3255, %v2877
        %v3257 = vpop.permute.xlu0 %3256
        %3259 = vset.pattern.permute.xlu0 1
        %3260 = vperm.xlu0 %3259, %v2878
        %v3261 = vpop.permute.xlu0 %3260
        %3263 = vset.pattern.permute.xlu0 1
        %3264 = vperm.xlu0 %3263, %v2879
        %v3265 = vpop.permute.xlu0 %3264
        %3267 = vset.pattern.permute.xlu0 1
        %3268 = vperm.xlu0 %3267, %v2880
        %v3269 = vpop.permute.xlu0 %3268
        %3271 = vset.pattern.permute.xlu0 1
        %3272 = vperm.xlu0 %3271, %v2881
        %v3273 = vpop.permute.xlu0 %3272
        %3275 = vset.pattern.permute.xlu0 1
        %3276 = vperm.xlu0 %3275, %v2882
        %v3277 = vpop.permute.xlu0 %3276
        %3279 = vset.pattern.permute.xlu0 1
        %3280 = vperm.xlu0 %3279, %v2883
        %v3281 = vpop.permute.xlu0 %3280
        %3283 = vset.pattern.permute.xlu0 1
        %3284 = vperm.xlu0 %3283, %v2884
        %v3285 = vpop.permute.xlu0 %3284
        %3287 = vset.pattern.permute.xlu0 1
        %3288 = vperm.xlu0 %3287, %v2885
        %v3289 = vpop.permute.xlu0 %3288
        %3291 = vset.pattern.permute.xlu0 1
        %3292 = vperm.xlu0 %3291, %v2886
        %v3293 = vpop.permute.xlu0 %3292
        %3295 = vset.pattern.permute.xlu0 1
        %3296 = vperm.xlu0 %3295, %v2887
        %v3297 = vpop.permute.xlu0 %3296
        %3299 = vset.pattern.permute.xlu0 1
        %3300 = vperm.xlu0 %3299, %v2888
        %v3301 = vpop.permute.xlu0 %3300
        %3303 = vset.pattern.permute.xlu0 1
        %3304 = vperm.xlu0 %3303, %v2889
        %v3305 = vpop.permute.xlu0 %3304
        %3307 = vset.pattern.permute.xlu0 1
        %3308 = vperm.xlu0 %3307, %v2890
        %v3309 = vpop.permute.xlu0 %3308
        %3311 = vset.pattern.permute.xlu0 1
        %3312 = vperm.xlu0 %3311, %v2891
        %v3313 = vpop.permute.xlu0 %3312
        %3315 = vset.pattern.permute.xlu0 1
        %3316 = vperm.xlu0 %3315, %v2892
        %v3317 = vpop.permute.xlu0 %3316
        %3319 = vset.pattern.permute.xlu0 1
        %3320 = vperm.xlu0 %3319, %v2893
        %v3321 = vpop.permute.xlu0 %3320
        %3323 = vset.pattern.permute.xlu0 1
        %3324 = vperm.xlu0 %3323, %v2894
        %v3325 = vpop.permute.xlu0 %3324
        %3327 = vset.pattern.permute.xlu0 1
        %3328 = vperm.xlu0 %3327, %v2895
        %v3329 = vpop.permute.xlu0 %3328
        %3331 = vset.pattern.permute.xlu0 1
        %3332 = vperm.xlu0 %3331, %v2896
        %v3333 = vpop.permute.xlu0 %3332
        %3335 = vset.pattern.permute.xlu0 1
        %3336 = vperm.xlu0 %3335, %v2897
        %v3337 = vpop.permute.xlu0 %3336
        %3339 = vset.pattern.permute.xlu0 1
        %3340 = vperm.xlu0 %3339, %v2898
        %v3341 = vpop.permute.xlu0 %3340
        %3343 = vset.pattern.permute.xlu0 1
        %3344 = vperm.xlu0 %3343, %v2899
        %v3345 = vpop.permute.xlu0 %3344
        %3347 = vset.pattern.permute.xlu0 1
        %3348 = vperm.xlu0 %3347, %v2900
        %v3349 = vpop.permute.xlu0 %3348
        %3351 = vset.pattern.permute.xlu0 1
        %3352 = vperm.xlu0 %3351, %v2901
        %v3353 = vpop.permute.xlu0 %3352
        %v3355 = vperm.slane %v2902, 1
        %v3356 = vmul.f32 %v3193, %v3355
        %v3357 = vmul.f32 %v3197, %v3355
        %v3358 = vmul.f32 %v3201, %v3355
        %v3359 = vmul.f32 %v3205, %v3355
        %v3360 = vmul.f32 %v3209, %v3355
        %v3361 = vmul.f32 %v3213, %v3355
        %v3362 = vmul.f32 %v3217, %v3355
        %v3363 = vmul.f32 %v3221, %v3355
        %v3364 = vmul.f32 %v3225, %v3355
        %v3365 = vmul.f32 %v3229, %v3355
        %v3366 = vmul.f32 %v3233, %v3355
        %v3367 = vmul.f32 %v3237, %v3355
        %v3368 = vmul.f32 %v3241, %v3355
        %v3369 = vmul.f32 %v3245, %v3355
        %v3370 = vmul.f32 %v3249, %v3355
        %v3371 = vmul.f32 %v3253, %v3355
        %v3372 = vmul.f32 %v3257, %v3355
        %v3373 = vmul.f32 %v3261, %v3355
        %v3374 = vmul.f32 %v3265, %v3355
        %v3375 = vmul.f32 %v3269, %v3355
        %v3376 = vmul.f32 %v3273, %v3355
        %v3377 = vmul.f32 %v3277, %v3355
        %v3378 = vmul.f32 %v3281, %v3355
        %v3379 = vmul.f32 %v3285, %v3355
        %v3380 = vmul.f32 %v3289, %v3355
        %v3381 = vmul.f32 %v3293, %v3355
        %v3382 = vmul.f32 %v3297, %v3355
        %v3383 = vmul.f32 %v3301, %v3355
        %v3384 = vmul.f32 %v3305, %v3355
        %v3385 = vmul.f32 %v3309, %v3355
        %v3386 = vmul.f32 %v3313, %v3355
        %v3387 = vmul.f32 %v3317, %v3355
        %v3388 = vmul.f32 %v3321, %v3355
        %v3389 = vmul.f32 %v3325, %v3355
        %v3390 = vmul.f32 %v3329, %v3355
        %v3391 = vmul.f32 %v3333, %v3355
        %v3392 = vmul.f32 %v3337, %v3355
        %v3393 = vmul.f32 %v3341, %v3355
        %v3394 = vmul.f32 %v3345, %v3355
        %v3395 = vmul.f32 %v3349, %v3355
        %v3396 = vmul.f32 %v3353, %v3355
        %v3397 = vadd.f32 %v3150, %v3356
        %v3398 = vadd.f32 %v3151, %v3357
        %v3399 = vadd.f32 %v3152, %v3358
        %v3400 = vadd.f32 %v3153, %v3359
        %v3401 = vadd.f32 %v3154, %v3360
        %v3402 = vadd.f32 %v3155, %v3361
        %v3403 = vadd.f32 %v3156, %v3362
        %v3404 = vadd.f32 %v3157, %v3363
        %v3405 = vadd.f32 %v3158, %v3364
        %v3406 = vadd.f32 %v3159, %v3365
        %v3407 = vadd.f32 %v3160, %v3366
        %v3408 = vadd.f32 %v3161, %v3367
        %v3409 = vadd.f32 %v3162, %v3368
        %v3410 = vadd.f32 %v3163, %v3369
        %v3411 = vadd.f32 %v3164, %v3370
        %v3412 = vadd.f32 %v3165, %v3371
        %v3413 = vadd.f32 %v3166, %v3372
        %v3414 = vadd.f32 %v3167, %v3373
        %v3415 = vadd.f32 %v3168, %v3374
        %v3416 = vadd.f32 %v3169, %v3375
        %v3417 = vadd.f32 %v3170, %v3376
        %v3418 = vadd.f32 %v3171, %v3377
        %v3419 = vadd.f32 %v3172, %v3378
        %v3420 = vadd.f32 %v3173, %v3379
        %v3421 = vadd.f32 %v3174, %v3380
        %v3422 = vadd.f32 %v3175, %v3381
        %v3423 = vadd.f32 %v3176, %v3382
        %v3424 = vadd.f32 %v3177, %v3383
        %v3425 = vadd.f32 %v3178, %v3384
        %v3426 = vadd.f32 %v3179, %v3385
        %v3427 = vadd.f32 %v3180, %v3386
        %v3428 = vadd.f32 %v3181, %v3387
        %v3429 = vadd.f32 %v3182, %v3388
        %v3430 = vadd.f32 %v3183, %v3389
        %v3431 = vadd.f32 %v3184, %v3390
        %v3432 = vadd.f32 %v3185, %v3391
        %v3433 = vadd.f32 %v3186, %v3392
        %v3434 = vadd.f32 %v3187, %v3393
        %v3435 = vadd.f32 %v3188, %v3394
        %v3436 = vadd.f32 %v3189, %v3395
        %v3437 = vadd.f32 %v3190, %v3396
        %v3438 = vperm.slane %v2902, 2
        %v3439 = vmul.f32 %v2906, %v3438
        %v3440 = vmul.f32 %v2911, %v3438
        %v3441 = vmul.f32 %v2916, %v3438
        %v3442 = vmul.f32 %v2921, %v3438
        %v3443 = vmul.f32 %v2926, %v3438
        %v3444 = vmul.f32 %v2931, %v3438
        %v3445 = vmul.f32 %v2936, %v3438
        %v3446 = vmul.f32 %v2941, %v3438
        %v3447 = vmul.f32 %v2946, %v3438
        %v3448 = vmul.f32 %v2951, %v3438
        %v3449 = vmul.f32 %v2956, %v3438
        %v3450 = vmul.f32 %v2961, %v3438
        %v3451 = vmul.f32 %v2966, %v3438
        %v3452 = vmul.f32 %v2971, %v3438
        %v3453 = vmul.f32 %v2976, %v3438
        %v3454 = vmul.f32 %v2981, %v3438
        %v3455 = vmul.f32 %v2986, %v3438
        %v3456 = vmul.f32 %v2991, %v3438
        %v3457 = vmul.f32 %v2996, %v3438
        %v3458 = vmul.f32 %v3001, %v3438
        %v3459 = vmul.f32 %v3006, %v3438
        %v3460 = vmul.f32 %v3011, %v3438
        %v3461 = vmul.f32 %v3016, %v3438
        %v3462 = vmul.f32 %v3021, %v3438
        %v3463 = vmul.f32 %v3026, %v3438
        %v3464 = vmul.f32 %v3031, %v3438
        %v3465 = vmul.f32 %v3036, %v3438
        %v3466 = vmul.f32 %v3041, %v3438
        %v3467 = vmul.f32 %v3046, %v3438
        %v3468 = vmul.f32 %v3051, %v3438
        %v3469 = vmul.f32 %v3056, %v3438
        %v3470 = vmul.f32 %v3061, %v3438
        %v3471 = vmul.f32 %v3066, %v3438
        %v3472 = vmul.f32 %v3071, %v3438
        %v3473 = vmul.f32 %v3076, %v3438
        %v3474 = vmul.f32 %v3081, %v3438
        %v3475 = vmul.f32 %v3086, %v3438
        %v3476 = vmul.f32 %v3091, %v3438
        %v3477 = vmul.f32 %v3096, %v3438
        %v3478 = vmul.f32 %v3101, %v3438
        %v3479 = vmul.f32 %v3106, %v3438
        %v3521 = vrot.slane %v3439, 1
        %v3522 = vrot.slane %v3440, 1
        %v3523 = vsel %vm2185, %v3521, %v3522
        %v3524 = vrot.slane %v3441, 1
        %v3525 = vsel %vm2185, %v3522, %v3524
        %v3526 = vrot.slane %v3442, 1
        %v3527 = vsel %vm2185, %v3524, %v3526
        %v3528 = vrot.slane %v3443, 1
        %v3529 = vsel %vm2185, %v3526, %v3528
        %v3530 = vrot.slane %v3444, 1
        %v3531 = vsel %vm2185, %v3528, %v3530
        %v3532 = vrot.slane %v3445, 1
        %v3533 = vsel %vm2185, %v3530, %v3532
        %v3534 = vrot.slane %v3446, 1
        %v3535 = vsel %vm2185, %v3532, %v3534
        %v3536 = vrot.slane %v3447, 1
        %v3537 = vsel %vm2185, %v3534, %v3536
        %v3538 = vrot.slane %v3448, 1
        %v3539 = vsel %vm2185, %v3536, %v3538
        %v3540 = vrot.slane %v3449, 1
        %v3541 = vsel %vm2185, %v3538, %v3540
        %v3542 = vrot.slane %v3450, 1
        %v3543 = vsel %vm2185, %v3540, %v3542
        %v3544 = vrot.slane %v3451, 1
        %v3545 = vsel %vm2185, %v3542, %v3544
        %v3546 = vrot.slane %v3452, 1
        %v3547 = vsel %vm2185, %v3544, %v3546
        %v3548 = vrot.slane %v3453, 1
        %v3549 = vsel %vm2185, %v3546, %v3548
        %v3550 = vrot.slane %v3454, 1
        %v3551 = vsel %vm2185, %v3548, %v3550
        %v3552 = vrot.slane %v3455, 1
        %v3553 = vsel %vm2185, %v3550, %v3552
        %v3554 = vrot.slane %v3456, 1
        %v3555 = vsel %vm2185, %v3552, %v3554
        %v3556 = vrot.slane %v3457, 1
        %v3557 = vsel %vm2185, %v3554, %v3556
        %v3558 = vrot.slane %v3458, 1
        %v3559 = vsel %vm2185, %v3556, %v3558
        %v3560 = vrot.slane %v3459, 1
        %v3561 = vsel %vm2185, %v3558, %v3560
        %v3562 = vrot.slane %v3460, 1
        %v3563 = vsel %vm2185, %v3560, %v3562
        %v3564 = vrot.slane %v3461, 1
        %v3565 = vsel %vm2185, %v3562, %v3564
        %v3566 = vrot.slane %v3462, 1
        %v3567 = vsel %vm2185, %v3564, %v3566
        %v3568 = vrot.slane %v3463, 1
        %v3569 = vsel %vm2185, %v3566, %v3568
        %v3570 = vrot.slane %v3464, 1
        %v3571 = vsel %vm2185, %v3568, %v3570
        %v3572 = vrot.slane %v3465, 1
        %v3573 = vsel %vm2185, %v3570, %v3572
        %v3574 = vrot.slane %v3466, 1
        %v3575 = vsel %vm2185, %v3572, %v3574
        %v3576 = vrot.slane %v3467, 1
        %v3577 = vsel %vm2185, %v3574, %v3576
        %v3578 = vrot.slane %v3468, 1
        %v3579 = vsel %vm2185, %v3576, %v3578
        %v3580 = vrot.slane %v3469, 1
        %v3581 = vsel %vm2185, %v3578, %v3580
        %v3582 = vrot.slane %v3470, 1
        %v3583 = vsel %vm2185, %v3580, %v3582
        %v3584 = vrot.slane %v3471, 1
        %v3585 = vsel %vm2185, %v3582, %v3584
        %v3586 = vrot.slane %v3472, 1
        %v3587 = vsel %vm2185, %v3584, %v3586
        %v3588 = vrot.slane %v3473, 1
        %v3589 = vsel %vm2185, %v3586, %v3588
        %v3590 = vrot.slane %v3474, 1
        %v3591 = vsel %vm2185, %v3588, %v3590
        %v3592 = vrot.slane %v3475, 1
        %v3593 = vsel %vm2185, %v3590, %v3592
        %v3594 = vrot.slane %v3476, 1
        %v3595 = vsel %vm2185, %v3592, %v3594
        %v3596 = vrot.slane %v3477, 1
        %v3597 = vsel %vm2185, %v3594, %v3596
        %v3598 = vrot.slane %v3478, 1
        %v3599 = vsel %vm2185, %v3596, %v3598
        %v3600 = vrot.slane %v3479, 1
        %v3601 = vsel %vm2185, %v3598, %v3600
        %v3643 = vadd.f32 %v3397, %v3523
        %v3644 = vadd.f32 %v3398, %v3525
        %v3645 = vadd.f32 %v3399, %v3527
        %v3646 = vadd.f32 %v3400, %v3529
        %v3647 = vadd.f32 %v3401, %v3531
        %v3648 = vadd.f32 %v3402, %v3533
        %v3649 = vadd.f32 %v3403, %v3535
        %v3650 = vadd.f32 %v3404, %v3537
        %v3651 = vadd.f32 %v3405, %v3539
        %v3652 = vadd.f32 %v3406, %v3541
        %v3653 = vadd.f32 %v3407, %v3543
        %v3654 = vadd.f32 %v3408, %v3545
        %v3655 = vadd.f32 %v3409, %v3547
        %v3656 = vadd.f32 %v3410, %v3549
        %v3657 = vadd.f32 %v3411, %v3551
        %v3658 = vadd.f32 %v3412, %v3553
        %v3659 = vadd.f32 %v3413, %v3555
        %v3660 = vadd.f32 %v3414, %v3557
        %v3661 = vadd.f32 %v3415, %v3559
        %v3662 = vadd.f32 %v3416, %v3561
        %v3663 = vadd.f32 %v3417, %v3563
        %v3664 = vadd.f32 %v3418, %v3565
        %v3665 = vadd.f32 %v3419, %v3567
        %v3666 = vadd.f32 %v3420, %v3569
        %v3667 = vadd.f32 %v3421, %v3571
        %v3668 = vadd.f32 %v3422, %v3573
        %v3669 = vadd.f32 %v3423, %v3575
        %v3670 = vadd.f32 %v3424, %v3577
        %v3671 = vadd.f32 %v3425, %v3579
        %v3672 = vadd.f32 %v3426, %v3581
        %v3673 = vadd.f32 %v3427, %v3583
        %v3674 = vadd.f32 %v3428, %v3585
        %v3675 = vadd.f32 %v3429, %v3587
        %v3676 = vadd.f32 %v3430, %v3589
        %v3677 = vadd.f32 %v3431, %v3591
        %v3678 = vadd.f32 %v3432, %v3593
        %v3679 = vadd.f32 %v3433, %v3595
        %v3680 = vadd.f32 %v3434, %v3597
        %v3681 = vadd.f32 %v3435, %v3599
        %v3682 = vadd.f32 %v3436, %v3601
        %v3683 = vadd.f32 %v3437, %v3600
        %v3684 = vperm.slane %v2902, 3
        %v3685 = vmul.f32 %v3193, %v3684
        %v3686 = vmul.f32 %v3197, %v3684
        %v3687 = vmul.f32 %v3201, %v3684
        %v3688 = vmul.f32 %v3205, %v3684
        %v3689 = vmul.f32 %v3209, %v3684
        %v3690 = vmul.f32 %v3213, %v3684
        %v3691 = vmul.f32 %v3217, %v3684
        %v3692 = vmul.f32 %v3221, %v3684
        %v3693 = vmul.f32 %v3225, %v3684
        %v3694 = vmul.f32 %v3229, %v3684
        %v3695 = vmul.f32 %v3233, %v3684
        %v3696 = vmul.f32 %v3237, %v3684
        %v3697 = vmul.f32 %v3241, %v3684
        %v3698 = vmul.f32 %v3245, %v3684
        %v3699 = vmul.f32 %v3249, %v3684
        %v3700 = vmul.f32 %v3253, %v3684
        %v3701 = vmul.f32 %v3257, %v3684
        %v3702 = vmul.f32 %v3261, %v3684
        %v3703 = vmul.f32 %v3265, %v3684
        %v3704 = vmul.f32 %v3269, %v3684
        %v3705 = vmul.f32 %v3273, %v3684
        %v3706 = vmul.f32 %v3277, %v3684
        %v3707 = vmul.f32 %v3281, %v3684
        %v3708 = vmul.f32 %v3285, %v3684
        %v3709 = vmul.f32 %v3289, %v3684
        %v3710 = vmul.f32 %v3293, %v3684
        %v3711 = vmul.f32 %v3297, %v3684
        %v3712 = vmul.f32 %v3301, %v3684
        %v3713 = vmul.f32 %v3305, %v3684
        %v3714 = vmul.f32 %v3309, %v3684
        %v3715 = vmul.f32 %v3313, %v3684
        %v3716 = vmul.f32 %v3317, %v3684
        %v3717 = vmul.f32 %v3321, %v3684
        %v3718 = vmul.f32 %v3325, %v3684
        %v3719 = vmul.f32 %v3329, %v3684
        %v3720 = vmul.f32 %v3333, %v3684
        %v3721 = vmul.f32 %v3337, %v3684
        %v3722 = vmul.f32 %v3341, %v3684
        %v3723 = vmul.f32 %v3345, %v3684
        %v3724 = vmul.f32 %v3349, %v3684
        %v3725 = vmul.f32 %v3353, %v3684
        %v3767 = vrot.slane %v3685, 1
        %v3768 = vrot.slane %v3686, 1
        %v3769 = vsel %vm2185, %v3767, %v3768
        %v3770 = vrot.slane %v3687, 1
        %v3771 = vsel %vm2185, %v3768, %v3770
        %v3772 = vrot.slane %v3688, 1
        %v3773 = vsel %vm2185, %v3770, %v3772
        %v3774 = vrot.slane %v3689, 1
        %v3775 = vsel %vm2185, %v3772, %v3774
        %v3776 = vrot.slane %v3690, 1
        %v3777 = vsel %vm2185, %v3774, %v3776
        %v3778 = vrot.slane %v3691, 1
        %v3779 = vsel %vm2185, %v3776, %v3778
        %v3780 = vrot.slane %v3692, 1
        %v3781 = vsel %vm2185, %v3778, %v3780
        %v3782 = vrot.slane %v3693, 1
        %v3783 = vsel %vm2185, %v3780, %v3782
        %v3784 = vrot.slane %v3694, 1
        %v3785 = vsel %vm2185, %v3782, %v3784
        %v3786 = vrot.slane %v3695, 1
        %v3787 = vsel %vm2185, %v3784, %v3786
        %v3788 = vrot.slane %v3696, 1
        %v3789 = vsel %vm2185, %v3786, %v3788
        %v3790 = vrot.slane %v3697, 1
        %v3791 = vsel %vm2185, %v3788, %v3790
        %v3792 = vrot.slane %v3698, 1
        %v3793 = vsel %vm2185, %v3790, %v3792
        %v3794 = vrot.slane %v3699, 1
        %v3795 = vsel %vm2185, %v3792, %v3794
        %v3796 = vrot.slane %v3700, 1
        %v3797 = vsel %vm2185, %v3794, %v3796
        %v3798 = vrot.slane %v3701, 1
        %v3799 = vsel %vm2185, %v3796, %v3798
        %v3800 = vrot.slane %v3702, 1
        %v3801 = vsel %vm2185, %v3798, %v3800
        %v3802 = vrot.slane %v3703, 1
        %v3803 = vsel %vm2185, %v3800, %v3802
        %v3804 = vrot.slane %v3704, 1
        %v3805 = vsel %vm2185, %v3802, %v3804
        %v3806 = vrot.slane %v3705, 1
        %v3807 = vsel %vm2185, %v3804, %v3806
        %v3808 = vrot.slane %v3706, 1
        %v3809 = vsel %vm2185, %v3806, %v3808
        %v3810 = vrot.slane %v3707, 1
        %v3811 = vsel %vm2185, %v3808, %v3810
        %v3812 = vrot.slane %v3708, 1
        %v3813 = vsel %vm2185, %v3810, %v3812
        %v3814 = vrot.slane %v3709, 1
        %v3815 = vsel %vm2185, %v3812, %v3814
        %v3816 = vrot.slane %v3710, 1
        %v3817 = vsel %vm2185, %v3814, %v3816
        %v3818 = vrot.slane %v3711, 1
        %v3819 = vsel %vm2185, %v3816, %v3818
        %v3820 = vrot.slane %v3712, 1
        %v3821 = vsel %vm2185, %v3818, %v3820
        %v3822 = vrot.slane %v3713, 1
        %v3823 = vsel %vm2185, %v3820, %v3822
        %v3824 = vrot.slane %v3714, 1
        %v3825 = vsel %vm2185, %v3822, %v3824
        %v3826 = vrot.slane %v3715, 1
        %v3827 = vsel %vm2185, %v3824, %v3826
        %v3828 = vrot.slane %v3716, 1
        %v3829 = vsel %vm2185, %v3826, %v3828
        %v3830 = vrot.slane %v3717, 1
        %v3831 = vsel %vm2185, %v3828, %v3830
        %v3832 = vrot.slane %v3718, 1
        %v3833 = vsel %vm2185, %v3830, %v3832
        %v3834 = vrot.slane %v3719, 1
        %v3835 = vsel %vm2185, %v3832, %v3834
        %v3836 = vrot.slane %v3720, 1
        %v3837 = vsel %vm2185, %v3834, %v3836
        %v3838 = vrot.slane %v3721, 1
        %v3839 = vsel %vm2185, %v3836, %v3838
        %v3840 = vrot.slane %v3722, 1
        %v3841 = vsel %vm2185, %v3838, %v3840
        %v3842 = vrot.slane %v3723, 1
        %v3843 = vsel %vm2185, %v3840, %v3842
        %v3844 = vrot.slane %v3724, 1
        %v3845 = vsel %vm2185, %v3842, %v3844
        %v3846 = vrot.slane %v3725, 1
        %v3847 = vsel %vm2185, %v3844, %v3846
        %v3889 = vadd.f32 %v3643, %v3769
        %v3890 = vadd.f32 %v3644, %v3771
        %v3891 = vadd.f32 %v3645, %v3773
        %v3892 = vadd.f32 %v3646, %v3775
        %v3893 = vadd.f32 %v3647, %v3777
        %v3894 = vadd.f32 %v3648, %v3779
        %v3895 = vadd.f32 %v3649, %v3781
        %v3896 = vadd.f32 %v3650, %v3783
        %v3897 = vadd.f32 %v3651, %v3785
        %v3898 = vadd.f32 %v3652, %v3787
        %v3899 = vadd.f32 %v3653, %v3789
        %v3900 = vadd.f32 %v3654, %v3791
        %v3901 = vadd.f32 %v3655, %v3793
        %v3902 = vadd.f32 %v3656, %v3795
        %v3903 = vadd.f32 %v3657, %v3797
        %v3904 = vadd.f32 %v3658, %v3799
        %v3905 = vadd.f32 %v3659, %v3801
        %v3906 = vadd.f32 %v3660, %v3803
        %v3907 = vadd.f32 %v3661, %v3805
        %v3908 = vadd.f32 %v3662, %v3807
        %v3909 = vadd.f32 %v3663, %v3809
        %v3910 = vadd.f32 %v3664, %v3811
        %v3911 = vadd.f32 %v3665, %v3813
        %v3912 = vadd.f32 %v3666, %v3815
        %v3913 = vadd.f32 %v3667, %v3817
        %v3914 = vadd.f32 %v3668, %v3819
        %v3915 = vadd.f32 %v3669, %v3821
        %v3916 = vadd.f32 %v3670, %v3823
        %v3917 = vadd.f32 %v3671, %v3825
        %v3918 = vadd.f32 %v3672, %v3827
        %v3919 = vadd.f32 %v3673, %v3829
        %v3920 = vadd.f32 %v3674, %v3831
        %v3921 = vadd.f32 %v3675, %v3833
        %v3922 = vadd.f32 %v3676, %v3835
        %v3923 = vadd.f32 %v3677, %v3837
        %v3924 = vadd.f32 %v3678, %v3839
        %v3925 = vadd.f32 %v3679, %v3841
        %v3926 = vadd.f32 %v3680, %v3843
        %v3927 = vadd.f32 %v3681, %v3845
        %v3928 = vadd.f32 %v3682, %v3847
        %v3929 = vadd.f32 %v3683, %v3846
        %v3930 = vperm.slane %v2902, 4
        %v3931 = vmul.f32 %v2906, %v3930
        %v3932 = vmul.f32 %v2911, %v3930
        %v3933 = vmul.f32 %v2916, %v3930
        %v3934 = vmul.f32 %v2921, %v3930
        %v3935 = vmul.f32 %v2926, %v3930
        %v3936 = vmul.f32 %v2931, %v3930
        %v3937 = vmul.f32 %v2936, %v3930
        %v3938 = vmul.f32 %v2941, %v3930
        %v3939 = vmul.f32 %v2946, %v3930
        %v3940 = vmul.f32 %v2951, %v3930
        %v3941 = vmul.f32 %v2956, %v3930
        %v3942 = vmul.f32 %v2961, %v3930
        %v3943 = vmul.f32 %v2966, %v3930
        %v3944 = vmul.f32 %v2971, %v3930
        %v3945 = vmul.f32 %v2976, %v3930
        %v3946 = vmul.f32 %v2981, %v3930
        %v3947 = vmul.f32 %v2986, %v3930
        %v3948 = vmul.f32 %v2991, %v3930
        %v3949 = vmul.f32 %v2996, %v3930
        %v3950 = vmul.f32 %v3001, %v3930
        %v3951 = vmul.f32 %v3006, %v3930
        %v3952 = vmul.f32 %v3011, %v3930
        %v3953 = vmul.f32 %v3016, %v3930
        %v3954 = vmul.f32 %v3021, %v3930
        %v3955 = vmul.f32 %v3026, %v3930
        %v3956 = vmul.f32 %v3031, %v3930
        %v3957 = vmul.f32 %v3036, %v3930
        %v3958 = vmul.f32 %v3041, %v3930
        %v3959 = vmul.f32 %v3046, %v3930
        %v3960 = vmul.f32 %v3051, %v3930
        %v3961 = vmul.f32 %v3056, %v3930
        %v3962 = vmul.f32 %v3061, %v3930
        %v3963 = vmul.f32 %v3066, %v3930
        %v3964 = vmul.f32 %v3071, %v3930
        %v3965 = vmul.f32 %v3076, %v3930
        %v3966 = vmul.f32 %v3081, %v3930
        %v3967 = vmul.f32 %v3086, %v3930
        %v3968 = vmul.f32 %v3091, %v3930
        %v3969 = vmul.f32 %v3096, %v3930
        %v3970 = vmul.f32 %v3101, %v3930
        %v3971 = vmul.f32 %v3106, %v3930
        %v4013 = vrot.slane %v3931, 2
        %v4014 = vrot.slane %v3932, 2
        %v4015 = vsel %vm2456, %v4013, %v4014
        %v4016 = vrot.slane %v3933, 2
        %v4017 = vsel %vm2456, %v4014, %v4016
        %v4018 = vrot.slane %v3934, 2
        %v4019 = vsel %vm2456, %v4016, %v4018
        %v4020 = vrot.slane %v3935, 2
        %v4021 = vsel %vm2456, %v4018, %v4020
        %v4022 = vrot.slane %v3936, 2
        %v4023 = vsel %vm2456, %v4020, %v4022
        %v4024 = vrot.slane %v3937, 2
        %v4025 = vsel %vm2456, %v4022, %v4024
        %v4026 = vrot.slane %v3938, 2
        %v4027 = vsel %vm2456, %v4024, %v4026
        %v4028 = vrot.slane %v3939, 2
        %v4029 = vsel %vm2456, %v4026, %v4028
        %v4030 = vrot.slane %v3940, 2
        %v4031 = vsel %vm2456, %v4028, %v4030
        %v4032 = vrot.slane %v3941, 2
        %v4033 = vsel %vm2456, %v4030, %v4032
        %v4034 = vrot.slane %v3942, 2
        %v4035 = vsel %vm2456, %v4032, %v4034
        %v4036 = vrot.slane %v3943, 2
        %v4037 = vsel %vm2456, %v4034, %v4036
        %v4038 = vrot.slane %v3944, 2
        %v4039 = vsel %vm2456, %v4036, %v4038
        %v4040 = vrot.slane %v3945, 2
        %v4041 = vsel %vm2456, %v4038, %v4040
        %v4042 = vrot.slane %v3946, 2
        %v4043 = vsel %vm2456, %v4040, %v4042
        %v4044 = vrot.slane %v3947, 2
        %v4045 = vsel %vm2456, %v4042, %v4044
        %v4046 = vrot.slane %v3948, 2
        %v4047 = vsel %vm2456, %v4044, %v4046
        %v4048 = vrot.slane %v3949, 2
        %v4049 = vsel %vm2456, %v4046, %v4048
        %v4050 = vrot.slane %v3950, 2
        %v4051 = vsel %vm2456, %v4048, %v4050
        %v4052 = vrot.slane %v3951, 2
        %v4053 = vsel %vm2456, %v4050, %v4052
        %v4054 = vrot.slane %v3952, 2
        %v4055 = vsel %vm2456, %v4052, %v4054
        %v4056 = vrot.slane %v3953, 2
        %v4057 = vsel %vm2456, %v4054, %v4056
        %v4058 = vrot.slane %v3954, 2
        %v4059 = vsel %vm2456, %v4056, %v4058
        %v4060 = vrot.slane %v3955, 2
        %v4061 = vsel %vm2456, %v4058, %v4060
        %v4062 = vrot.slane %v3956, 2
        %v4063 = vsel %vm2456, %v4060, %v4062
        %v4064 = vrot.slane %v3957, 2
        %v4065 = vsel %vm2456, %v4062, %v4064
        %v4066 = vrot.slane %v3958, 2
        %v4067 = vsel %vm2456, %v4064, %v4066
        %v4068 = vrot.slane %v3959, 2
        %v4069 = vsel %vm2456, %v4066, %v4068
        %v4070 = vrot.slane %v3960, 2
        %v4071 = vsel %vm2456, %v4068, %v4070
        %v4072 = vrot.slane %v3961, 2
        %v4073 = vsel %vm2456, %v4070, %v4072
        %v4074 = vrot.slane %v3962, 2
        %v4075 = vsel %vm2456, %v4072, %v4074
        %v4076 = vrot.slane %v3963, 2
        %v4077 = vsel %vm2456, %v4074, %v4076
        %v4078 = vrot.slane %v3964, 2
        %v4079 = vsel %vm2456, %v4076, %v4078
        %v4080 = vrot.slane %v3965, 2
        %v4081 = vsel %vm2456, %v4078, %v4080
        %v4082 = vrot.slane %v3966, 2
        %v4083 = vsel %vm2456, %v4080, %v4082
        %v4084 = vrot.slane %v3967, 2
        %v4085 = vsel %vm2456, %v4082, %v4084
        %v4086 = vrot.slane %v3968, 2
        %v4087 = vsel %vm2456, %v4084, %v4086
        %v4088 = vrot.slane %v3969, 2
        %v4089 = vsel %vm2456, %v4086, %v4088
        %v4090 = vrot.slane %v3970, 2
        %v4091 = vsel %vm2456, %v4088, %v4090
        %v4092 = vrot.slane %v3971, 2
        %v4093 = vsel %vm2456, %v4090, %v4092
        %v4135 = vadd.f32 %v3889, %v4015
        %v4136 = vadd.f32 %v3890, %v4017
        %v4137 = vadd.f32 %v3891, %v4019
        %v4138 = vadd.f32 %v3892, %v4021
        %v4139 = vadd.f32 %v3893, %v4023
        %v4140 = vadd.f32 %v3894, %v4025
        %v4141 = vadd.f32 %v3895, %v4027
        %v4142 = vadd.f32 %v3896, %v4029
        %v4143 = vadd.f32 %v3897, %v4031
        %v4144 = vadd.f32 %v3898, %v4033
        %v4145 = vadd.f32 %v3899, %v4035
        %v4146 = vadd.f32 %v3900, %v4037
        %v4147 = vadd.f32 %v3901, %v4039
        %v4148 = vadd.f32 %v3902, %v4041
        %v4149 = vadd.f32 %v3903, %v4043
        %v4150 = vadd.f32 %v3904, %v4045
        %v4151 = vadd.f32 %v3905, %v4047
        %v4152 = vadd.f32 %v3906, %v4049
        %v4153 = vadd.f32 %v3907, %v4051
        %v4154 = vadd.f32 %v3908, %v4053
        %v4155 = vadd.f32 %v3909, %v4055
        %v4156 = vadd.f32 %v3910, %v4057
        %v4157 = vadd.f32 %v3911, %v4059
        %v4158 = vadd.f32 %v3912, %v4061
        %v4159 = vadd.f32 %v3913, %v4063
        %v4160 = vadd.f32 %v3914, %v4065
        %v4161 = vadd.f32 %v3915, %v4067
        %v4162 = vadd.f32 %v3916, %v4069
        %v4163 = vadd.f32 %v3917, %v4071
        %v4164 = vadd.f32 %v3918, %v4073
        %v4165 = vadd.f32 %v3919, %v4075
        %v4166 = vadd.f32 %v3920, %v4077
        %v4167 = vadd.f32 %v3921, %v4079
        %v4168 = vadd.f32 %v3922, %v4081
        %v4169 = vadd.f32 %v3923, %v4083
        %v4170 = vadd.f32 %v3924, %v4085
        %v4171 = vadd.f32 %v3925, %v4087
        %v4172 = vadd.f32 %v3926, %v4089
        %v4173 = vadd.f32 %v3927, %v4091
        %v4174 = vadd.f32 %v3928, %v4093
        %v4175 = vadd.f32 %v3929, %v4092
        %v4176 = vperm.slane %v2902, 5
        %v4177 = vmul.f32 %v3193, %v4176
        %v4178 = vmul.f32 %v3197, %v4176
        %v4179 = vmul.f32 %v3201, %v4176
        %v4180 = vmul.f32 %v3205, %v4176
        %v4181 = vmul.f32 %v3209, %v4176
        %v4182 = vmul.f32 %v3213, %v4176
        %v4183 = vmul.f32 %v3217, %v4176
        %v4184 = vmul.f32 %v3221, %v4176
        %v4185 = vmul.f32 %v3225, %v4176
        %v4186 = vmul.f32 %v3229, %v4176
        %v4187 = vmul.f32 %v3233, %v4176
        %v4188 = vmul.f32 %v3237, %v4176
        %v4189 = vmul.f32 %v3241, %v4176
        %v4190 = vmul.f32 %v3245, %v4176
        %v4191 = vmul.f32 %v3249, %v4176
        %v4192 = vmul.f32 %v3253, %v4176
        %v4193 = vmul.f32 %v3257, %v4176
        %v4194 = vmul.f32 %v3261, %v4176
        %v4195 = vmul.f32 %v3265, %v4176
        %v4196 = vmul.f32 %v3269, %v4176
        %v4197 = vmul.f32 %v3273, %v4176
        %v4198 = vmul.f32 %v3277, %v4176
        %v4199 = vmul.f32 %v3281, %v4176
        %v4200 = vmul.f32 %v3285, %v4176
        %v4201 = vmul.f32 %v3289, %v4176
        %v4202 = vmul.f32 %v3293, %v4176
        %v4203 = vmul.f32 %v3297, %v4176
        %v4204 = vmul.f32 %v3301, %v4176
        %v4205 = vmul.f32 %v3305, %v4176
        %v4206 = vmul.f32 %v3309, %v4176
        %v4207 = vmul.f32 %v3313, %v4176
        %v4208 = vmul.f32 %v3317, %v4176
        %v4209 = vmul.f32 %v3321, %v4176
        %v4210 = vmul.f32 %v3325, %v4176
        %v4211 = vmul.f32 %v3329, %v4176
        %v4212 = vmul.f32 %v3333, %v4176
        %v4213 = vmul.f32 %v3337, %v4176
        %v4214 = vmul.f32 %v3341, %v4176
        %v4215 = vmul.f32 %v3345, %v4176
        %v4216 = vmul.f32 %v3349, %v4176
        %v4217 = vmul.f32 %v3353, %v4176
        %v4259 = vrot.slane %v4177, 2
        %v4260 = vrot.slane %v4178, 2
        %v4261 = vsel %vm2456, %v4259, %v4260
        %v4262 = vrot.slane %v4179, 2
        %v4263 = vsel %vm2456, %v4260, %v4262
        %v4264 = vrot.slane %v4180, 2
        %v4265 = vsel %vm2456, %v4262, %v4264
        %v4266 = vrot.slane %v4181, 2
        %v4267 = vsel %vm2456, %v4264, %v4266
        %v4268 = vrot.slane %v4182, 2
        %v4269 = vsel %vm2456, %v4266, %v4268
        %v4270 = vrot.slane %v4183, 2
        %v4271 = vsel %vm2456, %v4268, %v4270
        %v4272 = vrot.slane %v4184, 2
        %v4273 = vsel %vm2456, %v4270, %v4272
        %v4274 = vrot.slane %v4185, 2
        %v4275 = vsel %vm2456, %v4272, %v4274
        %v4276 = vrot.slane %v4186, 2
        %v4277 = vsel %vm2456, %v4274, %v4276
        %v4278 = vrot.slane %v4187, 2
        %v4279 = vsel %vm2456, %v4276, %v4278
        %v4280 = vrot.slane %v4188, 2
        %v4281 = vsel %vm2456, %v4278, %v4280
        %v4282 = vrot.slane %v4189, 2
        %v4283 = vsel %vm2456, %v4280, %v4282
        %v4284 = vrot.slane %v4190, 2
        %v4285 = vsel %vm2456, %v4282, %v4284
        %v4286 = vrot.slane %v4191, 2
        %v4287 = vsel %vm2456, %v4284, %v4286
        %v4288 = vrot.slane %v4192, 2
        %v4289 = vsel %vm2456, %v4286, %v4288
        %v4290 = vrot.slane %v4193, 2
        %v4291 = vsel %vm2456, %v4288, %v4290
        %v4292 = vrot.slane %v4194, 2
        %v4293 = vsel %vm2456, %v4290, %v4292
        %v4294 = vrot.slane %v4195, 2
        %v4295 = vsel %vm2456, %v4292, %v4294
        %v4296 = vrot.slane %v4196, 2
        %v4297 = vsel %vm2456, %v4294, %v4296
        %v4298 = vrot.slane %v4197, 2
        %v4299 = vsel %vm2456, %v4296, %v4298
        %v4300 = vrot.slane %v4198, 2
        %v4301 = vsel %vm2456, %v4298, %v4300
        %v4302 = vrot.slane %v4199, 2
        %v4303 = vsel %vm2456, %v4300, %v4302
        %v4304 = vrot.slane %v4200, 2
        %v4305 = vsel %vm2456, %v4302, %v4304
        %v4306 = vrot.slane %v4201, 2
        %v4307 = vsel %vm2456, %v4304, %v4306
        %v4308 = vrot.slane %v4202, 2
        %v4309 = vsel %vm2456, %v4306, %v4308
        %v4310 = vrot.slane %v4203, 2
        %v4311 = vsel %vm2456, %v4308, %v4310
        %v4312 = vrot.slane %v4204, 2
        %v4313 = vsel %vm2456, %v4310, %v4312
        %v4314 = vrot.slane %v4205, 2
        %v4315 = vsel %vm2456, %v4312, %v4314
        %v4316 = vrot.slane %v4206, 2
        %v4317 = vsel %vm2456, %v4314, %v4316
        %v4318 = vrot.slane %v4207, 2
        %v4319 = vsel %vm2456, %v4316, %v4318
        %v4320 = vrot.slane %v4208, 2
        %v4321 = vsel %vm2456, %v4318, %v4320
        %v4322 = vrot.slane %v4209, 2
        %v4323 = vsel %vm2456, %v4320, %v4322
        %v4324 = vrot.slane %v4210, 2
        %v4325 = vsel %vm2456, %v4322, %v4324
        %v4326 = vrot.slane %v4211, 2
        %v4327 = vsel %vm2456, %v4324, %v4326
        %v4328 = vrot.slane %v4212, 2
        %v4329 = vsel %vm2456, %v4326, %v4328
        %v4330 = vrot.slane %v4213, 2
        %v4331 = vsel %vm2456, %v4328, %v4330
        %v4332 = vrot.slane %v4214, 2
        %v4333 = vsel %vm2456, %v4330, %v4332
        %v4334 = vrot.slane %v4215, 2
        %v4335 = vsel %vm2456, %v4332, %v4334
        %v4336 = vrot.slane %v4216, 2
        %v4337 = vsel %vm2456, %v4334, %v4336
        %v4338 = vrot.slane %v4217, 2
        %v4339 = vsel %vm2456, %v4336, %v4338
        %v4381 = vadd.f32 %v4135, %v4261
        %v4382 = vadd.f32 %v4136, %v4263
        %v4383 = vadd.f32 %v4137, %v4265
        %v4384 = vadd.f32 %v4138, %v4267
        %v4385 = vadd.f32 %v4139, %v4269
        %v4386 = vadd.f32 %v4140, %v4271
        %v4387 = vadd.f32 %v4141, %v4273
        %v4388 = vadd.f32 %v4142, %v4275
        %v4389 = vadd.f32 %v4143, %v4277
        %v4390 = vadd.f32 %v4144, %v4279
        %v4391 = vadd.f32 %v4145, %v4281
        %v4392 = vadd.f32 %v4146, %v4283
        %v4393 = vadd.f32 %v4147, %v4285
        %v4394 = vadd.f32 %v4148, %v4287
        %v4395 = vadd.f32 %v4149, %v4289
        %v4396 = vadd.f32 %v4150, %v4291
        %v4397 = vadd.f32 %v4151, %v4293
        %v4398 = vadd.f32 %v4152, %v4295
        %v4399 = vadd.f32 %v4153, %v4297
        %v4400 = vadd.f32 %v4154, %v4299
        %v4401 = vadd.f32 %v4155, %v4301
        %v4402 = vadd.f32 %v4156, %v4303
        %v4403 = vadd.f32 %v4157, %v4305
        %v4404 = vadd.f32 %v4158, %v4307
        %v4405 = vadd.f32 %v4159, %v4309
        %v4406 = vadd.f32 %v4160, %v4311
        %v4407 = vadd.f32 %v4161, %v4313
        %v4408 = vadd.f32 %v4162, %v4315
        %v4409 = vadd.f32 %v4163, %v4317
        %v4410 = vadd.f32 %v4164, %v4319
        %v4411 = vadd.f32 %v4165, %v4321
        %v4412 = vadd.f32 %v4166, %v4323
        %v4413 = vadd.f32 %v4167, %v4325
        %v4414 = vadd.f32 %v4168, %v4327
        %v4415 = vadd.f32 %v4169, %v4329
        %v4416 = vadd.f32 %v4170, %v4331
        %v4417 = vadd.f32 %v4171, %v4333
        %v4418 = vadd.f32 %v4172, %v4335
        %v4419 = vadd.f32 %v4173, %v4337
        %v4420 = vadd.f32 %v4174, %v4339
        %v4421 = vadd.f32 %v4175, %v4338
        %v4422 = vld [vmem:[%s15] sm:$0x1]
        %v4424 = vperm.slane %v4422, 0
        %v4426 = vadd.f32 %v4381, %v4424
        %v4427 = vadd.f32 %v4382, %v4424
        %v4428 = vadd.f32 %v4383, %v4424
        %v4429 = vadd.f32 %v4384, %v4424
        %v4430 = vadd.f32 %v4385, %v4424
        %v4431 = vadd.f32 %v4386, %v4424
        %v4432 = vadd.f32 %v4387, %v4424
        %v4433 = vadd.f32 %v4388, %v4424
        %v4434 = vadd.f32 %v4389, %v4424
        %v4435 = vadd.f32 %v4390, %v4424
        %v4436 = vadd.f32 %v4391, %v4424
        %v4437 = vadd.f32 %v4392, %v4424
        %v4438 = vadd.f32 %v4393, %v4424
        %v4439 = vadd.f32 %v4394, %v4424
        %v4440 = vadd.f32 %v4395, %v4424
        %v4441 = vadd.f32 %v4396, %v4424
        %v4442 = vadd.f32 %v4397, %v4424
        %v4443 = vadd.f32 %v4398, %v4424
        %v4444 = vadd.f32 %v4399, %v4424
        %v4445 = vadd.f32 %v4400, %v4424
        %v4446 = vadd.f32 %v4401, %v4424
        %v4447 = vadd.f32 %v4402, %v4424
        %v4448 = vadd.f32 %v4403, %v4424
        %v4449 = vadd.f32 %v4404, %v4424
        %v4450 = vadd.f32 %v4405, %v4424
        %v4451 = vadd.f32 %v4406, %v4424
        %v4452 = vadd.f32 %v4407, %v4424
        %v4453 = vadd.f32 %v4408, %v4424
        %v4454 = vadd.f32 %v4409, %v4424
        %v4455 = vadd.f32 %v4410, %v4424
        %v4456 = vadd.f32 %v4411, %v4424
        %v4457 = vadd.f32 %v4412, %v4424
        %v4458 = vadd.f32 %v4413, %v4424
        %v4459 = vadd.f32 %v4414, %v4424
        %v4460 = vadd.f32 %v4415, %v4424
        %v4461 = vadd.f32 %v4416, %v4424
        %v4462 = vadd.f32 %v4417, %v4424
        %v4463 = vadd.f32 %v4418, %v4424
        %v4464 = vadd.f32 %v4419, %v4424
        %v4465 = vadd.f32 %v4420, %v4424
        %v4466 = vadd.f32 %v4421, %v4424
        %v4467 = vmax.f32 %v4426, 0.0
        %v4468 = vmax.f32 %v4427, 0.0
        %v4469 = vmax.f32 %v4428, 0.0
        %v4470 = vmax.f32 %v4429, 0.0
        %v4471 = vmax.f32 %v4430, 0.0
        %v4472 = vmax.f32 %v4431, 0.0
        %v4473 = vmax.f32 %v4432, 0.0
        %v4474 = vmax.f32 %v4433, 0.0
        %v4475 = vmax.f32 %v4434, 0.0
        %v4476 = vmax.f32 %v4435, 0.0
        %v4477 = vmax.f32 %v4436, 0.0
        %v4478 = vmax.f32 %v4437, 0.0
        %v4479 = vmax.f32 %v4438, 0.0
        %v4480 = vmax.f32 %v4439, 0.0
        %v4481 = vmax.f32 %v4440, 0.0
        %v4482 = vmax.f32 %v4441, 0.0
        %v4483 = vmax.f32 %v4442, 0.0
        %v4484 = vmax.f32 %v4443, 0.0
        %v4485 = vmax.f32 %v4444, 0.0
        %v4486 = vmax.f32 %v4445, 0.0
        %v4487 = vmax.f32 %v4446, 0.0
        %v4488 = vmax.f32 %v4447, 0.0
        %v4489 = vmax.f32 %v4448, 0.0
        %v4490 = vmax.f32 %v4449, 0.0
        %v4491 = vmax.f32 %v4450, 0.0
        %v4492 = vmax.f32 %v4451, 0.0
        %v4493 = vmax.f32 %v4452, 0.0
        %v4494 = vmax.f32 %v4453, 0.0
        %v4495 = vmax.f32 %v4454, 0.0
        %v4496 = vmax.f32 %v4455, 0.0
        %v4497 = vmax.f32 %v4456, 0.0
        %v4498 = vmax.f32 %v4457, 0.0
        %v4499 = vmax.f32 %v4458, 0.0
        %v4500 = vmax.f32 %v4459, 0.0
        %v4501 = vmax.f32 %v4460, 0.0
        %v4502 = vmax.f32 %v4461, 0.0
        %v4503 = vmax.f32 %v4462, 0.0
        %v4504 = vmax.f32 %v4463, 0.0
        %v4505 = vmax.f32 %v4464, 0.0
        %v4506 = vmax.f32 %v4465, 0.0
        %v4507 = vmax.f32 %v4466, 0.0
        %v4549 = vrot.slane %v4467, 1
        %v4550 = vrot.slane %v4468, 1
        %v4551 = vsel %vm2185, %v4549, %v4550
        %v4552 = vrot.slane %v4469, 1
        %v4553 = vsel %vm2185, %v4550, %v4552
        %v4554 = vrot.slane %v4470, 1
        %v4555 = vsel %vm2185, %v4552, %v4554
        %v4556 = vrot.slane %v4471, 1
        %v4557 = vsel %vm2185, %v4554, %v4556
        %v4558 = vrot.slane %v4472, 1
        %v4559 = vsel %vm2185, %v4556, %v4558
        %v4560 = vrot.slane %v4473, 1
        %v4561 = vsel %vm2185, %v4558, %v4560
        %v4562 = vrot.slane %v4474, 1
        %v4563 = vsel %vm2185, %v4560, %v4562
        %v4564 = vrot.slane %v4475, 1
        %v4565 = vsel %vm2185, %v4562, %v4564
        %v4566 = vrot.slane %v4476, 1
        %v4567 = vsel %vm2185, %v4564, %v4566
        %v4568 = vrot.slane %v4477, 1
        %v4569 = vsel %vm2185, %v4566, %v4568
        %v4570 = vrot.slane %v4478, 1
        %v4571 = vsel %vm2185, %v4568, %v4570
        %v4572 = vrot.slane %v4479, 1
        %v4573 = vsel %vm2185, %v4570, %v4572
        %v4574 = vrot.slane %v4480, 1
        %v4575 = vsel %vm2185, %v4572, %v4574
        %v4576 = vrot.slane %v4481, 1
        %v4577 = vsel %vm2185, %v4574, %v4576
        %v4578 = vrot.slane %v4482, 1
        %v4579 = vsel %vm2185, %v4576, %v4578
        %v4580 = vrot.slane %v4483, 1
        %v4581 = vsel %vm2185, %v4578, %v4580
        %v4582 = vrot.slane %v4484, 1
        %v4583 = vsel %vm2185, %v4580, %v4582
        %v4584 = vrot.slane %v4485, 1
        %v4585 = vsel %vm2185, %v4582, %v4584
        %v4586 = vrot.slane %v4486, 1
        %v4587 = vsel %vm2185, %v4584, %v4586
        %v4588 = vrot.slane %v4487, 1
        %v4589 = vsel %vm2185, %v4586, %v4588
        %v4590 = vrot.slane %v4488, 1
        %v4591 = vsel %vm2185, %v4588, %v4590
        %v4592 = vrot.slane %v4489, 1
        %v4593 = vsel %vm2185, %v4590, %v4592
        %v4594 = vrot.slane %v4490, 1
        %v4595 = vsel %vm2185, %v4592, %v4594
        %v4596 = vrot.slane %v4491, 1
        %v4597 = vsel %vm2185, %v4594, %v4596
        %v4598 = vrot.slane %v4492, 1
        %v4599 = vsel %vm2185, %v4596, %v4598
        %v4600 = vrot.slane %v4493, 1
        %v4601 = vsel %vm2185, %v4598, %v4600
        %v4602 = vrot.slane %v4494, 1
        %v4603 = vsel %vm2185, %v4600, %v4602
        %v4604 = vrot.slane %v4495, 1
        %v4605 = vsel %vm2185, %v4602, %v4604
        %v4606 = vrot.slane %v4496, 1
        %v4607 = vsel %vm2185, %v4604, %v4606
        %v4608 = vrot.slane %v4497, 1
        %v4609 = vsel %vm2185, %v4606, %v4608
        %v4610 = vrot.slane %v4498, 1
        %v4611 = vsel %vm2185, %v4608, %v4610
        %v4612 = vrot.slane %v4499, 1
        %v4613 = vsel %vm2185, %v4610, %v4612
        %v4614 = vrot.slane %v4500, 1
        %v4615 = vsel %vm2185, %v4612, %v4614
        %v4616 = vrot.slane %v4501, 1
        %v4617 = vsel %vm2185, %v4614, %v4616
        %v4618 = vrot.slane %v4502, 1
        %v4619 = vsel %vm2185, %v4616, %v4618
        %v4620 = vrot.slane %v4503, 1
        %v4621 = vsel %vm2185, %v4618, %v4620
        %v4622 = vrot.slane %v4504, 1
        %v4623 = vsel %vm2185, %v4620, %v4622
        %v4624 = vrot.slane %v4505, 1
        %v4625 = vsel %vm2185, %v4622, %v4624
        %v4626 = vrot.slane %v4506, 1
        %v4627 = vsel %vm2185, %v4624, %v4626
        %v4628 = vrot.slane %v4507, 1
        %v4629 = vsel %vm2185, %v4626, %v4628
        %v4671 = vmax.f32 %v4467, %v4551
        %v4672 = vmax.f32 %v4468, %v4553
        %v4673 = vmax.f32 %v4469, %v4555
        %v4674 = vmax.f32 %v4470, %v4557
        %v4675 = vmax.f32 %v4471, %v4559
        %v4676 = vmax.f32 %v4472, %v4561
        %v4677 = vmax.f32 %v4473, %v4563
        %v4678 = vmax.f32 %v4474, %v4565
        %v4679 = vmax.f32 %v4475, %v4567
        %v4680 = vmax.f32 %v4476, %v4569
        %v4681 = vmax.f32 %v4477, %v4571
        %v4682 = vmax.f32 %v4478, %v4573
        %v4683 = vmax.f32 %v4479, %v4575
        %v4684 = vmax.f32 %v4480, %v4577
        %v4685 = vmax.f32 %v4481, %v4579
        %v4686 = vmax.f32 %v4482, %v4581
        %v4687 = vmax.f32 %v4483, %v4583
        %v4688 = vmax.f32 %v4484, %v4585
        %v4689 = vmax.f32 %v4485, %v4587
        %v4690 = vmax.f32 %v4486, %v4589
        %v4691 = vmax.f32 %v4487, %v4591
        %v4692 = vmax.f32 %v4488, %v4593
        %v4693 = vmax.f32 %v4489, %v4595
        %v4694 = vmax.f32 %v4490, %v4597
        %v4695 = vmax.f32 %v4491, %v4599
        %v4696 = vmax.f32 %v4492, %v4601
        %v4697 = vmax.f32 %v4493, %v4603
        %v4698 = vmax.f32 %v4494, %v4605
        %v4699 = vmax.f32 %v4495, %v4607
        %v4700 = vmax.f32 %v4496, %v4609
        %v4701 = vmax.f32 %v4497, %v4611
        %v4702 = vmax.f32 %v4498, %v4613
        %v4703 = vmax.f32 %v4499, %v4615
        %v4704 = vmax.f32 %v4500, %v4617
        %v4705 = vmax.f32 %v4501, %v4619
        %v4706 = vmax.f32 %v4502, %v4621
        %v4707 = vmax.f32 %v4503, %v4623
        %v4708 = vmax.f32 %v4504, %v4625
        %v4709 = vmax.f32 %v4505, %v4627
        %v4710 = vmax.f32 %v4506, %v4629
        %v4711 = vmax.f32 %v4507, %v4628
        %v4712 = vrot.slane %v4467, 2
        %v4713 = vrot.slane %v4468, 2
        %v4714 = vsel %vm2456, %v4712, %v4713
        %v4715 = vrot.slane %v4469, 2
        %v4716 = vsel %vm2456, %v4713, %v4715
        %v4717 = vrot.slane %v4470, 2
        %v4718 = vsel %vm2456, %v4715, %v4717
        %v4719 = vrot.slane %v4471, 2
        %v4720 = vsel %vm2456, %v4717, %v4719
        %v4721 = vrot.slane %v4472, 2
        %v4722 = vsel %vm2456, %v4719, %v4721
        %v4723 = vrot.slane %v4473, 2
        %v4724 = vsel %vm2456, %v4721, %v4723
        %v4725 = vrot.slane %v4474, 2
        %v4726 = vsel %vm2456, %v4723, %v4725
        %v4727 = vrot.slane %v4475, 2
        %v4728 = vsel %vm2456, %v4725, %v4727
        %v4729 = vrot.slane %v4476, 2
        %v4730 = vsel %vm2456, %v4727, %v4729
        %v4731 = vrot.slane %v4477, 2
        %v4732 = vsel %vm2456, %v4729, %v4731
        %v4733 = vrot.slane %v4478, 2
        %v4734 = vsel %vm2456, %v4731, %v4733
        %v4735 = vrot.slane %v4479, 2
        %v4736 = vsel %vm2456, %v4733, %v4735
        %v4737 = vrot.slane %v4480, 2
        %v4738 = vsel %vm2456, %v4735, %v4737
        %v4739 = vrot.slane %v4481, 2
        %v4740 = vsel %vm2456, %v4737, %v4739
        %v4741 = vrot.slane %v4482, 2
        %v4742 = vsel %vm2456, %v4739, %v4741
        %v4743 = vrot.slane %v4483, 2
        %v4744 = vsel %vm2456, %v4741, %v4743
        %v4745 = vrot.slane %v4484, 2
        %v4746 = vsel %vm2456, %v4743, %v4745
        %v4747 = vrot.slane %v4485, 2
        %v4748 = vsel %vm2456, %v4745, %v4747
        %v4749 = vrot.slane %v4486, 2
        %v4750 = vsel %vm2456, %v4747, %v4749
        %v4751 = vrot.slane %v4487, 2
        %v4752 = vsel %vm2456, %v4749, %v4751
        %v4753 = vrot.slane %v4488, 2
        %v4754 = vsel %vm2456, %v4751, %v4753
        %v4755 = vrot.slane %v4489, 2
        %v4756 = vsel %vm2456, %v4753, %v4755
        %v4757 = vrot.slane %v4490, 2
        %v4758 = vsel %vm2456, %v4755, %v4757
        %v4759 = vrot.slane %v4491, 2
        %v4760 = vsel %vm2456, %v4757, %v4759
        %v4761 = vrot.slane %v4492, 2
        %v4762 = vsel %vm2456, %v4759, %v4761
        %v4763 = vrot.slane %v4493, 2
        %v4764 = vsel %vm2456, %v4761, %v4763
        %v4765 = vrot.slane %v4494, 2
        %v4766 = vsel %vm2456, %v4763, %v4765
        %v4767 = vrot.slane %v4495, 2
        %v4768 = vsel %vm2456, %v4765, %v4767
        %v4769 = vrot.slane %v4496, 2
        %v4770 = vsel %vm2456, %v4767, %v4769
        %v4771 = vrot.slane %v4497, 2
        %v4772 = vsel %vm2456, %v4769, %v4771
        %v4773 = vrot.slane %v4498, 2
        %v4774 = vsel %vm2456, %v4771, %v4773
        %v4775 = vrot.slane %v4499, 2
        %v4776 = vsel %vm2456, %v4773, %v4775
        %v4777 = vrot.slane %v4500, 2
        %v4778 = vsel %vm2456, %v4775, %v4777
        %v4779 = vrot.slane %v4501, 2
        %v4780 = vsel %vm2456, %v4777, %v4779
        %v4781 = vrot.slane %v4502, 2
        %v4782 = vsel %vm2456, %v4779, %v4781
        %v4783 = vrot.slane %v4503, 2
        %v4784 = vsel %vm2456, %v4781, %v4783
        %v4785 = vrot.slane %v4504, 2
        %v4786 = vsel %vm2456, %v4783, %v4785
        %v4787 = vrot.slane %v4505, 2
        %v4788 = vsel %vm2456, %v4785, %v4787
        %v4789 = vrot.slane %v4506, 2
        %v4790 = vsel %vm2456, %v4787, %v4789
        %v4791 = vrot.slane %v4507, 2
        %v4792 = vsel %vm2456, %v4789, %v4791
        %v4834 = vmax.f32 %v4671, %v4714
        %v4835 = vmax.f32 %v4672, %v4716
        %v4836 = vmax.f32 %v4673, %v4718
        %v4837 = vmax.f32 %v4674, %v4720
        %v4838 = vmax.f32 %v4675, %v4722
        %v4839 = vmax.f32 %v4676, %v4724
        %v4840 = vmax.f32 %v4677, %v4726
        %v4841 = vmax.f32 %v4678, %v4728
        %v4842 = vmax.f32 %v4679, %v4730
        %v4843 = vmax.f32 %v4680, %v4732
        %v4844 = vmax.f32 %v4681, %v4734
        %v4845 = vmax.f32 %v4682, %v4736
        %v4846 = vmax.f32 %v4683, %v4738
        %v4847 = vmax.f32 %v4684, %v4740
        %v4848 = vmax.f32 %v4685, %v4742
        %v4849 = vmax.f32 %v4686, %v4744
        %v4850 = vmax.f32 %v4687, %v4746
        %v4851 = vmax.f32 %v4688, %v4748
        %v4852 = vmax.f32 %v4689, %v4750
        %v4853 = vmax.f32 %v4690, %v4752
        %v4854 = vmax.f32 %v4691, %v4754
        %v4855 = vmax.f32 %v4692, %v4756
        %v4856 = vmax.f32 %v4693, %v4758
        %v4857 = vmax.f32 %v4694, %v4760
        %v4858 = vmax.f32 %v4695, %v4762
        %v4859 = vmax.f32 %v4696, %v4764
        %v4860 = vmax.f32 %v4697, %v4766
        %v4861 = vmax.f32 %v4698, %v4768
        %v4862 = vmax.f32 %v4699, %v4770
        %v4863 = vmax.f32 %v4700, %v4772
        %v4864 = vmax.f32 %v4701, %v4774
        %v4865 = vmax.f32 %v4702, %v4776
        %v4866 = vmax.f32 %v4703, %v4778
        %v4867 = vmax.f32 %v4704, %v4780
        %v4868 = vmax.f32 %v4705, %v4782
        %v4869 = vmax.f32 %v4706, %v4784
        %v4870 = vmax.f32 %v4707, %v4786
        %v4871 = vmax.f32 %v4708, %v4788
        %v4872 = vmax.f32 %v4709, %v4790
        %v4873 = vmax.f32 %v4710, %v4792
        %v4874 = vmax.f32 %v4711, %v4791
        %v4875 = vld [vmem:[%s16] sm:$0xff]
        %v4876 = vld [vmem:[%s16 + $0x8] sm:$0xff]
        %v4877 = vld [vmem:[%s16 + $0x10] sm:$0xff]
        %v4878 = vld [vmem:[%s16 + $0x18] sm:$0xff]
        %v4879 = vld [vmem:[%s16 + $0x20] sm:$0xff]
        %v4880 = vld [vmem:[%s16 + $0x28] sm:$0xff]
        %v4881 = vld [vmem:[%s16 + $0x30] sm:$0xff]
        %v4882 = vld [vmem:[%s16 + $0x38] sm:$0xff]
        %v4883 = vld [vmem:[%s16 + $0x40] sm:$0xff]
        %v4884 = vld [vmem:[%s16 + $0x48] sm:$0xff]
        %v4885 = vld [vmem:[%s16 + $0x50] sm:$0xff]
        %v4886 = vld [vmem:[%s16 + $0x58] sm:$0xff]
        %v4887 = vld [vmem:[%s16 + $0x60] sm:$0xff]
        %v4888 = vld [vmem:[%s16 + $0x68] sm:$0xff]
        %v4889 = vld [vmem:[%s16 + $0x70] sm:$0xff]
        %v4890 = vld [vmem:[%s16 + $0x78] sm:$0xff]
        %v4891 = vld [vmem:[%s16 + $0x80] sm:$0xff]
        %v4892 = vld [vmem:[%s16 + $0x88] sm:$0xff]
        %v4893 = vld [vmem:[%s16 + $0x90] sm:$0xff]
        %v4894 = vld [vmem:[%s16 + $0x98] sm:$0xff]
        %v4895 = vld [vmem:[%s16 + $0xa0] sm:$0xff]
        %v4896 = vld [vmem:[%s16 + $0xa8] sm:$0xff]
        %v4897 = vld [vmem:[%s16 + $0xb0] sm:$0xff]
        %v4898 = vld [vmem:[%s16 + $0xb8] sm:$0xff]
        %v4899 = vld [vmem:[%s17] sm:$0xff]
        %v4900 = vld [vmem:[%s17 + $0x8] sm:$0xff]
        %v4901 = vld [vmem:[%s17 + $0x10] sm:$0xff]
        %v4902 = vld [vmem:[%s17 + $0x18] sm:$0xff]
        %v4903 = vld [vmem:[%s17 + $0x20] sm:$0xff]
        %v4904 = vld [vmem:[%s17 + $0x28] sm:$0xff]
        %v4905 = vld [vmem:[%s17 + $0x30] sm:$0xff]
        %v4906 = vld [vmem:[%s17 + $0x38] sm:$0xff]
        %4908 = vset.pattern.permute.xlu0 0
        %4909 = vperm.xlu0 %4908, %v4899
        %v4910 = vpop.permute.xlu0 %4909
        %4913 = vset.pattern.permute.xlu0 0
        %4914 = vperm.xlu0 %4913, %v4900
        %v4915 = vpop.permute.xlu0 %4914
        %4918 = vset.pattern.permute.xlu0 0
        %4919 = vperm.xlu0 %4918, %v4901
        %v4920 = vpop.permute.xlu0 %4919
        %4923 = vset.pattern.permute.xlu0 0
        %4924 = vperm.xlu0 %4923, %v4902
        %v4925 = vpop.permute.xlu0 %4924
        %4928 = vset.pattern.permute.xlu0 0
        %4929 = vperm.xlu0 %4928, %v4903
        %v4930 = vpop.permute.xlu0 %4929
        %4933 = vset.pattern.permute.xlu0 0
        %4934 = vperm.xlu0 %4933, %v4904
        %v4935 = vpop.permute.xlu0 %4934
        %4938 = vset.pattern.permute.xlu0 0
        %4939 = vperm.xlu0 %4938, %v4905
        %v4940 = vpop.permute.xlu0 %4939
        %4943 = vset.pattern.permute.xlu0 0
        %4944 = vperm.xlu0 %4943, %v4906
        %v4945 = vpop.permute.xlu0 %4944
        %v4948 = vsel %vm2816, %v4877, 0
        %v4951 = vsel %vm2816, %v4880, 0
        %v4954 = vsel %vm2816, %v4883, 0
        %v4957 = vsel %vm2816, %v4886, 0
        %v4960 = vsel %vm2816, %v4889, 0
        %v4963 = vsel %vm2816, %v4892, 0
        %v4966 = vsel %vm2816, %v4895, 0
        %v4969 = vsel %vm2816, %v4898, 0
        %v4972 = vsel %vm2820, %v4874, 0
        %4974 = vmatpush.msra.mxu0 %v4849
        %4975 = vmatpush.msra.mxu0 %v4848
        %4976 = vmatpush.msra.mxu0 %v4847
        %4977 = vmatpush.msra.mxu0 %v4846
        %4978 = vmatpush.msra.mxu0 %v4845
        %4979 = vmatpush.msra.mxu0 %v4844
        %4980 = vmatpush.msra.mxu0 %v4843
        %4981 = vmatpush.msra.mxu0 %v4842
        %4982 = vmatpush.msra.mxu0 %v4841
        %4983 = vmatpush.msra.mxu0 %v4840
        %4984 = vmatpush.msra.mxu0 %v4839
        %4985 = vmatpush.msra.mxu0 %v4838
        %4986 = vmatpush.msra.mxu0 %v4837
        %4987 = vmatpush.msra.mxu0 %v4836
        %4988 = vmatpush.msra.mxu0 %v4835
        %4989 = vmatpush.msra.mxu0 %v4834
        %4990 = vmatmul.f32.gmra.mxu0 %v4875
        %v4991 = vpop.f32.mrf.mxu0
        %v4992 = vadd.f32 %v4910, %v4991
        %4993 = vmatmul.f32.gmra.mxu0 %v4878
        %v4994 = vpop.f32.mrf.mxu0
        %v4995 = vadd.f32 %v4915, %v4994
        %4996 = vmatmul.f32.gmra.mxu0 %v4881
        %v4997 = vpop.f32.mrf.mxu0
        %v4998 = vadd.f32 %v4920, %v4997
        %4999 = vmatmul.f32.gmra.mxu0 %v4884
        %v5000 = vpop.f32.mrf.mxu0
        %v5001 = vadd.f32 %v4925, %v5000
        %5002 = vmatmul.f32.gmra.mxu0 %v4887
        %v5003 = vpop.f32.mrf.mxu0
        %v5004 = vadd.f32 %v4930, %v5003
        %5005 = vmatmul.f32.gmra.mxu0 %v4890
        %v5006 = vpop.f32.mrf.mxu0
        %v5007 = vadd.f32 %v4935, %v5006
        %5008 = vmatmul.f32.gmra.mxu0 %v4893
        %v5009 = vpop.f32.mrf.mxu0
        %v5010 = vadd.f32 %v4940, %v5009
        %5011 = vmatmul.f32.gmra.mxu0 %v4896
        %v5012 = vpop.f32.mrf.mxu0
        %v5013 = vadd.f32 %v4945, %v5012
        %5014 = vdwg.mxu0
        %5015 = vmatpush.msra.mxu0 %v4865
        %5016 = vmatpush.msra.mxu0 %v4864
        %5017 = vmatpush.msra.mxu0 %v4863
        %5018 = vmatpush.msra.mxu0 %v4862
        %5019 = vmatpush.msra.mxu0 %v4861
        %5020 = vmatpush.msra.mxu0 %v4860
        %5021 = vmatpush.msra.mxu0 %v4859
        %5022 = vmatpush.msra.mxu0 %v4858
        %5023 = vmatpush.msra.mxu0 %v4857
        %5024 = vmatpush.msra.mxu0 %v4856
        %5025 = vmatpush.msra.mxu0 %v4855
        %5026 = vmatpush.msra.mxu0 %v4854
        %5027 = vmatpush.msra.mxu0 %v4853
        %5028 = vmatpush.msra.mxu0 %v4852
        %5029 = vmatpush.msra.mxu0 %v4851
        %5030 = vmatpush.msra.mxu0 %v4850
        %5031 = vmatmul.f32.gmra.mxu0 %v4876
        %v5032 = vpop.f32.mrf.mxu0
        %v5033 = vadd.f32 %v4992, %v5032
        %5034 = vmatmul.f32.gmra.mxu0 %v4879
        %v5035 = vpop.f32.mrf.mxu0
        %v5036 = vadd.f32 %v4995, %v5035
        %5037 = vmatmul.f32.gmra.mxu0 %v4882
        %v5038 = vpop.f32.mrf.mxu0
        %v5039 = vadd.f32 %v4998, %v5038
        %5040 = vmatmul.f32.gmra.mxu0 %v4885
        %v5041 = vpop.f32.mrf.mxu0
        %v5042 = vadd.f32 %v5001, %v5041
        %5043 = vmatmul.f32.gmra.mxu0 %v4888
        %v5044 = vpop.f32.mrf.mxu0
        %v5045 = vadd.f32 %v5004, %v5044
        %5046 = vmatmul.f32.gmra.mxu0 %v4891
        %v5047 = vpop.f32.mrf.mxu0
        %v5048 = vadd.f32 %v5007, %v5047
        %5049 = vmatmul.f32.gmra.mxu0 %v4894
        %v5050 = vpop.f32.mrf.mxu0
        %v5051 = vadd.f32 %v5010, %v5050
        %5052 = vmatmul.f32.gmra.mxu0 %v4897
        %v5053 = vpop.f32.mrf.mxu0
        %v5054 = vadd.f32 %v5013, %v5053
        %5055 = vdwg.mxu0
        %5056 = vmatpush.msra.mxu0 0.0
        %5057 = vmatpush.msra.mxu0 0.0
        %5058 = vmatpush.msra.mxu0 0.0
        %5059 = vmatpush.msra.mxu0 0.0
        %5060 = vmatpush.msra.mxu0 0.0
        %5061 = vmatpush.msra.mxu0 0.0
        %5062 = vmatpush.msra.mxu0 0.0
        %5063 = vmatpush.msra.mxu0 %v4972
        %5064 = vmatpush.msra.mxu0 %v4873
        %5065 = vmatpush.msra.mxu0 %v4872
        %5066 = vmatpush.msra.mxu0 %v4871
        %5067 = vmatpush.msra.mxu0 %v4870
        %5068 = vmatpush.msra.mxu0 %v4869
        %5069 = vmatpush.msra.mxu0 %v4868
        %5070 = vmatpush.msra.mxu0 %v4867
        %5071 = vmatpush.msra.mxu0 %v4866
        %5072 = vmatmul.f32.gmra.mxu0 %v4948
        %v5073 = vpop.f32.mrf.mxu0
        %v5074 = vadd.f32 %v5033, %v5073
        %5075 = vmatmul.f32.gmra.mxu0 %v4951
        %v5076 = vpop.f32.mrf.mxu0
        %v5077 = vadd.f32 %v5036, %v5076
        %5078 = vmatmul.f32.gmra.mxu0 %v4954
        %v5079 = vpop.f32.mrf.mxu0
        %v5080 = vadd.f32 %v5039, %v5079
        %5081 = vmatmul.f32.gmra.mxu0 %v4957
        %v5082 = vpop.f32.mrf.mxu0
        %v5083 = vadd.f32 %v5042, %v5082
        %5084 = vmatmul.f32.gmra.mxu0 %v4960
        %v5085 = vpop.f32.mrf.mxu0
        %v5086 = vadd.f32 %v5045, %v5085
        %5087 = vmatmul.f32.gmra.mxu0 %v4963
        %v5088 = vpop.f32.mrf.mxu0
        %v5089 = vadd.f32 %v5048, %v5088
        %5090 = vmatmul.f32.gmra.mxu0 %v4966
        %v5091 = vpop.f32.mrf.mxu0
        %v5092 = vadd.f32 %v5051, %v5091
        %5093 = vmatmul.f32.gmra.mxu0 %v4969
        %v5094 = vpop.f32.mrf.mxu0
        %v5095 = vadd.f32 %v5054, %v5094
        %5096 = vdwg.mxu0
        %v5097 = vmax.f32 %v5074, 0.0
        %v5098 = vmax.f32 %v5077, 0.0
        %v5099 = vmax.f32 %v5080, 0.0
        %v5100 = vmax.f32 %v5083, 0.0
        %v5101 = vmax.f32 %v5086, 0.0
        %v5102 = vmax.f32 %v5089, 0.0
        %v5103 = vmax.f32 %v5092, 0.0
        %v5104 = vmax.f32 %v5095, 0.0
        %v5105 = vld [vmem:[%s18] sm:$0x7]
        %v5106 = vld [vmem:[%s19] sm:$0x7]
        %5108 = vset.pattern.permute.xlu0 0
        %5109 = vperm.xlu0 %5108, %v5106
        %v5110 = vpop.permute.xlu0 %5109
        %v5113 = vsel %vm867, %v5105, 0
        %5115 = vmatpush.msra.mxu0 0.0
        %5116 = vmatpush.msra.mxu0 0.0
        %5117 = vmatpush.msra.mxu0 0.0
        %5118 = vmatpush.msra.mxu0 0.0
        %5119 = vmatpush.msra.mxu0 0.0
        %5120 = vmatpush.msra.mxu0 0.0
        %5121 = vmatpush.msra.mxu0 0.0
        %5122 = vmatpush.msra.mxu0 0.0
        %5123 = vmatpush.msra.mxu0 %v5104
        %5124 = vmatpush.msra.mxu0 %v5103
        %5125 = vmatpush.msra.mxu0 %v5102
        %5126 = vmatpush.msra.mxu0 %v5101
        %5127 = vmatpush.msra.mxu0 %v5100
        %5128 = vmatpush.msra.mxu0 %v5099
        %5129 = vmatpush.msra.mxu0 %v5098
        %5130 = vmatpush.msra.mxu0 %v5097
        %5131 = vmatmul.f32.gmra.mxu0 %v5113
        %v5132 = vpop.f32.mrf.mxu0
        %v5133 = vadd.f32 %v5110, %v5132
        %5134 = vdwg.mxu0
        %v5135 = vmax.f32 %v5133, 0.0
        %5136 = vst.msk [vmem:[#allocation2 + $0x3] sm:$0x1] %vm1853, %v5135
        %5138 = vst [vmem:[#allocation1] sm:$0xff] %v5135
        %s5139 = scalar_lea.vmem [#allocation1], 1
        %v5140 = vld [vmem:[%s5139] ss:$9 sm:$0xff]
        %5141 = vrot.lane.b32.xlu0 %v5140, 64
        %v5142 = vpop.permute.xlu0 %5141
        %5144 = vst.msk [vmem:[#allocation2 + $0x3] sm:$0x1] %vm1864, %v5142
        %5145 = vst [vmem:[#allocation1] sm:$0xff] %v5135
        %s5146 = scalar_lea.vmem [#allocation1], 2
        %v5147 = vld [vmem:[%s5146] ss:$9 sm:$0xff]
        %5149 = vst.msk [vmem:[#allocation2 + $0x4] sm:$0x1] %vm1853, %v5147
        %v5150 = vld [vmem:[#allocation2] sm:$0x1f]
        %v5151 = vld [vmem:[%s20] sm:$0xff]
        %v5152 = vld [vmem:[%s20 + $0x8] sm:$0xff]
        %v5153 = vld [vmem:[%s20 + $0x10] sm:$0xff]
        %v5154 = vld [vmem:[%s20 + $0x18] sm:$0xff]
        %v5155 = vld [vmem:[%s20 + $0x20] sm:$0xff]
        %v5156 = vld [vmem:[%s20 + $0x28] sm:$0xff]
        %v5157 = vld [vmem:[%s20 + $0x30] sm:$0xff]
        %v5158 = vld [vmem:[%s20 + $0x38] sm:$0xff]
        %v5159 = vld [vmem:[%s20 + $0x40] sm:$0xff]
        %v5160 = vld [vmem:[%s20 + $0x48] sm:$0xff]
        %v5161 = vld [vmem:[%s20 + $0x50] sm:$0xff]
        %v5162 = vld [vmem:[%s20 + $0x58] sm:$0xff]
        %v5163 = vld [vmem:[%s20 + $0x60] sm:$0xff]
        %v5164 = vld [vmem:[%s20 + $0x68] sm:$0xff]
        %v5165 = vld [vmem:[%s20 + $0x70] sm:$0xff]
        %v5166 = vld [vmem:[%s20 + $0x78] sm:$0xff]
        %v5167 = vld [vmem:[%s20 + $0x80] sm:$0xff]
        %v5168 = vld [vmem:[%s20 + $0x88] sm:$0xff]
        %v5169 = vld [vmem:[%s20 + $0x90] sm:$0xff]
        %v5170 = vld [vmem:[%s20 + $0x98] sm:$0xff]
        %v5171 = vld [vmem:[%s20 + $0xa0] sm:$0xff]
        %v5172 = vld [vmem:[%s20 + $0xa8] sm:$0xff]
        %v5173 = vld [vmem:[%s20 + $0xb0] sm:$0xff]
        %v5174 = vld [vmem:[%s20 + $0xb8] sm:$0xff]
        %v5175 = vld [vmem:[%s20 + $0xc0] sm:$0xff]
        %v5176 = vld [vmem:[%s20 + $0xc8] sm:$0xff]
        %v5177 = vld [vmem:[%s20 + $0xd0] sm:$0xff]
        %v5178 = vld [vmem:[%s20 + $0xd8] sm:$0xff]
        %v5179 = vld [vmem:[%s20 + $0xe0] sm:$0xff]
        %v5180 = vld [vmem:[%s20 + $0xe8] sm:$0xff]
        %v5181 = vld [vmem:[%s20 + $0xf0] sm:$0xff]
        %v5182 = vld [vmem:[%s20 + $0xf8] sm:$0xff]
        %v5183 = vld [vmem:[%s20 + $0x100] sm:$0xff]
        %v5184 = vld [vmem:[%s20 + $0x108] sm:$0xff]
        %v5185 = vld [vmem:[%s20 + $0x110] sm:$0xff]
        %v5186 = vld [vmem:[%s20 + $0x118] sm:$0xff]
        %v5187 = vld [vmem:[%s20 + $0x120] sm:$0xff]
        %v5188 = vld [vmem:[%s20 + $0x128] sm:$0xff]
        %v5189 = vld [vmem:[%s20 + $0x130] sm:$0xff]
        %v5190 = vld [vmem:[%s20 + $0x138] sm:$0xff]
        %v5191 = vld [vmem:[%s20 + $0x140] sm:$0xff]
        %v5192 = vld [vmem:[%s20 + $0x148] sm:$0xff]
        %v5193 = vld [vmem:[%s20 + $0x150] sm:$0xff]
        %v5194 = vld [vmem:[%s20 + $0x158] sm:$0xff]
        %v5195 = vld [vmem:[%s20 + $0x160] sm:$0xff]
        %v5196 = vld [vmem:[%s20 + $0x168] sm:$0xff]
        %v5197 = vld [vmem:[%s20 + $0x170] sm:$0xff]
        %v5198 = vld [vmem:[%s20 + $0x178] sm:$0xff]
        %v5199 = vld [vmem:[%s20 + $0x180] sm:$0xff]
        %v5200 = vld [vmem:[%s20 + $0x188] sm:$0xff]
        %v5201 = vld [vmem:[%s20 + $0x190] sm:$0xff]
        %v5202 = vld [vmem:[%s20 + $0x198] sm:$0xff]
        %v5203 = vld [vmem:[%s20 + $0x1a0] sm:$0xff]
        %v5204 = vld [vmem:[%s20 + $0x1a8] sm:$0xff]
        %v5205 = vld [vmem:[%s20 + $0x1b0] sm:$0xff]
        %v5206 = vld [vmem:[%s20 + $0x1b8] sm:$0xff]
        %v5207 = vld [vmem:[%s20 + $0x1c0] sm:$0xff]
        %v5208 = vld [vmem:[%s20 + $0x1c8] sm:$0xff]
        %v5209 = vld [vmem:[%s20 + $0x1d0] sm:$0xff]
        %v5210 = vld [vmem:[%s20 + $0x1d8] sm:$0xff]
        %v5211 = vld [vmem:[%s20 + $0x1e0] sm:$0xff]
        %v5212 = vld [vmem:[%s20 + $0x1e8] sm:$0xff]
        %v5213 = vld [vmem:[%s20 + $0x1f0] sm:$0xff]
        %v5214 = vld [vmem:[%s20 + $0x1f8] sm:$0xff]
        %v5215 = vld [vmem:[%s20 + $0x200] sm:$0xff]
        %v5216 = vld [vmem:[%s20 + $0x208] sm:$0xff]
        %v5217 = vld [vmem:[%s20 + $0x210] sm:$0xff]
        %v5218 = vld [vmem:[%s20 + $0x218] sm:$0xff]
        %v5219 = vld [vmem:[%s20 + $0x220] sm:$0xff]
        %v5220 = vld [vmem:[%s20 + $0x228] sm:$0xff]
        %v5221 = vld [vmem:[%s20 + $0x230] sm:$0xff]
        %v5222 = vld [vmem:[%s20 + $0x238] sm:$0xff]
        %v5223 = vld [vmem:[%s21] sm:$0x1]
        %v5225 = vperm.slane %v5150, 0
        %v5226 = vperm.slane %v5150, 1
        %v5227 = vperm.slane %v5150, 2
        %v5228 = vperm.slane %v5150, 3
        %v5229 = vperm.slane %v5150, 4
        %v5234 = vsel %vm867, %v5229, 0
        %5236 = vmatpush.msra.mxu0 %v5166
        %5237 = vmatpush.msra.mxu0 %v5165
        %5238 = vmatpush.msra.mxu0 %v5164
        %5239 = vmatpush.msra.mxu0 %v5163
        %5240 = vmatpush.msra.mxu0 %v5162
        %5241 = vmatpush.msra.mxu0 %v5161
        %5242 = vmatpush.msra.mxu0 %v5160
        %5243 = vmatpush.msra.mxu0 %v5159
        %5244 = vmatpush.msra.mxu0 %v5158
        %5245 = vmatpush.msra.mxu0 %v5157
        %5246 = vmatpush.msra.mxu0 %v5156
        %5247 = vmatpush.msra.mxu0 %v5155
        %5248 = vmatpush.msra.mxu0 %v5154
        %5249 = vmatpush.msra.mxu0 %v5153
        %5250 = vmatpush.msra.mxu0 %v5152
        %5251 = vmatpush.msra.mxu0 %v5151
        %5252 = vmatmul.f32.gmra.mxu0 %v5225
        %v5253 = vpop.f32.mrf.mxu0
        %v5254 = vadd.f32 %v5223, %v5253
        %5255 = vdwg.mxu0
        %5256 = vmatpush.msra.mxu0 %v5182
        %5257 = vmatpush.msra.mxu0 %v5181
        %5258 = vmatpush.msra.mxu0 %v5180
        %5259 = vmatpush.msra.mxu0 %v5179
        %5260 = vmatpush.msra.mxu0 %v5178
        %5261 = vmatpush.msra.mxu0 %v5177
        %5262 = vmatpush.msra.mxu0 %v5176
        %5263 = vmatpush.msra.mxu0 %v5175
        %5264 = vmatpush.msra.mxu0 %v5174
        %5265 = vmatpush.msra.mxu0 %v5173
        %5266 = vmatpush.msra.mxu0 %v5172
        %5267 = vmatpush.msra.mxu0 %v5171
        %5268 = vmatpush.msra.mxu0 %v5170
        %5269 = vmatpush.msra.mxu0 %v5169
        %5270 = vmatpush.msra.mxu0 %v5168
        %5271 = vmatpush.msra.mxu0 %v5167
        %5272 = vmatmul.f32.gmra.mxu0 %v5226
        %v5273 = vpop.f32.mrf.mxu0
        %v5274 = vadd.f32 %v5254, %v5273
        %5275 = vdwg.mxu0
        %5276 = vmatpush.msra.mxu0 %v5198
        %5277 = vmatpush.msra.mxu0 %v5197
        %5278 = vmatpush.msra.mxu0 %v5196
        %5279 = vmatpush.msra.mxu0 %v5195
        %5280 = vmatpush.msra.mxu0 %v5194
        %5281 = vmatpush.msra.mxu0 %v5193
        %5282 = vmatpush.msra.mxu0 %v5192
        %5283 = vmatpush.msra.mxu0 %v5191
        %5284 = vmatpush.msra.mxu0 %v5190
        %5285 = vmatpush.msra.mxu0 %v5189
        %5286 = vmatpush.msra.mxu0 %v5188
        %5287 = vmatpush.msra.mxu0 %v5187
        %5288 = vmatpush.msra.mxu0 %v5186
        %5289 = vmatpush.msra.mxu0 %v5185
        %5290 = vmatpush.msra.mxu0 %v5184
        %5291 = vmatpush.msra.mxu0 %v5183
        %5292 = vmatmul.f32.gmra.mxu0 %v5227
        %v5293 = vpop.f32.mrf.mxu0
        %v5294 = vadd.f32 %v5274, %v5293
        %5295 = vdwg.mxu0
        %5296 = vmatpush.msra.mxu0 %v5214
        %5297 = vmatpush.msra.mxu0 %v5213
        %5298 = vmatpush.msra.mxu0 %v5212
        %5299 = vmatpush.msra.mxu0 %v5211
        %5300 = vmatpush.msra.mxu0 %v5210
        %5301 = vmatpush.msra.mxu0 %v5209
        %5302 = vmatpush.msra.mxu0 %v5208
        %5303 = vmatpush.msra.mxu0 %v5207
        %5304 = vmatpush.msra.mxu0 %v5206
        %5305 = vmatpush.msra.mxu0 %v5205
        %5306 = vmatpush.msra.mxu0 %v5204
        %5307 = vmatpush.msra.mxu0 %v5203
        %5308 = vmatpush.msra.mxu0 %v5202
        %5309 = vmatpush.msra.mxu0 %v5201
        %5310 = vmatpush.msra.mxu0 %v5200
        %5311 = vmatpush.msra.mxu0 %v5199
        %5312 = vmatmul.f32.gmra.mxu0 %v5228
        %v5313 = vpop.f32.mrf.mxu0
        %v5314 = vadd.f32 %v5294, %v5313
        %5315 = vdwg.mxu0
        %5316 = vmatpush.msra.mxu0 0.0
        %5317 = vmatpush.msra.mxu0 0.0
        %5318 = vmatpush.msra.mxu0 0.0
        %5319 = vmatpush.msra.mxu0 0.0
        %5320 = vmatpush.msra.mxu0 0.0
        %5321 = vmatpush.msra.mxu0 0.0
        %5322 = vmatpush.msra.mxu0 0.0
        %5323 = vmatpush.msra.mxu0 0.0
        %5324 = vmatpush.msra.mxu0 %v5222
        %5325 = vmatpush.msra.mxu0 %v5221
        %5326 = vmatpush.msra.mxu0 %v5220
        %5327 = vmatpush.msra.mxu0 %v5219
        %5328 = vmatpush.msra.mxu0 %v5218
        %5329 = vmatpush.msra.mxu0 %v5217
        %5330 = vmatpush.msra.mxu0 %v5216
        %5331 = vmatpush.msra.mxu0 %v5215
        %5332 = vmatmul.f32.gmra.mxu0 %v5234
        %v5333 = vpop.f32.mrf.mxu0
        %v5334 = vadd.f32 %v5314, %v5333
        %5335 = vdwg.mxu0
        %v5336 = vld [vmem:[%s22] sm:$0xff]
        %v5337 = vld [vmem:[%s22 + $0x8] sm:$0xff]
        %v5338 = vld [vmem:[%s22 + $0x10] sm:$0xff]
        %v5339 = vld [vmem:[%s22 + $0x18] sm:$0xff]
        %v5340 = vld [vmem:[%s22 + $0x20] sm:$0xff]
        %v5341 = vld [vmem:[%s22 + $0x28] sm:$0xff]
        %v5342 = vld [vmem:[%s22 + $0x30] sm:$0xff]
        %v5343 = vld [vmem:[%s22 + $0x38] sm:$0xff]
        %v5344 = vld [vmem:[%s22 + $0x40] sm:$0xff]
        %v5345 = vld [vmem:[%s22 + $0x48] sm:$0xff]
        %v5346 = vld [vmem:[%s22 + $0x50] sm:$0xff]
        %v5347 = vld [vmem:[%s22 + $0x58] sm:$0xff]
        %v5348 = vld [vmem:[%s22 + $0x60] sm:$0xff]
        %v5349 = vld [vmem:[%s22 + $0x68] sm:$0xff]
        %v5350 = vld [vmem:[%s22 + $0x70] sm:$0xff]
        %v5351 = vld [vmem:[%s22 + $0x78] sm:$0xff]
        %v5352 = vld [vmem:[%s23] sm:$0x1]
        %5353 = vmatpush.msra.mxu0 %v5351
        %5354 = vmatpush.msra.mxu0 %v5350
        %5355 = vmatpush.msra.mxu0 %v5349
        %5356 = vmatpush.msra.mxu0 %v5348
        %5357 = vmatpush.msra.mxu0 %v5347
        %5358 = vmatpush.msra.mxu0 %v5346
        %5359 = vmatpush.msra.mxu0 %v5345
        %5360 = vmatpush.msra.mxu0 %v5344
        %5361 = vmatpush.msra.mxu0 %v5343
        %5362 = vmatpush.msra.mxu0 %v5342
        %5363 = vmatpush.msra.mxu0 %v5341
        %5364 = vmatpush.msra.mxu0 %v5340
        %5365 = vmatpush.msra.mxu0 %v5339
        %5366 = vmatpush.msra.mxu0 %v5338
        %5367 = vmatpush.msra.mxu0 %v5337
        %5368 = vmatpush.msra.mxu0 %v5336
        %5369 = vmatmul.f32.gmra.mxu0 %v5334
        %v5370 = vpop.f32.mrf.mxu0
        %v5371 = vadd.f32 %v5352, %v5370
        %5372 = vdwg.mxu0
        %vm5373 = vcmask 73728
        %5374 = vst.msk [vmem:[%s759] sm:$0x1] %vm5373, %v5371
        %s5375 = sand.u32 %s565, 1
        %s5376 = scalar_lea.sflag [#allocation5], %s5375
        %s5377 = sand.u32 %s565, 1
        %s5378 = scalar_lea.vmem [#allocation4], %s5377
        // Predicated region
        $region117: #{all_net_forward.1} parent=115 // pred_check
          %p5379 = pneg %p575
        $region118: #{all_net_forward.1} parent=115 // pred_check_branch
          %5381 = sbr.rel (%p5379) target = $region120
        $region119: #{all_net_forward.1} parent=115 // pred_region
          %5383 = vsyncadd %s5376, 0
          %s5384 = scalar_lea.hbm %s24, %s38
          %s5386 = sshll.u32 %s5378, 4
          %s5387 = int_to_ptr.vmem [resolvable:$true] %s5386
          %s5388 = sshll.u32 %s5384, 4
          %s5389 = int_to_ptr.hbm [resolvable:$true] %s5388
          %5391 = dma.vmem_to_hbm [thread:$0]  %s5387, 16, %s5389, %s5376
        $region120: #{all_net_forward.1} parent=115 // pred_fallthru
          _
      $region116: #{all_net_forward.1} parent=5 // pred_fallthru
        _
      %p5392 = scmp.le.s32.totalorder 2, %s33
      // Predicated region
      $region121: #{all_net_forward.1} parent=5 // pred_check
        %p5393 = pneg %p5392
      $region122: #{all_net_forward.1} parent=5 // pred_check_branch
        %5395 = sbr.rel (%p5393) target = $region124
      $region123: #{all_net_forward.1} parent=5 // pred_region
        %s5396 = ssub.s32 %s33, 2
        // Predicated region
        $region125: #{all_net_forward.1} parent=123 // pred_check
          %p5397 = pneg %p581
        $region126: #{all_net_forward.1} parent=123 // pred_check_branch
          %5399 = sbr.rel (%p5397) target = $region128
        $region127: #{all_net_forward.1} parent=123 // pred_region
          %s5400 = sand.u32 %s566, 1
          %s5401 = scalar_lea.sflag [#allocation5], %s5400
          %s5402 = sand.u32 %s566, 1
          %s5403 = scalar_lea.vmem [#allocation4], %s5402
          %5405 = dma.done %s5401, 16
        $region128: #{all_net_forward.1} parent=123 // pred_fallthru
          _
      $region124: #{all_net_forward.1} parent=5 // pred_fallthru
        _
    $region6: #{all_net_forward.1} parent=1 // loop_footer
      %s37 = sadd.s32 1, %s33
    $region7: #{all_net_forward.1} parent=1 // loop_footer_branch
      %32 = sbr.rel target = $region3
    $region8: #{all_net_forward.1} parent=1 // loop_exit
      _
    %5406 = vsyncpa [#allocation5], 1
    %s5407 = scalar_lea.sflag [#allocation5], 1
    %5408 = vsyncpa %s5407, 1

</llo_original>
